<compile_context>
chip_gen: v7x
topology: tpu7x:2x2x1
jax: 0.10.0
libtpu: 0.0.40
codegen_flags: <defaults>
</compile_context>

<pallas_src>
import functools
import math

import jax
import jax.numpy as jnp
from jax.experimental import pallas as pl
from jax.experimental.pallas import tpu as pltpu

BN_EPS = 1e-5
BN_SCALE = 1.0 / math.sqrt(1.0 + BN_EPS)   # fresh BN in eval mode: gamma=1, var=1

NPAD = 8    # node rows padded to a full f32 sublane
NREAL = 4   # real nodes (forward requires N == 4)

PARAM_ORDER = (
    'c1_wd', 'c1_wb', 'c1_b0', 'c1_w1', 'c1_b1', 'c1_w2', 'c1_b2',
    'c2_wd', 'c2_wb', 'c2_b0',
    'l1_wa', 'l1_wb', 'l1_b',
    'g1_w', 'g1_b', 'g2_w', 'g2_b',
    'lg_wa', 'lg_wb', 'lg_b',
    'm1_wa', 'm1_wb', 'm1_b',
    'm2_w', 'm2_b',
    'mf_w', 'mf_b',
)


# ---------------------------------------------------------------------------
# Fused Pallas kernel: whole forward, everything resident in VMEM
# ---------------------------------------------------------------------------

def _mixconv_kernel(pos_ref, nf_ref, adjp_ref,
                    c1_wd, c1_wb, c1_b0, c1_w1, c1_b1, c1_w2, c1_b2,
                    c2_wd, c2_wb, c2_b0,
                    l1_wa, l1_wb, l1_b,
                    g1_w, g1_b, g2_w, g2_b,
                    lg_wa, lg_wb, lg_b,
                    m1_wa, m1_wb, m1_b,
                    m2_w, m2_b,
                    mf_w, mf_b,
                    out_ref):
    f32 = jnp.float32
    bf16 = jnp.bfloat16
    N = NPAD
    NR = NREAL

    def lin(x, w_ref, b_ref, relu=True):
        # Linear (+folded eval-BN) [+ReLU]; bf16 weights, f32 accumulation.
        h = jnp.dot(x.astype(bf16), w_ref[...], preferred_element_type=f32)
        h = h + b_ref[...]
        return jnp.maximum(h, 0.0) if relu else h

    def lin_cat2(x1, x2, wa_ref, wb_ref, b_ref):
        # Linear on cat([x1, x2], dim=1) without materialising the concat.
        h = (jnp.dot(x1.astype(bf16), wa_ref[...], preferred_element_type=f32)
             + jnp.dot(x2.astype(bf16), wb_ref[...], preferred_element_type=f32)
             + b_ref[...])
        return jnp.maximum(h, 0.0)

    def edge_pairs(x, wd_ref, wb_ref, b_ref):
        # First EdgeConv MLP layer on all (i, j) pairs, kept flat as [N*N, H]:
        #   cat(x_i, x_j - x_i) @ W = x_i @ (Wa - Wb) + x_j @ Wb
        xb = x.astype(bf16)
        a = jnp.dot(xb, wd_ref[...], preferred_element_type=f32)     # [N, H]
        b = jnp.dot(xb, wb_ref[...], preferred_element_type=f32)     # [N, H]
        h = (a[:, None, :] + b[None, :, :]).reshape(N * N, a.shape[-1])
        h = h + b_ref[...]
        return jnp.maximum(h, 0.0)

    # mask over the neighbour index j: only the NR real nodes participate in max.
    jmask = (jax.lax.broadcasted_iota(jnp.int32, (N, N, 1), 1) < NR).astype(f32)

    def max_agg(h_flat):
        # 'max' aggregation over neighbours j.  All values are >= 0 (post-ReLU),
        # so zeroing padded neighbours is exactly equivalent to excluding them.
        c = h_flat.shape[-1]
        h3 = h_flat.reshape(N, N, c) * jmask
        return jnp.max(h3, axis=1)                                   # [N, C]

    # ---------------- DynamicEdgeConv branch ----------------
    pos = pos_ref[...]                                               # [N, 3]
    h = edge_pairs(pos, c1_wd, c1_wb, c1_b0)                         # [N*N, 64]
    h = lin(h, c1_w1, c1_b1)                                         # [N*N, 64]
    h = lin(h, c1_w2, c1_b2)                                         # [N*N, 64]
    x1 = max_agg(h)                                                  # [N, 64]

    h = edge_pairs(x1, c2_wd, c2_wb, c2_b0)                          # [N*N, 128]
    x2 = max_agg(h)                                                  # [N, 128]

    out1 = lin_cat2(x1, x2, l1_wa, l1_wb, l1_b)                      # [N, 512]

    # ---------------- TAGConv branch ----------------
    nf = nf_ref[...]                                                 # [N, 4]
    adjp = adjp_ref[...]                                             # [3, N, N] = A, A^2, A^3

    def tagconv(x, w_ref, b_ref):
        w = w_ref[...]                                               # [K+1, fin, fout]
        out = jnp.dot(x, w[0], preferred_element_type=f32)
        for k in range(1, w.shape[0]):
            xk = jnp.dot(adjp[k - 1], x, preferred_element_type=f32)  # A^k @ X
            out = out + jnp.dot(xk, w[k], preferred_element_type=f32)
        return jnp.maximum(out + b_ref[...], 0.0)                    # forward's F.relu

    h1 = tagconv(nf, g1_w, g1_b)                                     # [N, 64]
    h2 = tagconv(h1, g2_w, g2_b)                                     # [N, 128]

    out2 = lin_cat2(h1, h2, lg_wa, lg_wb, lg_b)                      # [N, 512]

    # ---------------- mix_output ----------------
    # MLP([1024,512]) -> Dropout(eval) -> MLP([512,256]) -> Dropout(eval) -> Lin(256,1)
    m1 = lin_cat2(out1, out2, m1_wa, m1_wb, m1_b)                    # [N, 512]
    m2 = lin(m1, m2_w, m2_b)                                         # [N, 256]
    out_ref[...] = lin(m2, mf_w, mf_b, relu=False)                   # [N, 128] (col 0 real)


# ---------------------------------------------------------------------------
# Glue (dense gcn_norm, padding, single pallas_call)
# ---------------------------------------------------------------------------

def gcn_norm_dense(edge_index, num_nodes):
    """Dense D^-1/2 A D^-1/2 (gcn_norm, add_self_loops=False) — glue, not hot path."""
    row, col = edge_index[0], edge_index[1]
    deg = jnp.zeros((num_nodes,), jnp.float32).at[col].add(1.0)
    dinv = jnp.where(deg > 0, jax.lax.rsqrt(deg), 0.0)
    norm = dinv[row] * dinv[col]
    return jnp.zeros((num_nodes, num_nodes), jnp.float32).at[col, row].add(norm)


@jax.jit
def mixconv_forward(params, x_input, edge_index, batch):
    del batch  # single graph (all zeros): kNN neighbourhood == all nodes
    n = x_input.shape[0]
    assert n == NREAL, "forward cats [N,512] with [4,512]; requires N == 4"

    # Pad node rows 4 -> 8 (full f32 sublane); padded rows are zero.
    xpad = jnp.zeros((NPAD, x_input.shape[1]), jnp.float32).at[:n].set(x_input)
    pos = xpad[:, :3]
    nf = xpad                                   # node_features[:4] == x_input (N == 4)

    # Normalized adjacency and its powers (static per forward) — hoisted out of kernel.
    adj = gcn_norm_dense(edge_index, NREAL)
    a1 = jnp.zeros((NPAD, NPAD), jnp.float32).at[:NREAL, :NREAL].set(adj)
    a2 = jnp.dot(a1, a1)
    a3 = jnp.dot(a2, a1)
    adj_pows = jnp.stack([a1, a2, a3])          # [3, NPAD, NPAD]

    args = [pos, nf, adj_pows] + [params[k] for k in PARAM_ORDER]

    out_pad = pl.pallas_call(
        _mixconv_kernel,
        out_shape=jax.ShapeDtypeStruct((NPAD, 128), jnp.float32),
        in_specs=[pl.BlockSpec(memory_space=pltpu.MemorySpace.VMEM)] * len(args),
        out_specs=pl.BlockSpec(memory_space=pltpu.MemorySpace.VMEM),
        compiler_params=pltpu.CompilerParams(vmem_limit_bytes=16 * 1024 * 1024),
        cost_estimate=pl.CostEstimate(flops=17_000_000, transcendentals=0,
                                      bytes_accessed=2_000_000),
    )(*args)

    return out_pad[:n, :1]


# ---------------------------------------------------------------------------
# Deterministic parameter construction (shapes dictated by the module __init__),
# with eval-BN folded into the Linears, cat-splits precomputed, weights in bf16.
# ---------------------------------------------------------------------------

def _uniform(key, shape, bound):
    return jax.random.uniform(key, shape, jnp.float32, -bound, bound)


def _linear(key, fin, fout):
    kw, kb = jax.random.split(key)
    bound = 1.0 / math.sqrt(fin)
    return _uniform(kw, (fin, fout), bound), _uniform(kb, (1, fout), bound)


def _lin_bn(key, fin, fout):
    # Linear + eval-BN folded: w' = w*scale, b' = b*scale (+ shift == 0).
    w, b = _linear(key, fin, fout)
    return (w * BN_SCALE).astype(jnp.bfloat16), b * BN_SCALE


def _edge_first(key, f, fout):
    # First EdgeConv MLP layer on cat(x_i, x_j - x_i): split + BN fold.
    w, b = _linear(key, 2 * f, fout)
    wd = (w[:f] - w[f:]) * BN_SCALE        # coefficient of x_i
    wb = w[f:] * BN_SCALE                  # coefficient of x_j
    return wd.astype(jnp.bfloat16), wb.astype(jnp.bfloat16), b * BN_SCALE


def _lin_bn_cat2(key, f1, f2, fout):
    # Linear(+BN) applied to cat([a, b], dim=1): split into the two halves.
    w, b = _linear(key, f1 + f2, fout)
    return ((w[:f1] * BN_SCALE).astype(jnp.bfloat16),
            (w[f1:] * BN_SCALE).astype(jnp.bfloat16),
            b * BN_SCALE)


def _tag(key, fin, fout, hops):
    keys = jax.random.split(key, hops + 1)
    bound = 1.0 / math.sqrt(fin)
    w = jnp.stack([_uniform(keys[k], (fin, fout), bound) for k in range(hops + 1)])
    b = jnp.zeros((1, fout), jnp.float32)
    return w, b                             # kept f32: tiny fin, cheap either way


def init_params(key):
    ks = jax.random.split(key, 11)
    p = {}
    # conv1 = DynamicEdgeConv(MLP([2*3, 64, 64, 64]))
    p['c1_wd'], p['c1_wb'], p['c1_b0'] = _edge_first(ks[0], 3, 64)
    p['c1_w1'], p['c1_b1'] = _lin_bn(ks[1], 64, 64)
    p['c1_w2'], p['c1_b2'] = _lin_bn(ks[2], 64, 64)
    # conv2 = DynamicEdgeConv(MLP([2*64, 128]))
    p['c2_wd'], p['c2_wb'], p['c2_b0'] = _edge_first(ks[3], 64, 128)
    # lin1 = MLP([128+64, 512]) applied to cat(x1[64], x2[128])
    p['l1_wa'], p['l1_wb'], p['l1_b'] = _lin_bn_cat2(ks[4], 64, 128, 512)
    # TAGConv(4,64,3) / TAGConv(64,128,3)
    p['g1_w'], p['g1_b'] = _tag(ks[5], 4, 64, 3)
    p['g2_w'], p['g2_b'] = _tag(ks[6], 64, 128, 3)
    # lin_gcnn1 = MLP([128+64, 512]) applied to cat(w1[64], w2[128])
    p['lg_wa'], p['lg_wb'], p['lg_b'] = _lin_bn_cat2(ks[7], 64, 128, 512)
    # mix_output: MLP([1024,512]) -> MLP([512,256]) -> Lin(256,1)
    p['m1_wa'], p['m1_wb'], p['m1_b'] = _lin_bn_cat2(ks[8], 512, 512, 512)
    p['m2_w'], p['m2_b'] = _lin_bn(ks[9], 512, 256)
    wf, bf = _linear(ks[10], 256, 1)        # no BN on the final Linear
    # pad the 1-wide output to 128 lanes (lane-dense store); sliced outside.
    p['mf_w'] = jnp.zeros((256, 128), jnp.float32).at[:, :1].set(wf).astype(jnp.bfloat16)
    p['mf_b'] = jnp.zeros((1, 128), jnp.float32).at[:, :1].set(bf)
    return p


if __name__ == "__main__":
    key = jax.random.PRNGKey(0)
    kp, kx = jax.random.split(key)
    params = init_params(kp)

    # N must equal 4: the forward cats out1 ([N,512]) with out2 ([4,512]).
    n = NREAL
    x_input = jax.random.normal(kx, (n, 4), jnp.float32)   # first 3 cols = pos
    batch = jnp.zeros((n,), jnp.int32)
    src = jnp.array([0, 1, 2, 3, 1, 2, 3, 0], jnp.int32)
    dst = jnp.array([1, 2, 3, 0, 0, 1, 2, 3], jnp.int32)
    edge_index = jnp.stack([src, dst])                      # [2, 8]

    out = mixconv_forward(params, x_input, edge_index, batch)
    jax.block_until_ready(out)
    assert out.shape == (n, 1) and bool(jnp.all(jnp.isfinite(out)))
    print("KERNEL_OK")
</pallas_src>

<mosaic_0001>
module attributes {stable_mosaic.version = 11 : i64} {
  func.func @_mixconv_kernel(%arg0: memref<8x3xf32, #tpu.memory_space<vmem>>, %arg1: memref<8x4xf32, #tpu.memory_space<vmem>>, %arg2: memref<3x8x8xf32, #tpu.memory_space<vmem>>, %arg3: memref<3x64xbf16, #tpu.memory_space<vmem>>, %arg4: memref<3x64xbf16, #tpu.memory_space<vmem>>, %arg5: memref<1x64xf32, #tpu.memory_space<vmem>>, %arg6: memref<64x64xbf16, #tpu.memory_space<vmem>>, %arg7: memref<1x64xf32, #tpu.memory_space<vmem>>, %arg8: memref<64x64xbf16, #tpu.memory_space<vmem>>, %arg9: memref<1x64xf32, #tpu.memory_space<vmem>>, %arg10: memref<64x128xbf16, #tpu.memory_space<vmem>>, %arg11: memref<64x128xbf16, #tpu.memory_space<vmem>>, %arg12: memref<1x128xf32, #tpu.memory_space<vmem>>, %arg13: memref<64x512xbf16, #tpu.memory_space<vmem>>, %arg14: memref<128x512xbf16, #tpu.memory_space<vmem>>, %arg15: memref<1x512xf32, #tpu.memory_space<vmem>>, %arg16: memref<4x4x64xf32, #tpu.memory_space<vmem>>, %arg17: memref<1x64xf32, #tpu.memory_space<vmem>>, %arg18: memref<4x64x128xf32, #tpu.memory_space<vmem>>, %arg19: memref<1x128xf32, #tpu.memory_space<vmem>>, %arg20: memref<64x512xbf16, #tpu.memory_space<vmem>>, %arg21: memref<128x512xbf16, #tpu.memory_space<vmem>>, %arg22: memref<1x512xf32, #tpu.memory_space<vmem>>, %arg23: memref<512x512xbf16, #tpu.memory_space<vmem>>, %arg24: memref<512x512xbf16, #tpu.memory_space<vmem>>, %arg25: memref<1x512xf32, #tpu.memory_space<vmem>>, %arg26: memref<512x256xbf16, #tpu.memory_space<vmem>>, %arg27: memref<1x256xf32, #tpu.memory_space<vmem>>, %arg28: memref<256x128xbf16, #tpu.memory_space<vmem>>, %arg29: memref<1x128xf32, #tpu.memory_space<vmem>>, %arg30: memref<8x128xf32, #tpu.memory_space<vmem>>) attributes {dimension_semantics = [], scalar_prefetch = 0 : i64, scratch_operands = 0 : i64, tpu.core_type = #tpu.core_type<tc>} {
    %0 = tpu.iota {dimensions = array<i32: 1>} : vector<8x8x1xi32>
    %c4_i32 = arith.constant 4 : i32
    %1 = vector.broadcast %c4_i32 : i32 to vector<8x8x1xi32>
    %2 = arith.cmpi slt, %0, %1 : vector<8x8x1xi32>
    %3 = arith.extui %2 : vector<8x8x1xi1> to vector<8x8x1xi32>
    %4 = arith.sitofp %3 : vector<8x8x1xi32> to vector<8x8x1xf32>
    %c0 = arith.constant 0 : index
    %c0_0 = arith.constant 0 : index
    %5 = vector.load %arg0[%c0, %c0_0] : memref<8x3xf32, #tpu.memory_space<vmem>>, vector<8x3xf32>
    %6 = arith.truncf %5 : vector<8x3xf32> to vector<8x3xbf16>
    %c0_1 = arith.constant 0 : index
    %c0_2 = arith.constant 0 : index
    %7 = vector.load %arg3[%c0_1, %c0_2] : memref<3x64xbf16, #tpu.memory_space<vmem>>, vector<3x64xbf16>
    %cst = arith.constant dense<0.000000e+00> : vector<8x64xf32>
    %8 = tpu.matmul %6, %7, %cst {dimension_numbers = #tpu.dot_dimension_numbers<[1], [0], [0], [1], [0, 0, 1, 1], [], []>} : vector<8x3xbf16>, vector<3x64xbf16>, vector<8x64xf32> -> vector<8x64xf32>
    %c0_3 = arith.constant 0 : index
    %c0_4 = arith.constant 0 : index
    %9 = vector.load %arg4[%c0_3, %c0_4] : memref<3x64xbf16, #tpu.memory_space<vmem>>, vector<3x64xbf16>
    %cst_5 = arith.constant dense<0.000000e+00> : vector<8x64xf32>
    %10 = tpu.matmul %6, %9, %cst_5 {dimension_numbers = #tpu.dot_dimension_numbers<[1], [0], [0], [1], [0, 0, 1, 1], [], []>} : vector<8x3xbf16>, vector<3x64xbf16>, vector<8x64xf32> -> vector<8x64xf32>
    %11 = vector.shape_cast %8 : vector<8x64xf32> to vector<8x1x64xf32>
    %12 = vector.shape_cast %10 : vector<8x64xf32> to vector<1x8x64xf32>
    %13 = vector.broadcast %11 : vector<8x1x64xf32> to vector<8x8x64xf32>
    %14 = vector.broadcast %12 : vector<1x8x64xf32> to vector<8x8x64xf32>
    %15 = arith.addf %13, %14 : vector<8x8x64xf32>
    %16 = vector.shape_cast %15 : vector<8x8x64xf32> to vector<64x64xf32>
    %c0_6 = arith.constant 0 : index
    %c0_7 = arith.constant 0 : index
    %17 = vector.load %arg5[%c0_6, %c0_7] : memref<1x64xf32, #tpu.memory_space<vmem>>, vector<1x64xf32>
    %18 = vector.broadcast %17 : vector<1x64xf32> to vector<64x64xf32>
    %19 = arith.addf %16, %18 : vector<64x64xf32>
    %cst_8 = arith.constant 0.000000e+00 : f32
    %20 = vector.broadcast %cst_8 : f32 to vector<64x64xf32>
    %21 = arith.maximumf %19, %20 : vector<64x64xf32>
    %22 = arith.truncf %21 : vector<64x64xf32> to vector<64x64xbf16>
    %c0_9 = arith.constant 0 : index
    %c0_10 = arith.constant 0 : index
    %23 = vector.load %arg6[%c0_9, %c0_10] : memref<64x64xbf16, #tpu.memory_space<vmem>>, vector<64x64xbf16>
    %cst_11 = arith.constant dense<0.000000e+00> : vector<64x64xf32>
    %24 = tpu.matmul %22, %23, %cst_11 {dimension_numbers = #tpu.dot_dimension_numbers<[1], [0], [0], [1], [0, 0, 1, 1], [], []>} : vector<64x64xbf16>, vector<64x64xbf16>, vector<64x64xf32> -> vector<64x64xf32>
    %c0_12 = arith.constant 0 : index
    %c0_13 = arith.constant 0 : index
    %25 = vector.load %arg7[%c0_12, %c0_13] : memref<1x64xf32, #tpu.memory_space<vmem>>, vector<1x64xf32>
    %26 = vector.broadcast %25 : vector<1x64xf32> to vector<64x64xf32>
    %27 = arith.addf %24, %26 : vector<64x64xf32>
    %cst_14 = arith.constant 0.000000e+00 : f32
    %28 = vector.broadcast %cst_14 : f32 to vector<64x64xf32>
    %29 = arith.maximumf %27, %28 : vector<64x64xf32>
    %30 = arith.truncf %29 : vector<64x64xf32> to vector<64x64xbf16>
    %c0_15 = arith.constant 0 : index
    %c0_16 = arith.constant 0 : index
    %31 = vector.load %arg8[%c0_15, %c0_16] : memref<64x64xbf16, #tpu.memory_space<vmem>>, vector<64x64xbf16>
    %cst_17 = arith.constant dense<0.000000e+00> : vector<64x64xf32>
    %32 = tpu.matmul %30, %31, %cst_17 {dimension_numbers = #tpu.dot_dimension_numbers<[1], [0], [0], [1], [0, 0, 1, 1], [], []>} : vector<64x64xbf16>, vector<64x64xbf16>, vector<64x64xf32> -> vector<64x64xf32>
    %c0_18 = arith.constant 0 : index
    %c0_19 = arith.constant 0 : index
    %33 = vector.load %arg9[%c0_18, %c0_19] : memref<1x64xf32, #tpu.memory_space<vmem>>, vector<1x64xf32>
    %34 = vector.broadcast %33 : vector<1x64xf32> to vector<64x64xf32>
    %35 = arith.addf %32, %34 : vector<64x64xf32>
    %cst_20 = arith.constant 0.000000e+00 : f32
    %36 = vector.broadcast %cst_20 : f32 to vector<64x64xf32>
    %37 = arith.maximumf %35, %36 : vector<64x64xf32>
    %38 = vector.shape_cast %37 : vector<64x64xf32> to vector<8x8x64xf32>
    %39 = vector.broadcast %4 : vector<8x8x1xf32> to vector<8x8x64xf32>
    %40 = arith.mulf %38, %39 : vector<8x8x64xf32>
    %cst_21 = arith.constant dense<0xFF800000> : vector<8x64xf32>
    %41 = vector.multi_reduction <maximumf>, %40, %cst_21 [1] : vector<8x8x64xf32> to vector<8x64xf32>
    %42 = arith.truncf %41 : vector<8x64xf32> to vector<8x64xbf16>
    %c0_22 = arith.constant 0 : index
    %c0_23 = arith.constant 0 : index
    %43 = vector.load %arg10[%c0_22, %c0_23] : memref<64x128xbf16, #tpu.memory_space<vmem>>, vector<64x128xbf16>
    %cst_24 = arith.constant dense<0.000000e+00> : vector<8x128xf32>
    %44 = tpu.matmul %42, %43, %cst_24 {dimension_numbers = #tpu.dot_dimension_numbers<[1], [0], [0], [1], [0, 0, 1, 1], [], []>} : vector<8x64xbf16>, vector<64x128xbf16>, vector<8x128xf32> -> vector<8x128xf32>
    %c0_25 = arith.constant 0 : index
    %c0_26 = arith.constant 0 : index
    %45 = vector.load %arg11[%c0_25, %c0_26] : memref<64x128xbf16, #tpu.memory_space<vmem>>, vector<64x128xbf16>
    %cst_27 = arith.constant dense<0.000000e+00> : vector<8x128xf32>
    %46 = tpu.matmul %42, %45, %cst_27 {dimension_numbers = #tpu.dot_dimension_numbers<[1], [0], [0], [1], [0, 0, 1, 1], [], []>} : vector<8x64xbf16>, vector<64x128xbf16>, vector<8x128xf32> -> vector<8x128xf32>
    %47 = vector.shape_cast %44 : vector<8x128xf32> to vector<8x1x128xf32>
    %48 = vector.shape_cast %46 : vector<8x128xf32> to vector<1x8x128xf32>
    %49 = vector.broadcast %47 : vector<8x1x128xf32> to vector<8x8x128xf32>
    %50 = vector.broadcast %48 : vector<1x8x128xf32> to vector<8x8x128xf32>
    %51 = arith.addf %49, %50 : vector<8x8x128xf32>
    %52 = vector.shape_cast %51 : vector<8x8x128xf32> to vector<64x128xf32>
    %c0_28 = arith.constant 0 : index
    %c0_29 = arith.constant 0 : index
    %53 = vector.load %arg12[%c0_28, %c0_29] : memref<1x128xf32, #tpu.memory_space<vmem>>, vector<1x128xf32>
    %54 = vector.broadcast %53 : vector<1x128xf32> to vector<64x128xf32>
    %55 = arith.addf %52, %54 : vector<64x128xf32>
    %cst_30 = arith.constant 0.000000e+00 : f32
    %56 = vector.broadcast %cst_30 : f32 to vector<64x128xf32>
    %57 = arith.maximumf %55, %56 : vector<64x128xf32>
    %58 = vector.shape_cast %57 : vector<64x128xf32> to vector<8x8x128xf32>
    %59 = vector.broadcast %4 : vector<8x8x1xf32> to vector<8x8x128xf32>
    %60 = arith.mulf %58, %59 : vector<8x8x128xf32>
    %cst_31 = arith.constant dense<0xFF800000> : vector<8x128xf32>
    %61 = vector.multi_reduction <maximumf>, %60, %cst_31 [1] : vector<8x8x128xf32> to vector<8x128xf32>
    %62 = arith.truncf %41 : vector<8x64xf32> to vector<8x64xbf16>
    %c0_32 = arith.constant 0 : index
    %c0_33 = arith.constant 0 : index
    %63 = vector.load %arg13[%c0_32, %c0_33] : memref<64x512xbf16, #tpu.memory_space<vmem>>, vector<64x512xbf16>
    %cst_34 = arith.constant dense<0.000000e+00> : vector<8x512xf32>
    %64 = tpu.matmul %62, %63, %cst_34 {dimension_numbers = #tpu.dot_dimension_numbers<[1], [0], [0], [1], [0, 0, 1, 1], [], []>} : vector<8x64xbf16>, vector<64x512xbf16>, vector<8x512xf32> -> vector<8x512xf32>
    %65 = arith.truncf %61 : vector<8x128xf32> to vector<8x128xbf16>
    %c0_35 = arith.constant 0 : index
    %c0_36 = arith.constant 0 : index
    %66 = vector.load %arg14[%c0_35, %c0_36] : memref<128x512xbf16, #tpu.memory_space<vmem>>, vector<128x512xbf16>
    %cst_37 = arith.constant dense<0.000000e+00> : vector<8x512xf32>
    %67 = tpu.matmul %65, %66, %cst_37 {dimension_numbers = #tpu.dot_dimension_numbers<[1], [0], [0], [1], [0, 0, 1, 1], [], []>} : vector<8x128xbf16>, vector<128x512xbf16>, vector<8x512xf32> -> vector<8x512xf32>
    %68 = arith.addf %64, %67 : vector<8x512xf32>
    %c0_38 = arith.constant 0 : index
    %c0_39 = arith.constant 0 : index
    %69 = vector.load %arg15[%c0_38, %c0_39] : memref<1x512xf32, #tpu.memory_space<vmem>>, vector<1x512xf32>
    %70 = vector.broadcast %69 : vector<1x512xf32> to vector<8x512xf32>
    %71 = arith.addf %68, %70 : vector<8x512xf32>
    %cst_40 = arith.constant 0.000000e+00 : f32
    %72 = vector.broadcast %cst_40 : f32 to vector<8x512xf32>
    %73 = arith.maximumf %71, %72 : vector<8x512xf32>
    %c0_41 = arith.constant 0 : index
    %c0_42 = arith.constant 0 : index
    %74 = vector.load %arg1[%c0_41, %c0_42] : memref<8x4xf32, #tpu.memory_space<vmem>>, vector<8x4xf32>
    %c0_43 = arith.constant 0 : index
    %c0_44 = arith.constant 0 : index
    %c0_45 = arith.constant 0 : index
    %75 = vector.load %arg2[%c0_43, %c0_44, %c0_45] : memref<3x8x8xf32, #tpu.memory_space<vmem>>, vector<3x8x8xf32>
    %c0_46 = arith.constant 0 : index
    %c0_47 = arith.constant 0 : index
    %c0_48 = arith.constant 0 : index
    %76 = vector.load %arg16[%c0_46, %c0_47, %c0_48] : memref<4x4x64xf32, #tpu.memory_space<vmem>>, vector<4x4x64xf32>
    %77 = vector.extract_strided_slice %76 {offsets = [0, 0, 0], sizes = [1, 4, 64], strides = [1, 1, 1]} : vector<4x4x64xf32> to vector<1x4x64xf32>
    %78 = vector.shape_cast %77 : vector<1x4x64xf32> to vector<4x64xf32>
    %cst_49 = arith.constant dense<0.000000e+00> : vector<8x64xf32>
    %79 = tpu.matmul %74, %78, %cst_49 {dimension_numbers = #tpu.dot_dimension_numbers<[1], [0], [0], [1], [0, 0, 1, 1], [], []>} : vector<8x4xf32>, vector<4x64xf32>, vector<8x64xf32> -> vector<8x64xf32>
    %80 = vector.extract_strided_slice %75 {offsets = [0, 0, 0], sizes = [1, 8, 8], strides = [1, 1, 1]} : vector<3x8x8xf32> to vector<1x8x8xf32>
    %81 = vector.shape_cast %80 : vector<1x8x8xf32> to vector<8x8xf32>
    %cst_50 = arith.constant dense<0.000000e+00> : vector<8x4xf32>
    %82 = tpu.matmul %81, %74, %cst_50 {dimension_numbers = #tpu.dot_dimension_numbers<[1], [0], [0], [1], [0, 0, 1, 1], [], []>} : vector<8x8xf32>, vector<8x4xf32>, vector<8x4xf32> -> vector<8x4xf32>
    %83 = vector.extract_strided_slice %76 {offsets = [1, 0, 0], sizes = [1, 4, 64], strides = [1, 1, 1]} : vector<4x4x64xf32> to vector<1x4x64xf32>
    %84 = vector.shape_cast %83 : vector<1x4x64xf32> to vector<4x64xf32>
    %cst_51 = arith.constant dense<0.000000e+00> : vector<8x64xf32>
    %85 = tpu.matmul %82, %84, %cst_51 {dimension_numbers = #tpu.dot_dimension_numbers<[1], [0], [0], [1], [0, 0, 1, 1], [], []>} : vector<8x4xf32>, vector<4x64xf32>, vector<8x64xf32> -> vector<8x64xf32>
    %86 = arith.addf %79, %85 : vector<8x64xf32>
    %87 = vector.extract_strided_slice %75 {offsets = [1, 0, 0], sizes = [1, 8, 8], strides = [1, 1, 1]} : vector<3x8x8xf32> to vector<1x8x8xf32>
    %88 = vector.shape_cast %87 : vector<1x8x8xf32> to vector<8x8xf32>
    %cst_52 = arith.constant dense<0.000000e+00> : vector<8x4xf32>
    %89 = tpu.matmul %88, %74, %cst_52 {dimension_numbers = #tpu.dot_dimension_numbers<[1], [0], [0], [1], [0, 0, 1, 1], [], []>} : vector<8x8xf32>, vector<8x4xf32>, vector<8x4xf32> -> vector<8x4xf32>
    %90 = vector.extract_strided_slice %76 {offsets = [2, 0, 0], sizes = [1, 4, 64], strides = [1, 1, 1]} : vector<4x4x64xf32> to vector<1x4x64xf32>
    %91 = vector.shape_cast %90 : vector<1x4x64xf32> to vector<4x64xf32>
    %cst_53 = arith.constant dense<0.000000e+00> : vector<8x64xf32>
    %92 = tpu.matmul %89, %91, %cst_53 {dimension_numbers = #tpu.dot_dimension_numbers<[1], [0], [0], [1], [0, 0, 1, 1], [], []>} : vector<8x4xf32>, vector<4x64xf32>, vector<8x64xf32> -> vector<8x64xf32>
    %93 = arith.addf %86, %92 : vector<8x64xf32>
    %94 = vector.extract_strided_slice %75 {offsets = [2, 0, 0], sizes = [1, 8, 8], strides = [1, 1, 1]} : vector<3x8x8xf32> to vector<1x8x8xf32>
    %95 = vector.shape_cast %94 : vector<1x8x8xf32> to vector<8x8xf32>
    %cst_54 = arith.constant dense<0.000000e+00> : vector<8x4xf32>
    %96 = tpu.matmul %95, %74, %cst_54 {dimension_numbers = #tpu.dot_dimension_numbers<[1], [0], [0], [1], [0, 0, 1, 1], [], []>} : vector<8x8xf32>, vector<8x4xf32>, vector<8x4xf32> -> vector<8x4xf32>
    %97 = vector.extract_strided_slice %76 {offsets = [3, 0, 0], sizes = [1, 4, 64], strides = [1, 1, 1]} : vector<4x4x64xf32> to vector<1x4x64xf32>
    %98 = vector.shape_cast %97 : vector<1x4x64xf32> to vector<4x64xf32>
    %cst_55 = arith.constant dense<0.000000e+00> : vector<8x64xf32>
    %99 = tpu.matmul %96, %98, %cst_55 {dimension_numbers = #tpu.dot_dimension_numbers<[1], [0], [0], [1], [0, 0, 1, 1], [], []>} : vector<8x4xf32>, vector<4x64xf32>, vector<8x64xf32> -> vector<8x64xf32>
    %100 = arith.addf %93, %99 : vector<8x64xf32>
    %c0_56 = arith.constant 0 : index
    %c0_57 = arith.constant 0 : index
    %101 = vector.load %arg17[%c0_56, %c0_57] : memref<1x64xf32, #tpu.memory_space<vmem>>, vector<1x64xf32>
    %102 = vector.broadcast %101 : vector<1x64xf32> to vector<8x64xf32>
    %103 = arith.addf %100, %102 : vector<8x64xf32>
    %cst_58 = arith.constant 0.000000e+00 : f32
    %104 = vector.broadcast %cst_58 : f32 to vector<8x64xf32>
    %105 = arith.maximumf %103, %104 : vector<8x64xf32>
    %c0_59 = arith.constant 0 : index
    %c0_60 = arith.constant 0 : index
    %c0_61 = arith.constant 0 : index
    %106 = vector.load %arg18[%c0_59, %c0_60, %c0_61] : memref<4x64x128xf32, #tpu.memory_space<vmem>>, vector<4x64x128xf32>
    %107 = vector.extract_strided_slice %106 {offsets = [0, 0, 0], sizes = [1, 64, 128], strides = [1, 1, 1]} : vector<4x64x128xf32> to vector<1x64x128xf32>
    %108 = vector.shape_cast %107 : vector<1x64x128xf32> to vector<64x128xf32>
    %cst_62 = arith.constant dense<0.000000e+00> : vector<8x128xf32>
    %109 = tpu.matmul %105, %108, %cst_62 {dimension_numbers = #tpu.dot_dimension_numbers<[1], [0], [0], [1], [0, 0, 1, 1], [], []>} : vector<8x64xf32>, vector<64x128xf32>, vector<8x128xf32> -> vector<8x128xf32>
    %110 = vector.extract_strided_slice %75 {offsets = [0, 0, 0], sizes = [1, 8, 8], strides = [1, 1, 1]} : vector<3x8x8xf32> to vector<1x8x8xf32>
    %111 = vector.shape_cast %110 : vector<1x8x8xf32> to vector<8x8xf32>
    %cst_63 = arith.constant dense<0.000000e+00> : vector<8x64xf32>
    %112 = tpu.matmul %111, %105, %cst_63 {dimension_numbers = #tpu.dot_dimension_numbers<[1], [0], [0], [1], [0, 0, 1, 1], [], []>} : vector<8x8xf32>, vector<8x64xf32>, vector<8x64xf32> -> vector<8x64xf32>
    %113 = vector.extract_strided_slice %106 {offsets = [1, 0, 0], sizes = [1, 64, 128], strides = [1, 1, 1]} : vector<4x64x128xf32> to vector<1x64x128xf32>
    %114 = vector.shape_cast %113 : vector<1x64x128xf32> to vector<64x128xf32>
    %cst_64 = arith.constant dense<0.000000e+00> : vector<8x128xf32>
    %115 = tpu.matmul %112, %114, %cst_64 {dimension_numbers = #tpu.dot_dimension_numbers<[1], [0], [0], [1], [0, 0, 1, 1], [], []>} : vector<8x64xf32>, vector<64x128xf32>, vector<8x128xf32> -> vector<8x128xf32>
    %116 = arith.addf %109, %115 : vector<8x128xf32>
    %117 = vector.extract_strided_slice %75 {offsets = [1, 0, 0], sizes = [1, 8, 8], strides = [1, 1, 1]} : vector<3x8x8xf32> to vector<1x8x8xf32>
    %118 = vector.shape_cast %117 : vector<1x8x8xf32> to vector<8x8xf32>
    %cst_65 = arith.constant dense<0.000000e+00> : vector<8x64xf32>
    %119 = tpu.matmul %118, %105, %cst_65 {dimension_numbers = #tpu.dot_dimension_numbers<[1], [0], [0], [1], [0, 0, 1, 1], [], []>} : vector<8x8xf32>, vector<8x64xf32>, vector<8x64xf32> -> vector<8x64xf32>
    %120 = vector.extract_strided_slice %106 {offsets = [2, 0, 0], sizes = [1, 64, 128], strides = [1, 1, 1]} : vector<4x64x128xf32> to vector<1x64x128xf32>
    %121 = vector.shape_cast %120 : vector<1x64x128xf32> to vector<64x128xf32>
    %cst_66 = arith.constant dense<0.000000e+00> : vector<8x128xf32>
    %122 = tpu.matmul %119, %121, %cst_66 {dimension_numbers = #tpu.dot_dimension_numbers<[1], [0], [0], [1], [0, 0, 1, 1], [], []>} : vector<8x64xf32>, vector<64x128xf32>, vector<8x128xf32> -> vector<8x128xf32>
    %123 = arith.addf %116, %122 : vector<8x128xf32>
    %124 = vector.extract_strided_slice %75 {offsets = [2, 0, 0], sizes = [1, 8, 8], strides = [1, 1, 1]} : vector<3x8x8xf32> to vector<1x8x8xf32>
    %125 = vector.shape_cast %124 : vector<1x8x8xf32> to vector<8x8xf32>
    %cst_67 = arith.constant dense<0.000000e+00> : vector<8x64xf32>
    %126 = tpu.matmul %125, %105, %cst_67 {dimension_numbers = #tpu.dot_dimension_numbers<[1], [0], [0], [1], [0, 0, 1, 1], [], []>} : vector<8x8xf32>, vector<8x64xf32>, vector<8x64xf32> -> vector<8x64xf32>
    %127 = vector.extract_strided_slice %106 {offsets = [3, 0, 0], sizes = [1, 64, 128], strides = [1, 1, 1]} : vector<4x64x128xf32> to vector<1x64x128xf32>
    %128 = vector.shape_cast %127 : vector<1x64x128xf32> to vector<64x128xf32>
    %cst_68 = arith.constant dense<0.000000e+00> : vector<8x128xf32>
    %129 = tpu.matmul %126, %128, %cst_68 {dimension_numbers = #tpu.dot_dimension_numbers<[1], [0], [0], [1], [0, 0, 1, 1], [], []>} : vector<8x64xf32>, vector<64x128xf32>, vector<8x128xf32> -> vector<8x128xf32>
    %130 = arith.addf %123, %129 : vector<8x128xf32>
    %c0_69 = arith.constant 0 : index
    %c0_70 = arith.constant 0 : index
    %131 = vector.load %arg19[%c0_69, %c0_70] : memref<1x128xf32, #tpu.memory_space<vmem>>, vector<1x128xf32>
    %132 = vector.broadcast %131 : vector<1x128xf32> to vector<8x128xf32>
    %133 = arith.addf %130, %132 : vector<8x128xf32>
    %cst_71 = arith.constant 0.000000e+00 : f32
    %134 = vector.broadcast %cst_71 : f32 to vector<8x128xf32>
    %135 = arith.maximumf %133, %134 : vector<8x128xf32>
    %136 = arith.truncf %105 : vector<8x64xf32> to vector<8x64xbf16>
    %c0_72 = arith.constant 0 : index
    %c0_73 = arith.constant 0 : index
    %137 = vector.load %arg20[%c0_72, %c0_73] : memref<64x512xbf16, #tpu.memory_space<vmem>>, vector<64x512xbf16>
    %cst_74 = arith.constant dense<0.000000e+00> : vector<8x512xf32>
    %138 = tpu.matmul %136, %137, %cst_74 {dimension_numbers = #tpu.dot_dimension_numbers<[1], [0], [0], [1], [0, 0, 1, 1], [], []>} : vector<8x64xbf16>, vector<64x512xbf16>, vector<8x512xf32> -> vector<8x512xf32>
    %139 = arith.truncf %135 : vector<8x128xf32> to vector<8x128xbf16>
    %c0_75 = arith.constant 0 : index
    %c0_76 = arith.constant 0 : index
    %140 = vector.load %arg21[%c0_75, %c0_76] : memref<128x512xbf16, #tpu.memory_space<vmem>>, vector<128x512xbf16>
    %cst_77 = arith.constant dense<0.000000e+00> : vector<8x512xf32>
    %141 = tpu.matmul %139, %140, %cst_77 {dimension_numbers = #tpu.dot_dimension_numbers<[1], [0], [0], [1], [0, 0, 1, 1], [], []>} : vector<8x128xbf16>, vector<128x512xbf16>, vector<8x512xf32> -> vector<8x512xf32>
    %142 = arith.addf %138, %141 : vector<8x512xf32>
    %c0_78 = arith.constant 0 : index
    %c0_79 = arith.constant 0 : index
    %143 = vector.load %arg22[%c0_78, %c0_79] : memref<1x512xf32, #tpu.memory_space<vmem>>, vector<1x512xf32>
    %144 = vector.broadcast %143 : vector<1x512xf32> to vector<8x512xf32>
    %145 = arith.addf %142, %144 : vector<8x512xf32>
    %cst_80 = arith.constant 0.000000e+00 : f32
    %146 = vector.broadcast %cst_80 : f32 to vector<8x512xf32>
    %147 = arith.maximumf %145, %146 : vector<8x512xf32>
    %148 = arith.truncf %73 : vector<8x512xf32> to vector<8x512xbf16>
    %c0_81 = arith.constant 0 : index
    %c0_82 = arith.constant 0 : index
    %149 = vector.load %arg23[%c0_81, %c0_82] : memref<512x512xbf16, #tpu.memory_space<vmem>>, vector<512x512xbf16>
    %cst_83 = arith.constant dense<0.000000e+00> : vector<8x512xf32>
    %150 = tpu.matmul %148, %149, %cst_83 {dimension_numbers = #tpu.dot_dimension_numbers<[1], [0], [0], [1], [0, 0, 1, 1], [], []>} : vector<8x512xbf16>, vector<512x512xbf16>, vector<8x512xf32> -> vector<8x512xf32>
    %151 = arith.truncf %147 : vector<8x512xf32> to vector<8x512xbf16>
    %c0_84 = arith.constant 0 : index
    %c0_85 = arith.constant 0 : index
    %152 = vector.load %arg24[%c0_84, %c0_85] : memref<512x512xbf16, #tpu.memory_space<vmem>>, vector<512x512xbf16>
    %cst_86 = arith.constant dense<0.000000e+00> : vector<8x512xf32>
    %153 = tpu.matmul %151, %152, %cst_86 {dimension_numbers = #tpu.dot_dimension_numbers<[1], [0], [0], [1], [0, 0, 1, 1], [], []>} : vector<8x512xbf16>, vector<512x512xbf16>, vector<8x512xf32> -> vector<8x512xf32>
    %154 = arith.addf %150, %153 : vector<8x512xf32>
    %c0_87 = arith.constant 0 : index
    %c0_88 = arith.constant 0 : index
    %155 = vector.load %arg25[%c0_87, %c0_88] : memref<1x512xf32, #tpu.memory_space<vmem>>, vector<1x512xf32>
    %156 = vector.broadcast %155 : vector<1x512xf32> to vector<8x512xf32>
    %157 = arith.addf %154, %156 : vector<8x512xf32>
    %cst_89 = arith.constant 0.000000e+00 : f32
    %158 = vector.broadcast %cst_89 : f32 to vector<8x512xf32>
    %159 = arith.maximumf %157, %158 : vector<8x512xf32>
    %160 = arith.truncf %159 : vector<8x512xf32> to vector<8x512xbf16>
    %c0_90 = arith.constant 0 : index
    %c0_91 = arith.constant 0 : index
    %161 = vector.load %arg26[%c0_90, %c0_91] : memref<512x256xbf16, #tpu.memory_space<vmem>>, vector<512x256xbf16>
    %cst_92 = arith.constant dense<0.000000e+00> : vector<8x256xf32>
    %162 = tpu.matmul %160, %161, %cst_92 {dimension_numbers = #tpu.dot_dimension_numbers<[1], [0], [0], [1], [0, 0, 1, 1], [], []>} : vector<8x512xbf16>, vector<512x256xbf16>, vector<8x256xf32> -> vector<8x256xf32>
    %c0_93 = arith.constant 0 : index
    %c0_94 = arith.constant 0 : index
    %163 = vector.load %arg27[%c0_93, %c0_94] : memref<1x256xf32, #tpu.memory_space<vmem>>, vector<1x256xf32>
    %164 = vector.broadcast %163 : vector<1x256xf32> to vector<8x256xf32>
    %165 = arith.addf %162, %164 : vector<8x256xf32>
    %cst_95 = arith.constant 0.000000e+00 : f32
    %166 = vector.broadcast %cst_95 : f32 to vector<8x256xf32>
    %167 = arith.maximumf %165, %166 : vector<8x256xf32>
    %168 = arith.truncf %167 : vector<8x256xf32> to vector<8x256xbf16>
    %c0_96 = arith.constant 0 : index
    %c0_97 = arith.constant 0 : index
    %169 = vector.load %arg28[%c0_96, %c0_97] : memref<256x128xbf16, #tpu.memory_space<vmem>>, vector<256x128xbf16>
    %cst_98 = arith.constant dense<0.000000e+00> : vector<8x128xf32>
    %170 = tpu.matmul %168, %169, %cst_98 {dimension_numbers = #tpu.dot_dimension_numbers<[1], [0], [0], [1], [0, 0, 1, 1], [], []>} : vector<8x256xbf16>, vector<256x128xbf16>, vector<8x128xf32> -> vector<8x128xf32>
    %c0_99 = arith.constant 0 : index
    %c0_100 = arith.constant 0 : index
    %171 = vector.load %arg29[%c0_99, %c0_100] : memref<1x128xf32, #tpu.memory_space<vmem>>, vector<1x128xf32>
    %172 = vector.broadcast %171 : vector<1x128xf32> to vector<8x128xf32>
    %173 = arith.addf %170, %172 : vector<8x128xf32>
    %c0_101 = arith.constant 0 : index
    %c0_102 = arith.constant 0 : index
    %174 = vector.load %arg30[%c0_101, %c0_102] : memref<8x128xf32, #tpu.memory_space<vmem>>, vector<8x128xf32>
    tpu.vector_store %arg30[%c0_101, %c0_102], %173 {strides = array<i32>} : memref<8x128xf32, #tpu.memory_space<vmem>>, vector<8x128xf32>,
    return
  }
}

</mosaic_0001>

<llo_original>
// kernel: mul.1
$region0: #{mul.1}
  #allocation0 [shape = 's32[1]{0}', space=sflag, size = 0x4, scoped, tag = 'scoped memory for mul.1']
  %s0 = inlined_call_operand.vmem [shape: f32[8], index: 0, kind: input, shape index: {}]
  %s1 = inlined_call_operand.vmem [shape: f32[8], index: 1, kind: input, shape index: {}]
  %s2 = inlined_call_operand.vmem [shape: f32[8], index: 2, kind: output, shape index: {}]
  %v3 = vld [vmem:[%s0] sm:$0x1]
  %v4 = vld [vmem:[%s1] sm:$0x1]
  %5 = xla_tuple %v3, %v4
  %6 = xla_tuple %5
  %v7 = vmul.f32 %v3, %v4
  %8 = xla_tuple %v7
  %9 = vst [vmem:[%s2] sm:$0x1] %v7

// kernel: mixconv_forward.1
$region0: #{mixconv_forward.1}
  #allocation0 [shape = 'u32[]', space=smem, size = 0x4, offset = 0x4, fixed_abs, tag = 'smem constant byte address 0x4 - core index']
  #allocation1 [shape = 'u32[144,128]{1,0:T(1,128)}', space=vmem, size = 0x12000, scoped, tag = 'internal scratch']
  %s0 = inlined_call_operand.smem [shape: u32[31], index: -1, kind: input, shape index: {}]
  %s1 = sld [smem:[%s0]]
  %s2 = scalar_lea.smem %s0, 1
  %s3 = sld [smem:[%s2]]
  %s4 = scalar_lea.smem %s0, 2
  %s5 = sld [smem:[%s4]]
  %s6 = scalar_lea.smem %s0, 3
  %s7 = sld [smem:[%s6]]
  %s8 = scalar_lea.smem %s0, 4
  %s9 = sld [smem:[%s8]]
  %s10 = scalar_lea.smem %s0, 5
  %s11 = sld [smem:[%s10]]
  %s12 = scalar_lea.smem %s0, 6
  %s13 = sld [smem:[%s12]]
  %s14 = scalar_lea.smem %s0, 7
  %s15 = sld [smem:[%s14]]
  %s16 = scalar_lea.smem %s0, 8
  %s17 = sld [smem:[%s16]]
  %s18 = scalar_lea.smem %s0, 9
  %s19 = sld [smem:[%s18]]
  %s20 = scalar_lea.smem %s0, 10
  %s21 = sld [smem:[%s20]]
  %s22 = scalar_lea.smem %s0, 11
  %s23 = sld [smem:[%s22]]
  %s24 = scalar_lea.smem %s0, 12
  %s25 = sld [smem:[%s24]]
  %s26 = scalar_lea.smem %s0, 13
  %s27 = sld [smem:[%s26]]
  %s28 = scalar_lea.smem %s0, 14
  %s29 = sld [smem:[%s28]]
  %s30 = scalar_lea.smem %s0, 15
  %s31 = sld [smem:[%s30]]
  %s32 = scalar_lea.smem %s0, 16
  %s33 = sld [smem:[%s32]]
  %s34 = scalar_lea.smem %s0, 17
  %s35 = sld [smem:[%s34]]
  %s36 = scalar_lea.smem %s0, 18
  %s37 = sld [smem:[%s36]]
  %s38 = scalar_lea.smem %s0, 19
  %s39 = sld [smem:[%s38]]
  %s40 = scalar_lea.smem %s0, 20
  %s41 = sld [smem:[%s40]]
  %s42 = scalar_lea.smem %s0, 21
  %s43 = sld [smem:[%s42]]
  %s44 = scalar_lea.smem %s0, 22
  %s45 = sld [smem:[%s44]]
  %s46 = scalar_lea.smem %s0, 23
  %s47 = sld [smem:[%s46]]
  %s48 = scalar_lea.smem %s0, 24
  %s49 = sld [smem:[%s48]]
  %s50 = scalar_lea.smem %s0, 25
  %s51 = sld [smem:[%s50]]
  %s52 = scalar_lea.smem %s0, 26
  %s53 = sld [smem:[%s52]]
  %s54 = scalar_lea.smem %s0, 27
  %s55 = sld [smem:[%s54]]
  %s56 = scalar_lea.smem %s0, 28
  %s57 = sld [smem:[%s56]]
  %s58 = scalar_lea.smem %s0, 29
  %s59 = sld [smem:[%s58]]
  %s60 = scalar_lea.smem %s0, 30
  %s61 = sld [smem:[%s60]]
  %s62 = sld [smem:[#allocation0]]
  $region130: #{mixconv_forward.1} parent=0
    _
  %s64 = ssub.s32 1, %s62
  %s65 = scalar_select 0, %s64, %s62
  // Predicated region
  $region2: #{mixconv_forward.1} parent=0 // pred_check
    _
  $region3: #{mixconv_forward.1} parent=0 // pred_check_branch
    %67 = sbr.rel (0) target = $region5
  $region4: #{mixconv_forward.1} parent=0 // pred_region
    _
  $region5: #{mixconv_forward.1} parent=0 // pred_fallthru
    _
  // Predicated region
  $region6: #{mixconv_forward.1} parent=0 // pred_check
    _
  $region7: #{mixconv_forward.1} parent=0 // pred_check_branch
    %69 = sbr.rel (0) target = $region9
  $region8: #{mixconv_forward.1} parent=0 // pred_region
    _
  $region9: #{mixconv_forward.1} parent=0 // pred_fallthru
    _
  // Predicated region
  $region10: #{mixconv_forward.1} parent=0 // pred_check
    _
  $region11: #{mixconv_forward.1} parent=0 // pred_check_branch
    %71 = sbr.rel (0) target = $region13
  $region12: #{mixconv_forward.1} parent=0 // pred_region
    _
  $region13: #{mixconv_forward.1} parent=0 // pred_fallthru
    _
  // Predicated region
  $region14: #{mixconv_forward.1} parent=0 // pred_check
    _
  $region15: #{mixconv_forward.1} parent=0 // pred_check_branch
    %73 = sbr.rel (0) target = $region17
  $region16: #{mixconv_forward.1} parent=0 // pred_region
    _
  $region17: #{mixconv_forward.1} parent=0 // pred_fallthru
    _
  // Predicated region
  $region18: #{mixconv_forward.1} parent=0 // pred_check
    _
  $region19: #{mixconv_forward.1} parent=0 // pred_check_branch
    %75 = sbr.rel (0) target = $region21
  $region20: #{mixconv_forward.1} parent=0 // pred_region
    _
  $region21: #{mixconv_forward.1} parent=0 // pred_fallthru
    _
  // Predicated region
  $region22: #{mixconv_forward.1} parent=0 // pred_check
    _
  $region23: #{mixconv_forward.1} parent=0 // pred_check_branch
    %77 = sbr.rel (0) target = $region25
  $region24: #{mixconv_forward.1} parent=0 // pred_region
    _
  $region25: #{mixconv_forward.1} parent=0 // pred_fallthru
    _
  // Predicated region
  $region26: #{mixconv_forward.1} parent=0 // pred_check
    _
  $region27: #{mixconv_forward.1} parent=0 // pred_check_branch
    %79 = sbr.rel (0) target = $region29
  $region28: #{mixconv_forward.1} parent=0 // pred_region
    _
  $region29: #{mixconv_forward.1} parent=0 // pred_fallthru
    _
  // Predicated region
  $region30: #{mixconv_forward.1} parent=0 // pred_check
    _
  $region31: #{mixconv_forward.1} parent=0 // pred_check_branch
    %81 = sbr.rel (0) target = $region33
  $region32: #{mixconv_forward.1} parent=0 // pred_region
    _
  $region33: #{mixconv_forward.1} parent=0 // pred_fallthru
    _
  // Predicated region
  $region34: #{mixconv_forward.1} parent=0 // pred_check
    _
  $region35: #{mixconv_forward.1} parent=0 // pred_check_branch
    %83 = sbr.rel (0) target = $region37
  $region36: #{mixconv_forward.1} parent=0 // pred_region
    _
  $region37: #{mixconv_forward.1} parent=0 // pred_fallthru
    _
  // Predicated region
  $region38: #{mixconv_forward.1} parent=0 // pred_check
    _
  $region39: #{mixconv_forward.1} parent=0 // pred_check_branch
    %85 = sbr.rel (0) target = $region41
  $region40: #{mixconv_forward.1} parent=0 // pred_region
    _
  $region41: #{mixconv_forward.1} parent=0 // pred_fallthru
    _
  // Predicated region
  $region42: #{mixconv_forward.1} parent=0 // pred_check
    _
  $region43: #{mixconv_forward.1} parent=0 // pred_check_branch
    %87 = sbr.rel (0) target = $region45
  $region44: #{mixconv_forward.1} parent=0 // pred_region
    _
  $region45: #{mixconv_forward.1} parent=0 // pred_fallthru
    _
  // Predicated region
  $region46: #{mixconv_forward.1} parent=0 // pred_check
    _
  $region47: #{mixconv_forward.1} parent=0 // pred_check_branch
    %89 = sbr.rel (0) target = $region49
  $region48: #{mixconv_forward.1} parent=0 // pred_region
    _
  $region49: #{mixconv_forward.1} parent=0 // pred_fallthru
    _
  // Predicated region
  $region50: #{mixconv_forward.1} parent=0 // pred_check
    _
  $region51: #{mixconv_forward.1} parent=0 // pred_check_branch
    %91 = sbr.rel (0) target = $region53
  $region52: #{mixconv_forward.1} parent=0 // pred_region
    _
  $region53: #{mixconv_forward.1} parent=0 // pred_fallthru
    _
  // Predicated region
  $region54: #{mixconv_forward.1} parent=0 // pred_check
    _
  $region55: #{mixconv_forward.1} parent=0 // pred_check_branch
    %93 = sbr.rel (0) target = $region57
  $region56: #{mixconv_forward.1} parent=0 // pred_region
    _
  $region57: #{mixconv_forward.1} parent=0 // pred_fallthru
    _
  // Predicated region
  $region58: #{mixconv_forward.1} parent=0 // pred_check
    _
  $region59: #{mixconv_forward.1} parent=0 // pred_check_branch
    %95 = sbr.rel (0) target = $region61
  $region60: #{mixconv_forward.1} parent=0 // pred_region
    _
  $region61: #{mixconv_forward.1} parent=0 // pred_fallthru
    _
  // Predicated region
  $region62: #{mixconv_forward.1} parent=0 // pred_check
    _
  $region63: #{mixconv_forward.1} parent=0 // pred_check_branch
    %97 = sbr.rel (0) target = $region65
  $region64: #{mixconv_forward.1} parent=0 // pred_region
    _
  $region65: #{mixconv_forward.1} parent=0 // pred_fallthru
    _
  // Predicated region
  $region66: #{mixconv_forward.1} parent=0 // pred_check
    _
  $region67: #{mixconv_forward.1} parent=0 // pred_check_branch
    %99 = sbr.rel (0) target = $region69
  $region68: #{mixconv_forward.1} parent=0 // pred_region
    _
  $region69: #{mixconv_forward.1} parent=0 // pred_fallthru
    _
  // Predicated region
  $region70: #{mixconv_forward.1} parent=0 // pred_check
    _
  $region71: #{mixconv_forward.1} parent=0 // pred_check_branch
    %101 = sbr.rel (0) target = $region73
  $region72: #{mixconv_forward.1} parent=0 // pred_region
    _
  $region73: #{mixconv_forward.1} parent=0 // pred_fallthru
    _
  // Predicated region
  $region74: #{mixconv_forward.1} parent=0 // pred_check
    _
  $region75: #{mixconv_forward.1} parent=0 // pred_check_branch
    %103 = sbr.rel (0) target = $region77
  $region76: #{mixconv_forward.1} parent=0 // pred_region
    _
  $region77: #{mixconv_forward.1} parent=0 // pred_fallthru
    _
  // Predicated region
  $region78: #{mixconv_forward.1} parent=0 // pred_check
    _
  $region79: #{mixconv_forward.1} parent=0 // pred_check_branch
    %105 = sbr.rel (0) target = $region81
  $region80: #{mixconv_forward.1} parent=0 // pred_region
    _
  $region81: #{mixconv_forward.1} parent=0 // pred_fallthru
    _
  // Predicated region
  $region82: #{mixconv_forward.1} parent=0 // pred_check
    _
  $region83: #{mixconv_forward.1} parent=0 // pred_check_branch
    %107 = sbr.rel (0) target = $region85
  $region84: #{mixconv_forward.1} parent=0 // pred_region
    _
  $region85: #{mixconv_forward.1} parent=0 // pred_fallthru
    _
  // Predicated region
  $region86: #{mixconv_forward.1} parent=0 // pred_check
    _
  $region87: #{mixconv_forward.1} parent=0 // pred_check_branch
    %109 = sbr.rel (0) target = $region89
  $region88: #{mixconv_forward.1} parent=0 // pred_region
    _
  $region89: #{mixconv_forward.1} parent=0 // pred_fallthru
    _
  // Predicated region
  $region90: #{mixconv_forward.1} parent=0 // pred_check
    _
  $region91: #{mixconv_forward.1} parent=0 // pred_check_branch
    %111 = sbr.rel (0) target = $region93
  $region92: #{mixconv_forward.1} parent=0 // pred_region
    _
  $region93: #{mixconv_forward.1} parent=0 // pred_fallthru
    _
  // Predicated region
  $region94: #{mixconv_forward.1} parent=0 // pred_check
    _
  $region95: #{mixconv_forward.1} parent=0 // pred_check_branch
    %113 = sbr.rel (0) target = $region97
  $region96: #{mixconv_forward.1} parent=0 // pred_region
    _
  $region97: #{mixconv_forward.1} parent=0 // pred_fallthru
    _
  // Predicated region
  $region98: #{mixconv_forward.1} parent=0 // pred_check
    _
  $region99: #{mixconv_forward.1} parent=0 // pred_check_branch
    %115 = sbr.rel (0) target = $region101
  $region100: #{mixconv_forward.1} parent=0 // pred_region
    _
  $region101: #{mixconv_forward.1} parent=0 // pred_fallthru
    _
  // Predicated region
  $region102: #{mixconv_forward.1} parent=0 // pred_check
    _
  $region103: #{mixconv_forward.1} parent=0 // pred_check_branch
    %117 = sbr.rel (0) target = $region105
  $region104: #{mixconv_forward.1} parent=0 // pred_region
    _
  $region105: #{mixconv_forward.1} parent=0 // pred_fallthru
    _
  // Predicated region
  $region106: #{mixconv_forward.1} parent=0 // pred_check
    _
  $region107: #{mixconv_forward.1} parent=0 // pred_check_branch
    %119 = sbr.rel (0) target = $region109
  $region108: #{mixconv_forward.1} parent=0 // pred_region
    _
  $region109: #{mixconv_forward.1} parent=0 // pred_fallthru
    _
  // Predicated region
  $region110: #{mixconv_forward.1} parent=0 // pred_check
    _
  $region111: #{mixconv_forward.1} parent=0 // pred_check_branch
    %121 = sbr.rel (0) target = $region113
  $region112: #{mixconv_forward.1} parent=0 // pred_region
    _
  $region113: #{mixconv_forward.1} parent=0 // pred_fallthru
    _
  // Predicated region
  $region114: #{mixconv_forward.1} parent=0 // pred_check
    _
  $region115: #{mixconv_forward.1} parent=0 // pred_check_branch
    %123 = sbr.rel (0) target = $region117
  $region116: #{mixconv_forward.1} parent=0 // pred_region
    _
  $region117: #{mixconv_forward.1} parent=0 // pred_fallthru
    _
  // Predicated region
  $region118: #{mixconv_forward.1} parent=0 // pred_check
    _
  $region119: #{mixconv_forward.1} parent=0 // pred_check_branch
    %125 = sbr.rel (0) target = $region121
  $region120: #{mixconv_forward.1} parent=0 // pred_region
    _
  $region121: #{mixconv_forward.1} parent=0 // pred_fallthru
    _
  %v127 = vlaneseq
  %v128 = vshrl.u32 %v127, 7
  %vm129 = vcmp.lt.s32.totalorder %v128, 4
  %v130 = vsel %vm129, 1, 0
  %v131 = vcvt.s32.f32 %v130
  %v132 = vld [vmem:[%s1] sm:$0xff]
  %v133 = vpack.c.bf16 %v132, %v132
  %v134 = vld [vmem:[%s7] sm:$0x3]
  %vm135 = vcmask 23552
  %v137 = vsel %vm135, %v133, 0
  %vm139 = vcmask 1040384
  %vm140 = vcmask 1041408
  %v141 = vsel %vm139, 4294967295, 65535
  %v142 = vsel %vm140, %v141, 0
  %v144 = vand.u32 %v134, %v142
  %146 = vmatprep.subr.bf16.mxu0 0
  %147 = vmatpush1.bf16.msra.mxu0 %v144
  %148 = vmatprep.subr.bf16.mxu0 0
  %149 = vmatpush1.bf16.msra.mxu0 0
  %150 = vmatprep.subr.bf16.mxu0 0
  %151 = vmatpush1.bf16.msra.mxu0 0
  %152 = vmatprep.subr.bf16.mxu0 0
  %153 = vmatpush1.bf16.msra.mxu0 0
  %154 = vmatprep.subr.bf16.mxu0 0
  %155 = vmatpush1.bf16.msra.mxu0 0
  %156 = vmatprep.subr.bf16.mxu0 0
  %157 = vmatpush1.bf16.msra.mxu0 0
  %158 = vmatprep.subr.bf16.mxu0 0
  %159 = vmatpush1.bf16.msra.mxu0 0
  %160 = vmatprep.subr.bf16.mxu0 0
  %161 = vmatpush1.bf16.msra.mxu0 0
  %162 = vmatprep.subr.bf16.mxu0 0
  %163 = vmatpush1.bf16.msra.mxu0 0
  %164 = vmatprep.subr.bf16.mxu0 0
  %165 = vmatpush1.bf16.msra.mxu0 0
  %166 = vmatprep.subr.bf16.mxu0 0
  %167 = vmatpush1.bf16.msra.mxu0 0
  %168 = vmatprep.subr.bf16.mxu0 0
  %169 = vmatpush1.bf16.msra.mxu0 0
  %170 = vmatprep.subr.bf16.mxu0 0
  %171 = vmatpush1.bf16.msra.mxu0 0
  %172 = vmatprep.subr.bf16.mxu0 0
  %173 = vmatpush1.bf16.msra.mxu0 0
  %174 = vmatprep.subr.bf16.mxu0 0
  %175 = vmatpush1.bf16.msra.mxu0 0
  %176 = vmatprep.subr.bf16.mxu0 0
  %177 = vmatpush1.bf16.msra.mxu0 0
  %178 = vmatprep.mubr.bf16.mxu0 0
  %179 = vmatmul.mubr.bf16.gmra.mrb[0].mxu0 %v137
  %v180 = vpop.f32.mrb[0].mxu0
  %v181 = vadd.f32 0.0, %v180
  %v182 = vpop.f32.mrb[0].mxu0
  %v183 = vpop.f32.mrb[0].mxu0
  %v184 = vpop.f32.mrb[0].mxu0
  %185 = vdwg.mxu0
  %v186 = vld [vmem:[%s9] sm:$0x3]
  %v188 = vand.u32 %v186, %v142
  %190 = vmatprep.subr.bf16.mxu0 0
  %191 = vmatpush1.bf16.msra.mxu0 %v188
  %192 = vmatprep.subr.bf16.mxu0 0
  %193 = vmatpush1.bf16.msra.mxu0 0
  %194 = vmatprep.subr.bf16.mxu0 0
  %195 = vmatpush1.bf16.msra.mxu0 0
  %196 = vmatprep.subr.bf16.mxu0 0
  %197 = vmatpush1.bf16.msra.mxu0 0
  %198 = vmatprep.subr.bf16.mxu0 0
  %199 = vmatpush1.bf16.msra.mxu0 0
  %200 = vmatprep.subr.bf16.mxu0 0
  %201 = vmatpush1.bf16.msra.mxu0 0
  %202 = vmatprep.subr.bf16.mxu0 0
  %203 = vmatpush1.bf16.msra.mxu0 0
  %204 = vmatprep.subr.bf16.mxu0 0
  %205 = vmatpush1.bf16.msra.mxu0 0
  %206 = vmatprep.subr.bf16.mxu0 0
  %207 = vmatpush1.bf16.msra.mxu0 0
  %208 = vmatprep.subr.bf16.mxu0 0
  %209 = vmatpush1.bf16.msra.mxu0 0
  %210 = vmatprep.subr.bf16.mxu0 0
  %211 = vmatpush1.bf16.msra.mxu0 0
  %212 = vmatprep.subr.bf16.mxu0 0
  %213 = vmatpush1.bf16.msra.mxu0 0
  %214 = vmatprep.subr.bf16.mxu0 0
  %215 = vmatpush1.bf16.msra.mxu0 0
  %216 = vmatprep.subr.bf16.mxu0 0
  %217 = vmatpush1.bf16.msra.mxu0 0
  %218 = vmatprep.subr.bf16.mxu0 0
  %219 = vmatpush1.bf16.msra.mxu0 0
  %220 = vmatprep.subr.bf16.mxu0 0
  %221 = vmatpush1.bf16.msra.mxu0 0
  %222 = vmatprep.mubr.bf16.mxu0 0
  %223 = vmatmul.mubr.bf16.gmra.mrb[0].mxu0 %v137
  %v224 = vpop.f32.mrb[0].mxu0
  %v225 = vadd.f32 0.0, %v224
  %v226 = vpop.f32.mrb[0].mxu0
  %v227 = vpop.f32.mrb[0].mxu0
  %v228 = vpop.f32.mrb[0].mxu0
  %229 = vdwg.mxu0
  %v231 = vcombine.high %v181, %v181
  %v233 = vunpack.c.l.s4 1966171168
  %v234 = vunpack.c.0.s8 %v233
  %v235 = vlaneseq
  %v236 = vshrl.u32 %v235, 7
  %v237 = vsub.s32 %v234, %v236
  %v238 = vrot.slane %v181, %v237
  %v240 = vunpack.c.l.s4 1966171168
  %v241 = vunpack.c.0.s8 %v240
  %v242 = vlaneseq
  %v243 = vshrl.u32 %v242, 7
  %v244 = vsub.s32 %v241, %v243
  %v245 = vrot.slane %v231, %v244
  %v246 = vcombine.high %v238, %v238
  %v247 = vcombine.high %v245, %v245
  %v249 = vunpack.c.l.s4 1966171168
  %v250 = vunpack.c.0.s8 %v249
  %v251 = vlaneseq
  %v252 = vshrl.u32 %v251, 7
  %v253 = vsub.s32 %v250, %v252
  %v254 = vrot.slane %v238, %v253
  %v256 = vunpack.c.l.s4 1966171168
  %v257 = vunpack.c.0.s8 %v256
  %v258 = vlaneseq
  %v259 = vshrl.u32 %v258, 7
  %v260 = vsub.s32 %v257, %v259
  %v261 = vrot.slane %v245, %v260
  %v263 = vunpack.c.l.s4 1966171168
  %v264 = vunpack.c.0.s8 %v263
  %v265 = vlaneseq
  %v266 = vshrl.u32 %v265, 7
  %v267 = vsub.s32 %v264, %v266
  %v268 = vrot.slane %v246, %v267
  %v270 = vunpack.c.l.s4 1966171168
  %v271 = vunpack.c.0.s8 %v270
  %v272 = vlaneseq
  %v273 = vshrl.u32 %v272, 7
  %v274 = vsub.s32 %v271, %v273
  %v275 = vrot.slane %v247, %v274
  %v276 = vcombine.high %v254, %v254
  %v277 = vcombine.high %v261, %v261
  %v278 = vcombine.high %v268, %v268
  %v279 = vcombine.high %v275, %v275
  %v280 = vlaneseq
  %v281 = vshrl.u32 %v280, 7
  %v282 = vsub.s32 0, %v281
  %v283 = vrot.slane %v254, %v282
  %v284 = vlaneseq
  %v285 = vshrl.u32 %v284, 7
  %v286 = vsub.s32 0, %v285
  %v287 = vrot.slane %v268, %v286
  %v288 = vlaneseq
  %v289 = vshrl.u32 %v288, 7
  %v290 = vsub.s32 0, %v289
  %v291 = vrot.slane %v276, %v290
  %v292 = vlaneseq
  %v293 = vshrl.u32 %v292, 7
  %v294 = vsub.s32 0, %v293
  %v295 = vrot.slane %v278, %v294
  %v296 = vlaneseq
  %v297 = vshrl.u32 %v296, 7
  %v298 = vsub.s32 0, %v297
  %v299 = vrot.slane %v261, %v298
  %v300 = vlaneseq
  %v301 = vshrl.u32 %v300, 7
  %v302 = vsub.s32 0, %v301
  %v303 = vrot.slane %v275, %v302
  %v304 = vlaneseq
  %v305 = vshrl.u32 %v304, 7
  %v306 = vsub.s32 0, %v305
  %v307 = vrot.slane %v277, %v306
  %v308 = vlaneseq
  %v309 = vshrl.u32 %v308, 7
  %v310 = vsub.s32 0, %v309
  %v311 = vrot.slane %v279, %v310
  %v320 = vadd.f32 %v283, %v225
  %v321 = vadd.f32 %v287, %v225
  %v322 = vadd.f32 %v291, %v225
  %v323 = vadd.f32 %v295, %v225
  %v324 = vadd.f32 %v299, %v225
  %v325 = vadd.f32 %v303, %v225
  %v326 = vadd.f32 %v307, %v225
  %v327 = vadd.f32 %v311, %v225
  %v328 = vld [vmem:[%s11] sm:$0x1]
  %v330 = vlaneseq
  %v331 = vshrl.u32 %v330, 7
  %v332 = vsub.s32 0, %v331
  %v333 = vrot.slane %v328, %v332
  %v335 = vadd.f32 %v320, %v333
  %v336 = vadd.f32 %v321, %v333
  %v337 = vadd.f32 %v322, %v333
  %v338 = vadd.f32 %v323, %v333
  %v339 = vadd.f32 %v324, %v333
  %v340 = vadd.f32 %v325, %v333
  %v341 = vadd.f32 %v326, %v333
  %v342 = vadd.f32 %v327, %v333
  %v343 = vmax.f32 %v335, 0.0
  %v344 = vmax.f32 %v336, 0.0
  %v345 = vmax.f32 %v337, 0.0
  %v346 = vmax.f32 %v338, 0.0
  %v347 = vmax.f32 %v339, 0.0
  %v348 = vmax.f32 %v340, 0.0
  %v349 = vmax.f32 %v341, 0.0
  %v350 = vmax.f32 %v342, 0.0
  %v351 = vpack.c.bf16 %v344, %v343
  %v352 = vpack.c.bf16 %v346, %v345
  %v353 = vpack.c.bf16 %v348, %v347
  %v354 = vpack.c.bf16 %v350, %v349
  %v355 = vld [vmem:[%s13] sm:$0xf]
  %v356 = vld [vmem:[%s13 + $0x4] sm:$0xf]
  %v357 = vld [vmem:[%s13 + $0x8] sm:$0xf]
  %v358 = vld [vmem:[%s13 + $0xc] sm:$0xf]
  %v359 = vld [vmem:[%s13 + $0x10] sm:$0xf]
  %v360 = vld [vmem:[%s13 + $0x14] sm:$0xf]
  %v361 = vld [vmem:[%s13 + $0x18] sm:$0xf]
  %v362 = vld [vmem:[%s13 + $0x1c] sm:$0xf]
  %v363 = vld [vmem:[%s15] sm:$0x1]
  %v365 = vlaneseq
  %v366 = vshrl.u32 %v365, 7
  %v367 = vsub.s32 0, %v366
  %v368 = vrot.slane %v363, %v367
  %v378 = vunpack.c.l.b16 %v355
  %v379 = vunpack.c.l.b16 %v356
  %v380 = vunpack.c.l.b16 %v357
  %v381 = vunpack.c.l.b16 %v358
  %v382 = vunpack.c.l.b16 %v359
  %v383 = vunpack.c.l.b16 %v360
  %v384 = vunpack.c.l.b16 %v361
  %v385 = vunpack.c.l.b16 %v362
  %v386 = vpack.c.b16 %v379, %v378
  %v387 = vpack.c.b16 %v381, %v380
  %v388 = vpack.c.b16 %v383, %v382
  %v389 = vpack.c.b16 %v385, %v384
  %vm394 = vcmask 523264
  %v396 = vsel %vm394, %v351, 0
  %v399 = vsel %vm394, %v352, 0
  %v402 = vsel %vm394, %v353, 0
  %v405 = vsel %vm394, %v354, 0
  %407 = vmatprep.subr.bf16.mxu0 0
  %408 = vmatpush1.bf16.msra.mxu0 %v386
  %409 = vmatprep.subr.bf16.mxu0 0
  %410 = vmatpush1.bf16.msra.mxu0 %v387
  %411 = vmatprep.subr.bf16.mxu0 0
  %412 = vmatpush1.bf16.msra.mxu0 %v388
  %413 = vmatprep.subr.bf16.mxu0 0
  %414 = vmatpush1.bf16.msra.mxu0 %v389
  %415 = vmatprep.subr.bf16.mxu0 0
  %416 = vmatpush1.bf16.msra.mxu0 0
  %417 = vmatprep.subr.bf16.mxu0 0
  %418 = vmatpush1.bf16.msra.mxu0 0
  %419 = vmatprep.subr.bf16.mxu0 0
  %420 = vmatpush1.bf16.msra.mxu0 0
  %421 = vmatprep.subr.bf16.mxu0 0
  %422 = vmatpush1.bf16.msra.mxu0 0
  %423 = vmatprep.subr.bf16.mxu0 0
  %424 = vmatpush1.bf16.msra.mxu0 0
  %425 = vmatprep.subr.bf16.mxu0 0
  %426 = vmatpush1.bf16.msra.mxu0 0
  %427 = vmatprep.subr.bf16.mxu0 0
  %428 = vmatpush1.bf16.msra.mxu0 0
  %429 = vmatprep.subr.bf16.mxu0 0
  %430 = vmatpush1.bf16.msra.mxu0 0
  %431 = vmatprep.subr.bf16.mxu0 0
  %432 = vmatpush1.bf16.msra.mxu0 0
  %433 = vmatprep.subr.bf16.mxu0 0
  %434 = vmatpush1.bf16.msra.mxu0 0
  %435 = vmatprep.subr.bf16.mxu0 0
  %436 = vmatpush1.bf16.msra.mxu0 0
  %437 = vmatprep.subr.bf16.mxu0 0
  %438 = vmatpush1.bf16.msra.mxu0 0
  %439 = vmatprep.mubr.bf16.mxu0 0
  %440 = vmatmul.mubr.bf16.gmra.mrb[0].mxu0 %v396
  %v441 = vpop.f32.mrb[0].mxu0
  %v442 = vadd.f32 %v368, %v441
  %v443 = vpop.f32.mrb[0].mxu0
  %v444 = vpop.f32.mrb[0].mxu0
  %v445 = vadd.f32 %v368, %v444
  %v446 = vpop.f32.mrb[0].mxu0
  %447 = vmatprep.mubr.bf16.mxu0 0
  %448 = vmatmul.mubr.bf16.gmra.mrb[0].mxu0 %v399
  %v449 = vpop.f32.mrb[0].mxu0
  %v450 = vadd.f32 %v368, %v449
  %v451 = vpop.f32.mrb[0].mxu0
  %v452 = vpop.f32.mrb[0].mxu0
  %v453 = vadd.f32 %v368, %v452
  %v454 = vpop.f32.mrb[0].mxu0
  %455 = vmatprep.mubr.bf16.mxu0 0
  %456 = vmatmul.mubr.bf16.gmra.mrb[0].mxu0 %v402
  %v457 = vpop.f32.mrb[0].mxu0
  %v458 = vadd.f32 %v368, %v457
  %v459 = vpop.f32.mrb[0].mxu0
  %v460 = vpop.f32.mrb[0].mxu0
  %v461 = vadd.f32 %v368, %v460
  %v462 = vpop.f32.mrb[0].mxu0
  %463 = vmatprep.mubr.bf16.mxu0 0
  %464 = vmatmul.mubr.bf16.gmra.mrb[0].mxu0 %v405
  %v465 = vpop.f32.mrb[0].mxu0
  %v466 = vadd.f32 %v368, %v465
  %v467 = vpop.f32.mrb[0].mxu0
  %v468 = vpop.f32.mrb[0].mxu0
  %v469 = vadd.f32 %v368, %v468
  %v470 = vpop.f32.mrb[0].mxu0
  %471 = vdwg.mxu0
  %v472 = vmax.f32 %v442, 0.0
  %v473 = vmax.f32 %v445, 0.0
  %v474 = vmax.f32 %v450, 0.0
  %v475 = vmax.f32 %v453, 0.0
  %v476 = vmax.f32 %v458, 0.0
  %v477 = vmax.f32 %v461, 0.0
  %v478 = vmax.f32 %v466, 0.0
  %v479 = vmax.f32 %v469, 0.0
  %v480 = vpack.c.bf16 %v473, %v472
  %v481 = vpack.c.bf16 %v475, %v474
  %v482 = vpack.c.bf16 %v477, %v476
  %v483 = vpack.c.bf16 %v479, %v478
  %v484 = vld [vmem:[%s17] sm:$0xf]
  %v485 = vld [vmem:[%s17 + $0x4] sm:$0xf]
  %v486 = vld [vmem:[%s17 + $0x8] sm:$0xf]
  %v487 = vld [vmem:[%s17 + $0xc] sm:$0xf]
  %v488 = vld [vmem:[%s17 + $0x10] sm:$0xf]
  %v489 = vld [vmem:[%s17 + $0x14] sm:$0xf]
  %v490 = vld [vmem:[%s17 + $0x18] sm:$0xf]
  %v491 = vld [vmem:[%s17 + $0x1c] sm:$0xf]
  %v492 = vld [vmem:[%s19] sm:$0x1]
  %v494 = vlaneseq
  %v495 = vshrl.u32 %v494, 7
  %v496 = vsub.s32 0, %v495
  %v497 = vrot.slane %v492, %v496
  %v507 = vunpack.c.l.b16 %v484
  %v508 = vunpack.c.l.b16 %v485
  %v509 = vunpack.c.l.b16 %v486
  %v510 = vunpack.c.l.b16 %v487
  %v511 = vunpack.c.l.b16 %v488
  %v512 = vunpack.c.l.b16 %v489
  %v513 = vunpack.c.l.b16 %v490
  %v514 = vunpack.c.l.b16 %v491
  %v515 = vpack.c.b16 %v508, %v507
  %v516 = vpack.c.b16 %v510, %v509
  %v517 = vpack.c.b16 %v512, %v511
  %v518 = vpack.c.b16 %v514, %v513
  %v524 = vsel %vm394, %v480, 0
  %v527 = vsel %vm394, %v481, 0
  %v530 = vsel %vm394, %v482, 0
  %v533 = vsel %vm394, %v483, 0
  %535 = vmatprep.subr.bf16.mxu0 0
  %536 = vmatpush1.bf16.msra.mxu0 %v515
  %537 = vmatprep.subr.bf16.mxu0 0
  %538 = vmatpush1.bf16.msra.mxu0 %v516
  %539 = vmatprep.subr.bf16.mxu0 0
  %540 = vmatpush1.bf16.msra.mxu0 %v517
  %541 = vmatprep.subr.bf16.mxu0 0
  %542 = vmatpush1.bf16.msra.mxu0 %v518
  %543 = vmatprep.subr.bf16.mxu0 0
  %544 = vmatpush1.bf16.msra.mxu0 0
  %545 = vmatprep.subr.bf16.mxu0 0
  %546 = vmatpush1.bf16.msra.mxu0 0
  %547 = vmatprep.subr.bf16.mxu0 0
  %548 = vmatpush1.bf16.msra.mxu0 0
  %549 = vmatprep.subr.bf16.mxu0 0
  %550 = vmatpush1.bf16.msra.mxu0 0
  %551 = vmatprep.subr.bf16.mxu0 0
  %552 = vmatpush1.bf16.msra.mxu0 0
  %553 = vmatprep.subr.bf16.mxu0 0
  %554 = vmatpush1.bf16.msra.mxu0 0
  %555 = vmatprep.subr.bf16.mxu0 0
  %556 = vmatpush1.bf16.msra.mxu0 0
  %557 = vmatprep.subr.bf16.mxu0 0
  %558 = vmatpush1.bf16.msra.mxu0 0
  %559 = vmatprep.subr.bf16.mxu0 0
  %560 = vmatpush1.bf16.msra.mxu0 0
  %561 = vmatprep.subr.bf16.mxu0 0
  %562 = vmatpush1.bf16.msra.mxu0 0
  %563 = vmatprep.subr.bf16.mxu0 0
  %564 = vmatpush1.bf16.msra.mxu0 0
  %565 = vmatprep.subr.bf16.mxu0 0
  %566 = vmatpush1.bf16.msra.mxu0 0
  %567 = vmatprep.mubr.bf16.mxu0 0
  %568 = vmatmul.mubr.bf16.gmra.mrb[0].mxu0 %v524
  %v569 = vpop.f32.mrb[0].mxu0
  %v570 = vadd.f32 %v497, %v569
  %v571 = vpop.f32.mrb[0].mxu0
  %v572 = vpop.f32.mrb[0].mxu0
  %v573 = vadd.f32 %v497, %v572
  %v574 = vpop.f32.mrb[0].mxu0
  %575 = vmatprep.mubr.bf16.mxu0 0
  %576 = vmatmul.mubr.bf16.gmra.mrb[0].mxu0 %v527
  %v577 = vpop.f32.mrb[0].mxu0
  %v578 = vadd.f32 %v497, %v577
  %v579 = vpop.f32.mrb[0].mxu0
  %v580 = vpop.f32.mrb[0].mxu0
  %v581 = vadd.f32 %v497, %v580
  %v582 = vpop.f32.mrb[0].mxu0
  %583 = vmatprep.mubr.bf16.mxu0 0
  %584 = vmatmul.mubr.bf16.gmra.mrb[0].mxu0 %v530
  %v585 = vpop.f32.mrb[0].mxu0
  %v586 = vadd.f32 %v497, %v585
  %v587 = vpop.f32.mrb[0].mxu0
  %v588 = vpop.f32.mrb[0].mxu0
  %v589 = vadd.f32 %v497, %v588
  %v590 = vpop.f32.mrb[0].mxu0
  %591 = vmatprep.mubr.bf16.mxu0 0
  %592 = vmatmul.mubr.bf16.gmra.mrb[0].mxu0 %v533
  %v593 = vpop.f32.mrb[0].mxu0
  %v594 = vadd.f32 %v497, %v593
  %v595 = vpop.f32.mrb[0].mxu0
  %v596 = vpop.f32.mrb[0].mxu0
  %v597 = vadd.f32 %v497, %v596
  %v598 = vpop.f32.mrb[0].mxu0
  %599 = vdwg.mxu0
  %v600 = vmax.f32 %v570, 0.0
  %v601 = vmax.f32 %v573, 0.0
  %v602 = vmax.f32 %v578, 0.0
  %v603 = vmax.f32 %v581, 0.0
  %v604 = vmax.f32 %v586, 0.0
  %v605 = vmax.f32 %v589, 0.0
  %v606 = vmax.f32 %v594, 0.0
  %v607 = vmax.f32 %v597, 0.0
  %v608 = vmul.f32 %v600, %v131
  %v609 = vmul.f32 %v601, %v131
  %v610 = vmul.f32 %v602, %v131
  %v611 = vmul.f32 %v603, %v131
  %v612 = vmul.f32 %v604, %v131
  %v613 = vmul.f32 %v605, %v131
  %v614 = vmul.f32 %v606, %v131
  %v615 = vmul.f32 %v607, %v131
  %v616 = vsel %vm394, %v608, -inf
  %v617 = vrot.slane %v616, 4
  %v618 = vmax.f32 %v616, %v617
  %v619 = vrot.slane %v618, 2
  %v620 = vmax.f32 %v618, %v619
  %v621 = vrot.slane %v620, 1
  %v622 = vmax.f32 %v620, %v621
  %v623 = vsel %vm394, %v609, -inf
  %v624 = vrot.slane %v623, 4
  %v625 = vmax.f32 %v623, %v624
  %v626 = vrot.slane %v625, 2
  %v627 = vmax.f32 %v625, %v626
  %v628 = vrot.slane %v627, 1
  %v629 = vmax.f32 %v627, %v628
  %v630 = vsel %vm394, %v610, -inf
  %v631 = vrot.slane %v630, 4
  %v632 = vmax.f32 %v630, %v631
  %v633 = vrot.slane %v632, 2
  %v634 = vmax.f32 %v632, %v633
  %v635 = vrot.slane %v634, 1
  %v636 = vmax.f32 %v634, %v635
  %v637 = vsel %vm394, %v611, -inf
  %v638 = vrot.slane %v637, 4
  %v639 = vmax.f32 %v637, %v638
  %v640 = vrot.slane %v639, 2
  %v641 = vmax.f32 %v639, %v640
  %v642 = vrot.slane %v641, 1
  %v643 = vmax.f32 %v641, %v642
  %v644 = vsel %vm394, %v612, -inf
  %v645 = vrot.slane %v644, 4
  %v646 = vmax.f32 %v644, %v645
  %v647 = vrot.slane %v646, 2
  %v648 = vmax.f32 %v646, %v647
  %v649 = vrot.slane %v648, 1
  %v650 = vmax.f32 %v648, %v649
  %v651 = vsel %vm394, %v613, -inf
  %v652 = vrot.slane %v651, 4
  %v653 = vmax.f32 %v651, %v652
  %v654 = vrot.slane %v653, 2
  %v655 = vmax.f32 %v653, %v654
  %v656 = vrot.slane %v655, 1
  %v657 = vmax.f32 %v655, %v656
  %v658 = vsel %vm394, %v614, -inf
  %v659 = vrot.slane %v658, 4
  %v660 = vmax.f32 %v658, %v659
  %v661 = vrot.slane %v660, 2
  %v662 = vmax.f32 %v660, %v661
  %v663 = vrot.slane %v662, 1
  %v664 = vmax.f32 %v662, %v663
  %v665 = vsel %vm394, %v615, -inf
  %v666 = vrot.slane %v665, 4
  %v667 = vmax.f32 %v665, %v666
  %v668 = vrot.slane %v667, 2
  %v669 = vmax.f32 %v667, %v668
  %v670 = vrot.slane %v669, 1
  %v671 = vmax.f32 %v669, %v670
  %v672 = vpack.c.bf16 %v622, %v622
  %v673 = vpack.c.bf16 %v629, %v629
  %v674 = vpack.c.bf16 %v636, %v636
  %v675 = vpack.c.bf16 %v643, %v643
  %v676 = vpack.c.bf16 %v650, %v650
  %v677 = vpack.c.bf16 %v657, %v657
  %v678 = vpack.c.bf16 %v664, %v664
  %v679 = vpack.c.bf16 %v671, %v671
  %v680 = vld [vmem:[%s21] sm:$0xf]
  %v681 = vld [vmem:[%s21 + $0x4] sm:$0xf]
  %v682 = vld [vmem:[%s21 + $0x8] sm:$0xf]
  %v683 = vld [vmem:[%s21 + $0xc] sm:$0xf]
  %v684 = vld [vmem:[%s21 + $0x10] sm:$0xf]
  %v685 = vld [vmem:[%s21 + $0x14] sm:$0xf]
  %v686 = vld [vmem:[%s21 + $0x18] sm:$0xf]
  %v687 = vld [vmem:[%s21 + $0x1c] sm:$0xf]
  %v696 = vunpack.c.l.b16 %v672
  %v697 = vunpack.c.l.b16 %v673
  %v698 = vunpack.c.l.b16 %v674
  %v699 = vunpack.c.l.b16 %v675
  %v700 = vunpack.c.l.b16 %v676
  %v701 = vunpack.c.l.b16 %v677
  %v702 = vunpack.c.l.b16 %v678
  %v703 = vunpack.c.l.b16 %v679
  %vm704 = vcmask 1041409
  %v705 = vsel %vm704, %v697, %v696
  %vm706 = vcmask 1042434
  %v707 = vsel %vm706, %v698, %v705
  %vm708 = vcmask 1043459
  %v709 = vsel %vm708, %v699, %v707
  %vm710 = vcmask 1044484
  %v711 = vsel %vm710, %v700, %v709
  %vm712 = vcmask 1045509
  %v713 = vsel %vm712, %v701, %v711
  %vm714 = vcmask 1046534
  %v715 = vsel %vm714, %v702, %v713
  %vm716 = vcmask 1047559
  %v717 = vsel %vm716, %v703, %v715
  %v718 = vpack.c.b16 %v717, %v717
  %v727 = vunpack.c.l.b16 %v680
  %v728 = vunpack.c.l.b16 %v681
  %v729 = vunpack.c.l.b16 %v682
  %v730 = vunpack.c.l.b16 %v683
  %v731 = vunpack.c.l.b16 %v684
  %v732 = vunpack.c.l.b16 %v685
  %v733 = vunpack.c.l.b16 %v686
  %v734 = vunpack.c.l.b16 %v687
  %v735 = vpack.c.b16 %v728, %v727
  %v736 = vpack.c.b16 %v730, %v729
  %v737 = vpack.c.b16 %v732, %v731
  %v738 = vpack.c.b16 %v734, %v733
  %v744 = vsel %vm394, %v718, 0
  %746 = vmatprep.subr.bf16.mxu0 0
  %747 = vmatpush1.bf16.msra.mxu0 %v735
  %748 = vmatprep.subr.bf16.mxu0 0
  %749 = vmatpush1.bf16.msra.mxu0 %v736
  %750 = vmatprep.subr.bf16.mxu0 0
  %751 = vmatpush1.bf16.msra.mxu0 %v737
  %752 = vmatprep.subr.bf16.mxu0 0
  %753 = vmatpush1.bf16.msra.mxu0 %v738
  %754 = vmatprep.subr.bf16.mxu0 0
  %755 = vmatpush1.bf16.msra.mxu0 0
  %756 = vmatprep.subr.bf16.mxu0 0
  %757 = vmatpush1.bf16.msra.mxu0 0
  %758 = vmatprep.subr.bf16.mxu0 0
  %759 = vmatpush1.bf16.msra.mxu0 0
  %760 = vmatprep.subr.bf16.mxu0 0
  %761 = vmatpush1.bf16.msra.mxu0 0
  %762 = vmatprep.subr.bf16.mxu0 0
  %763 = vmatpush1.bf16.msra.mxu0 0
  %764 = vmatprep.subr.bf16.mxu0 0
  %765 = vmatpush1.bf16.msra.mxu0 0
  %766 = vmatprep.subr.bf16.mxu0 0
  %767 = vmatpush1.bf16.msra.mxu0 0
  %768 = vmatprep.subr.bf16.mxu0 0
  %769 = vmatpush1.bf16.msra.mxu0 0
  %770 = vmatprep.subr.bf16.mxu0 0
  %771 = vmatpush1.bf16.msra.mxu0 0
  %772 = vmatprep.subr.bf16.mxu0 0
  %773 = vmatpush1.bf16.msra.mxu0 0
  %774 = vmatprep.subr.bf16.mxu0 0
  %775 = vmatpush1.bf16.msra.mxu0 0
  %776 = vmatprep.subr.bf16.mxu0 0
  %777 = vmatpush1.bf16.msra.mxu0 0
  %778 = vmatprep.mubr.bf16.mxu0 0
  %779 = vmatmul.mubr.bf16.gmra.mrb[0].mxu0 %v744
  %v780 = vpop.f32.mrb[0].mxu0
  %v781 = vadd.f32 0.0, %v780
  %v782 = vpop.f32.mrb[0].mxu0
  %v783 = vpop.f32.mrb[0].mxu0
  %v784 = vpop.f32.mrb[0].mxu0
  %785 = vdwg.mxu0
  %v786 = vld [vmem:[%s23] sm:$0xf]
  %v787 = vld [vmem:[%s23 + $0x4] sm:$0xf]
  %v788 = vld [vmem:[%s23 + $0x8] sm:$0xf]
  %v789 = vld [vmem:[%s23 + $0xc] sm:$0xf]
  %v790 = vld [vmem:[%s23 + $0x10] sm:$0xf]
  %v791 = vld [vmem:[%s23 + $0x14] sm:$0xf]
  %v792 = vld [vmem:[%s23 + $0x18] sm:$0xf]
  %v793 = vld [vmem:[%s23 + $0x1c] sm:$0xf]
  %v802 = vunpack.c.l.b16 %v786
  %v803 = vunpack.c.l.b16 %v787
  %v804 = vunpack.c.l.b16 %v788
  %v805 = vunpack.c.l.b16 %v789
  %v806 = vunpack.c.l.b16 %v790
  %v807 = vunpack.c.l.b16 %v791
  %v808 = vunpack.c.l.b16 %v792
  %v809 = vunpack.c.l.b16 %v793
  %v810 = vpack.c.b16 %v803, %v802
  %v811 = vpack.c.b16 %v805, %v804
  %v812 = vpack.c.b16 %v807, %v806
  %v813 = vpack.c.b16 %v809, %v808
  %818 = vmatprep.subr.bf16.mxu0 0
  %819 = vmatpush1.bf16.msra.mxu0 %v810
  %820 = vmatprep.subr.bf16.mxu0 0
  %821 = vmatpush1.bf16.msra.mxu0 %v811
  %822 = vmatprep.subr.bf16.mxu0 0
  %823 = vmatpush1.bf16.msra.mxu0 %v812
  %824 = vmatprep.subr.bf16.mxu0 0
  %825 = vmatpush1.bf16.msra.mxu0 %v813
  %826 = vmatprep.subr.bf16.mxu0 0
  %827 = vmatpush1.bf16.msra.mxu0 0
  %828 = vmatprep.subr.bf16.mxu0 0
  %829 = vmatpush1.bf16.msra.mxu0 0
  %830 = vmatprep.subr.bf16.mxu0 0
  %831 = vmatpush1.bf16.msra.mxu0 0
  %832 = vmatprep.subr.bf16.mxu0 0
  %833 = vmatpush1.bf16.msra.mxu0 0
  %834 = vmatprep.subr.bf16.mxu0 0
  %835 = vmatpush1.bf16.msra.mxu0 0
  %836 = vmatprep.subr.bf16.mxu0 0
  %837 = vmatpush1.bf16.msra.mxu0 0
  %838 = vmatprep.subr.bf16.mxu0 0
  %839 = vmatpush1.bf16.msra.mxu0 0
  %840 = vmatprep.subr.bf16.mxu0 0
  %841 = vmatpush1.bf16.msra.mxu0 0
  %842 = vmatprep.subr.bf16.mxu0 0
  %843 = vmatpush1.bf16.msra.mxu0 0
  %844 = vmatprep.subr.bf16.mxu0 0
  %845 = vmatpush1.bf16.msra.mxu0 0
  %846 = vmatprep.subr.bf16.mxu0 0
  %847 = vmatpush1.bf16.msra.mxu0 0
  %848 = vmatprep.subr.bf16.mxu0 0
  %849 = vmatpush1.bf16.msra.mxu0 0
  %850 = vmatprep.mubr.bf16.mxu0 0
  %851 = vmatmul.mubr.bf16.gmra.mrb[0].mxu0 %v744
  %v852 = vpop.f32.mrb[0].mxu0
  %v853 = vadd.f32 0.0, %v852
  %v854 = vpop.f32.mrb[0].mxu0
  %v855 = vpop.f32.mrb[0].mxu0
  %v856 = vpop.f32.mrb[0].mxu0
  %857 = vdwg.mxu0
  %v859 = vcombine.high %v781, %v781
  %v861 = vunpack.c.l.s4 1966171168
  %v862 = vunpack.c.0.s8 %v861
  %v863 = vlaneseq
  %v864 = vshrl.u32 %v863, 7
  %v865 = vsub.s32 %v862, %v864
  %v866 = vrot.slane %v781, %v865
  %v868 = vunpack.c.l.s4 1966171168
  %v869 = vunpack.c.0.s8 %v868
  %v870 = vlaneseq
  %v871 = vshrl.u32 %v870, 7
  %v872 = vsub.s32 %v869, %v871
  %v873 = vrot.slane %v859, %v872
  %v874 = vcombine.high %v866, %v866
  %v875 = vcombine.high %v873, %v873
  %v877 = vunpack.c.l.s4 1966171168
  %v878 = vunpack.c.0.s8 %v877
  %v879 = vlaneseq
  %v880 = vshrl.u32 %v879, 7
  %v881 = vsub.s32 %v878, %v880
  %v882 = vrot.slane %v866, %v881
  %v884 = vunpack.c.l.s4 1966171168
  %v885 = vunpack.c.0.s8 %v884
  %v886 = vlaneseq
  %v887 = vshrl.u32 %v886, 7
  %v888 = vsub.s32 %v885, %v887
  %v889 = vrot.slane %v873, %v888
  %v891 = vunpack.c.l.s4 1966171168
  %v892 = vunpack.c.0.s8 %v891
  %v893 = vlaneseq
  %v894 = vshrl.u32 %v893, 7
  %v895 = vsub.s32 %v892, %v894
  %v896 = vrot.slane %v874, %v895
  %v898 = vunpack.c.l.s4 1966171168
  %v899 = vunpack.c.0.s8 %v898
  %v900 = vlaneseq
  %v901 = vshrl.u32 %v900, 7
  %v902 = vsub.s32 %v899, %v901
  %v903 = vrot.slane %v875, %v902
  %v904 = vcombine.high %v882, %v882
  %v905 = vcombine.high %v889, %v889
  %v906 = vcombine.high %v896, %v896
  %v907 = vcombine.high %v903, %v903
  %v908 = vlaneseq
  %v909 = vshrl.u32 %v908, 7
  %v910 = vsub.s32 0, %v909
  %v911 = vrot.slane %v882, %v910
  %v912 = vlaneseq
  %v913 = vshrl.u32 %v912, 7
  %v914 = vsub.s32 0, %v913
  %v915 = vrot.slane %v896, %v914
  %v916 = vlaneseq
  %v917 = vshrl.u32 %v916, 7
  %v918 = vsub.s32 0, %v917
  %v919 = vrot.slane %v904, %v918
  %v920 = vlaneseq
  %v921 = vshrl.u32 %v920, 7
  %v922 = vsub.s32 0, %v921
  %v923 = vrot.slane %v906, %v922
  %v924 = vlaneseq
  %v925 = vshrl.u32 %v924, 7
  %v926 = vsub.s32 0, %v925
  %v927 = vrot.slane %v889, %v926
  %v928 = vlaneseq
  %v929 = vshrl.u32 %v928, 7
  %v930 = vsub.s32 0, %v929
  %v931 = vrot.slane %v903, %v930
  %v932 = vlaneseq
  %v933 = vshrl.u32 %v932, 7
  %v934 = vsub.s32 0, %v933
  %v935 = vrot.slane %v905, %v934
  %v936 = vlaneseq
  %v937 = vshrl.u32 %v936, 7
  %v938 = vsub.s32 0, %v937
  %v939 = vrot.slane %v907, %v938
  %v948 = vadd.f32 %v911, %v853
  %v949 = vadd.f32 %v915, %v853
  %v950 = vadd.f32 %v919, %v853
  %v951 = vadd.f32 %v923, %v853
  %v952 = vadd.f32 %v927, %v853
  %v953 = vadd.f32 %v931, %v853
  %v954 = vadd.f32 %v935, %v853
  %v955 = vadd.f32 %v939, %v853
  %v956 = vld [vmem:[%s25] sm:$0x1]
  %v958 = vlaneseq
  %v959 = vshrl.u32 %v958, 7
  %v960 = vsub.s32 0, %v959
  %v961 = vrot.slane %v956, %v960
  %v963 = vadd.f32 %v948, %v961
  %v964 = vadd.f32 %v949, %v961
  %v965 = vadd.f32 %v950, %v961
  %v966 = vadd.f32 %v951, %v961
  %v967 = vadd.f32 %v952, %v961
  %v968 = vadd.f32 %v953, %v961
  %v969 = vadd.f32 %v954, %v961
  %v970 = vadd.f32 %v955, %v961
  %v971 = vmax.f32 %v963, 0.0
  %v972 = vmax.f32 %v964, 0.0
  %v973 = vmax.f32 %v965, 0.0
  %v974 = vmax.f32 %v966, 0.0
  %v975 = vmax.f32 %v967, 0.0
  %v976 = vmax.f32 %v968, 0.0
  %v977 = vmax.f32 %v969, 0.0
  %v978 = vmax.f32 %v970, 0.0
  %v979 = vmul.f32 %v971, %v131
  %v980 = vmul.f32 %v972, %v131
  %v981 = vmul.f32 %v973, %v131
  %v982 = vmul.f32 %v974, %v131
  %v983 = vmul.f32 %v975, %v131
  %v984 = vmul.f32 %v976, %v131
  %v985 = vmul.f32 %v977, %v131
  %v986 = vmul.f32 %v978, %v131
  %v987 = vrot.slane %v979, 4
  %v988 = vmax.f32 %v979, %v987
  %v989 = vrot.slane %v988, 2
  %v990 = vmax.f32 %v988, %v989
  %v991 = vrot.slane %v990, 1
  %v992 = vmax.f32 %v990, %v991
  %v993 = vrot.slane %v980, 4
  %v994 = vmax.f32 %v980, %v993
  %v995 = vrot.slane %v994, 2
  %v996 = vmax.f32 %v994, %v995
  %v997 = vrot.slane %v996, 1
  %v998 = vmax.f32 %v996, %v997
  %v999 = vrot.slane %v981, 4
  %v1000 = vmax.f32 %v981, %v999
  %v1001 = vrot.slane %v1000, 2
  %v1002 = vmax.f32 %v1000, %v1001
  %v1003 = vrot.slane %v1002, 1
  %v1004 = vmax.f32 %v1002, %v1003
  %v1005 = vrot.slane %v982, 4
  %v1006 = vmax.f32 %v982, %v1005
  %v1007 = vrot.slane %v1006, 2
  %v1008 = vmax.f32 %v1006, %v1007
  %v1009 = vrot.slane %v1008, 1
  %v1010 = vmax.f32 %v1008, %v1009
  %v1011 = vrot.slane %v983, 4
  %v1012 = vmax.f32 %v983, %v1011
  %v1013 = vrot.slane %v1012, 2
  %v1014 = vmax.f32 %v1012, %v1013
  %v1015 = vrot.slane %v1014, 1
  %v1016 = vmax.f32 %v1014, %v1015
  %v1017 = vrot.slane %v984, 4
  %v1018 = vmax.f32 %v984, %v1017
  %v1019 = vrot.slane %v1018, 2
  %v1020 = vmax.f32 %v1018, %v1019
  %v1021 = vrot.slane %v1020, 1
  %v1022 = vmax.f32 %v1020, %v1021
  %v1023 = vrot.slane %v985, 4
  %v1024 = vmax.f32 %v985, %v1023
  %v1025 = vrot.slane %v1024, 2
  %v1026 = vmax.f32 %v1024, %v1025
  %v1027 = vrot.slane %v1026, 1
  %v1028 = vmax.f32 %v1026, %v1027
  %v1029 = vrot.slane %v986, 4
  %v1030 = vmax.f32 %v986, %v1029
  %v1031 = vrot.slane %v1030, 2
  %v1032 = vmax.f32 %v1030, %v1031
  %v1033 = vrot.slane %v1032, 1
  %v1034 = vmax.f32 %v1032, %v1033
  %v1035 = vld [vmem:[%s27] sm:$0xff]
  %v1036 = vld [vmem:[%s27 + $0x8] sm:$0xff]
  %v1037 = vld [vmem:[%s27 + $0x10] sm:$0xff]
  %v1038 = vld [vmem:[%s27 + $0x18] sm:$0xff]
  %v1039 = vld [vmem:[%s27 + $0x20] sm:$0xff]
  %v1040 = vld [vmem:[%s27 + $0x28] sm:$0xff]
  %v1041 = vld [vmem:[%s27 + $0x30] sm:$0xff]
  %v1042 = vld [vmem:[%s27 + $0x38] sm:$0xff]
  %v1043 = vld [vmem:[%s27 + $0x40] sm:$0xff]
  %v1044 = vld [vmem:[%s27 + $0x48] sm:$0xff]
  %v1045 = vld [vmem:[%s27 + $0x50] sm:$0xff]
  %v1046 = vld [vmem:[%s27 + $0x58] sm:$0xff]
  %v1047 = vld [vmem:[%s27 + $0x60] sm:$0xff]
  %v1048 = vld [vmem:[%s27 + $0x68] sm:$0xff]
  %v1049 = vld [vmem:[%s27 + $0x70] sm:$0xff]
  %v1050 = vld [vmem:[%s27 + $0x78] sm:$0xff]
  %v1051 = vpack.c.bf16 %v992, %v992
  %v1052 = vpack.c.bf16 %v998, %v998
  %v1053 = vpack.c.bf16 %v1004, %v1004
  %v1054 = vpack.c.bf16 %v1010, %v1010
  %v1055 = vpack.c.bf16 %v1016, %v1016
  %v1056 = vpack.c.bf16 %v1022, %v1022
  %v1057 = vpack.c.bf16 %v1028, %v1028
  %v1058 = vpack.c.bf16 %v1034, %v1034
  %v1059 = vld [vmem:[%s29] sm:$0xff]
  %v1060 = vld [vmem:[%s29 + $0x8] sm:$0xff]
  %v1061 = vld [vmem:[%s29 + $0x10] sm:$0xff]
  %v1062 = vld [vmem:[%s29 + $0x18] sm:$0xff]
  %v1063 = vld [vmem:[%s29 + $0x20] sm:$0xff]
  %v1064 = vld [vmem:[%s29 + $0x28] sm:$0xff]
  %v1065 = vld [vmem:[%s29 + $0x30] sm:$0xff]
  %v1066 = vld [vmem:[%s29 + $0x38] sm:$0xff]
  %v1067 = vld [vmem:[%s29 + $0x40] sm:$0xff]
  %v1068 = vld [vmem:[%s29 + $0x48] sm:$0xff]
  %v1069 = vld [vmem:[%s29 + $0x50] sm:$0xff]
  %v1070 = vld [vmem:[%s29 + $0x58] sm:$0xff]
  %v1071 = vld [vmem:[%s29 + $0x60] sm:$0xff]
  %v1072 = vld [vmem:[%s29 + $0x68] sm:$0xff]
  %v1073 = vld [vmem:[%s29 + $0x70] sm:$0xff]
  %v1074 = vld [vmem:[%s29 + $0x78] sm:$0xff]
  %v1075 = vld [vmem:[%s29 + $0x80] sm:$0xff]
  %v1076 = vld [vmem:[%s29 + $0x88] sm:$0xff]
  %v1077 = vld [vmem:[%s29 + $0x90] sm:$0xff]
  %v1078 = vld [vmem:[%s29 + $0x98] sm:$0xff]
  %v1079 = vld [vmem:[%s29 + $0xa0] sm:$0xff]
  %v1080 = vld [vmem:[%s29 + $0xa8] sm:$0xff]
  %v1081 = vld [vmem:[%s29 + $0xb0] sm:$0xff]
  %v1082 = vld [vmem:[%s29 + $0xb8] sm:$0xff]
  %v1083 = vld [vmem:[%s29 + $0xc0] sm:$0xff]
  %v1084 = vld [vmem:[%s29 + $0xc8] sm:$0xff]
  %v1085 = vld [vmem:[%s29 + $0xd0] sm:$0xff]
  %v1086 = vld [vmem:[%s29 + $0xd8] sm:$0xff]
  %v1087 = vld [vmem:[%s29 + $0xe0] sm:$0xff]
  %v1088 = vld [vmem:[%s29 + $0xe8] sm:$0xff]
  %v1089 = vld [vmem:[%s29 + $0xf0] sm:$0xff]
  %v1090 = vld [vmem:[%s29 + $0xf8] sm:$0xff]
  %v1099 = vunpack.c.l.b16 %v1051
  %v1100 = vunpack.c.l.b16 %v1052
  %v1101 = vunpack.c.l.b16 %v1053
  %v1102 = vunpack.c.l.b16 %v1054
  %v1103 = vunpack.c.l.b16 %v1055
  %v1104 = vunpack.c.l.b16 %v1056
  %v1105 = vunpack.c.l.b16 %v1057
  %v1106 = vunpack.c.l.b16 %v1058
  %v1107 = vsel %vm704, %v1100, %v1099
  %v1108 = vsel %vm706, %v1101, %v1107
  %v1109 = vsel %vm708, %v1102, %v1108
  %v1110 = vsel %vm710, %v1103, %v1109
  %v1111 = vsel %vm712, %v1104, %v1110
  %v1112 = vsel %vm714, %v1105, %v1111
  %v1113 = vsel %vm716, %v1106, %v1112
  %v1114 = vpack.c.b16 %v1113, %v1113
  %v1148 = vunpack.c.l.b16 %v1059
  %v1149 = vunpack.c.h.b16 %v1059
  %v1150 = vunpack.c.l.b16 %v1060
  %v1151 = vunpack.c.h.b16 %v1060
  %v1152 = vunpack.c.l.b16 %v1061
  %v1153 = vunpack.c.h.b16 %v1061
  %v1154 = vunpack.c.l.b16 %v1062
  %v1155 = vunpack.c.h.b16 %v1062
  %v1156 = vunpack.c.l.b16 %v1063
  %v1157 = vunpack.c.h.b16 %v1063
  %v1158 = vunpack.c.l.b16 %v1064
  %v1159 = vunpack.c.h.b16 %v1064
  %v1160 = vunpack.c.l.b16 %v1065
  %v1161 = vunpack.c.h.b16 %v1065
  %v1162 = vunpack.c.l.b16 %v1066
  %v1163 = vunpack.c.h.b16 %v1066
  %v1164 = vunpack.c.l.b16 %v1067
  %v1165 = vunpack.c.h.b16 %v1067
  %v1166 = vunpack.c.l.b16 %v1068
  %v1167 = vunpack.c.h.b16 %v1068
  %v1168 = vunpack.c.l.b16 %v1069
  %v1169 = vunpack.c.h.b16 %v1069
  %v1170 = vunpack.c.l.b16 %v1070
  %v1171 = vunpack.c.h.b16 %v1070
  %v1172 = vunpack.c.l.b16 %v1071
  %v1173 = vunpack.c.h.b16 %v1071
  %v1174 = vunpack.c.l.b16 %v1072
  %v1175 = vunpack.c.h.b16 %v1072
  %v1176 = vunpack.c.l.b16 %v1073
  %v1177 = vunpack.c.h.b16 %v1073
  %v1178 = vunpack.c.l.b16 %v1074
  %v1179 = vunpack.c.h.b16 %v1074
  %v1180 = vunpack.c.l.b16 %v1075
  %v1181 = vunpack.c.h.b16 %v1075
  %v1182 = vunpack.c.l.b16 %v1076
  %v1183 = vunpack.c.h.b16 %v1076
  %v1184 = vunpack.c.l.b16 %v1077
  %v1185 = vunpack.c.h.b16 %v1077
  %v1186 = vunpack.c.l.b16 %v1078
  %v1187 = vunpack.c.h.b16 %v1078
  %v1188 = vunpack.c.l.b16 %v1079
  %v1189 = vunpack.c.h.b16 %v1079
  %v1190 = vunpack.c.l.b16 %v1080
  %v1191 = vunpack.c.h.b16 %v1080
  %v1192 = vunpack.c.l.b16 %v1081
  %v1193 = vunpack.c.h.b16 %v1081
  %v1194 = vunpack.c.l.b16 %v1082
  %v1195 = vunpack.c.h.b16 %v1082
  %v1196 = vunpack.c.l.b16 %v1083
  %v1197 = vunpack.c.h.b16 %v1083
  %v1198 = vunpack.c.l.b16 %v1084
  %v1199 = vunpack.c.h.b16 %v1084
  %v1200 = vunpack.c.l.b16 %v1085
  %v1201 = vunpack.c.h.b16 %v1085
  %v1202 = vunpack.c.l.b16 %v1086
  %v1203 = vunpack.c.h.b16 %v1086
  %v1204 = vunpack.c.l.b16 %v1087
  %v1205 = vunpack.c.h.b16 %v1087
  %v1206 = vunpack.c.l.b16 %v1088
  %v1207 = vunpack.c.h.b16 %v1088
  %v1208 = vunpack.c.l.b16 %v1089
  %v1209 = vunpack.c.h.b16 %v1089
  %v1210 = vunpack.c.l.b16 %v1090
  %v1211 = vunpack.c.h.b16 %v1090
  %v1212 = vpack.c.b16 %v1152, %v1148
  %v1213 = vpack.c.b16 %v1153, %v1149
  %v1214 = vpack.c.b16 %v1154, %v1150
  %v1215 = vpack.c.b16 %v1155, %v1151
  %v1216 = vpack.c.b16 %v1160, %v1156
  %v1217 = vpack.c.b16 %v1161, %v1157
  %v1218 = vpack.c.b16 %v1162, %v1158
  %v1219 = vpack.c.b16 %v1163, %v1159
  %v1220 = vpack.c.b16 %v1168, %v1164
  %v1221 = vpack.c.b16 %v1169, %v1165
  %v1222 = vpack.c.b16 %v1170, %v1166
  %v1223 = vpack.c.b16 %v1171, %v1167
  %v1224 = vpack.c.b16 %v1176, %v1172
  %v1225 = vpack.c.b16 %v1177, %v1173
  %v1226 = vpack.c.b16 %v1178, %v1174
  %v1227 = vpack.c.b16 %v1179, %v1175
  %v1228 = vpack.c.b16 %v1184, %v1180
  %v1229 = vpack.c.b16 %v1185, %v1181
  %v1230 = vpack.c.b16 %v1186, %v1182
  %v1231 = vpack.c.b16 %v1187, %v1183
  %v1232 = vpack.c.b16 %v1192, %v1188
  %v1233 = vpack.c.b16 %v1193, %v1189
  %v1234 = vpack.c.b16 %v1194, %v1190
  %v1235 = vpack.c.b16 %v1195, %v1191
  %v1236 = vpack.c.b16 %v1200, %v1196
  %v1237 = vpack.c.b16 %v1201, %v1197
  %v1238 = vpack.c.b16 %v1202, %v1198
  %v1239 = vpack.c.b16 %v1203, %v1199
  %v1240 = vpack.c.b16 %v1208, %v1204
  %v1241 = vpack.c.b16 %v1209, %v1205
  %v1242 = vpack.c.b16 %v1210, %v1206
  %v1243 = vpack.c.b16 %v1211, %v1207
  %1276 = vmatprep.subr.bf16.mxu0 %v1213
  %1277 = vmatpush1.bf16.msra.mxu0 %v1212
  %1278 = vmatprep.subr.bf16.mxu0 %v1217
  %1279 = vmatpush1.bf16.msra.mxu0 %v1216
  %1280 = vmatprep.subr.bf16.mxu0 %v1221
  %1281 = vmatpush1.bf16.msra.mxu0 %v1220
  %1282 = vmatprep.subr.bf16.mxu0 %v1225
  %1283 = vmatpush1.bf16.msra.mxu0 %v1224
  %1284 = vmatprep.subr.bf16.mxu0 %v1229
  %1285 = vmatpush1.bf16.msra.mxu0 %v1228
  %1286 = vmatprep.subr.bf16.mxu0 %v1233
  %1287 = vmatpush1.bf16.msra.mxu0 %v1232
  %1288 = vmatprep.subr.bf16.mxu0 %v1237
  %1289 = vmatpush1.bf16.msra.mxu0 %v1236
  %1290 = vmatprep.subr.bf16.mxu0 %v1241
  %1291 = vmatpush1.bf16.msra.mxu0 %v1240
  %1292 = vmatprep.subr.bf16.mxu0 0
  %1293 = vmatpush1.bf16.msra.mxu0 0
  %1294 = vmatprep.subr.bf16.mxu0 0
  %1295 = vmatpush1.bf16.msra.mxu0 0
  %1296 = vmatprep.subr.bf16.mxu0 0
  %1297 = vmatpush1.bf16.msra.mxu0 0
  %1298 = vmatprep.subr.bf16.mxu0 0
  %1299 = vmatpush1.bf16.msra.mxu0 0
  %1300 = vmatprep.subr.bf16.mxu0 0
  %1301 = vmatpush1.bf16.msra.mxu0 0
  %1302 = vmatprep.subr.bf16.mxu0 0
  %1303 = vmatpush1.bf16.msra.mxu0 0
  %1304 = vmatprep.subr.bf16.mxu0 0
  %1305 = vmatpush1.bf16.msra.mxu0 0
  %1306 = vmatprep.subr.bf16.mxu0 0
  %1307 = vmatpush1.bf16.msra.mxu0 0
  %1308 = vmatprep.mubr.bf16.mxu0 0
  %1309 = vmatmul.mubr.bf16.gmra.mrb[0].mxu0 %v1114
  %v1310 = vpop.f32.mrb[0].mxu0
  %v1311 = vadd.f32 0.0, %v1310
  %v1312 = vpop.f32.mrb[0].mxu0
  %v1313 = vadd.f32 0.0, %v1312
  %v1314 = vpop.f32.mrb[0].mxu0
  %v1315 = vpop.f32.mrb[0].mxu0
  %1316 = vdwg.mxu0
  %1317 = vmatprep.subr.bf16.mxu0 %v1215
  %1318 = vmatpush1.bf16.msra.mxu0 %v1214
  %1319 = vmatprep.subr.bf16.mxu0 %v1219
  %1320 = vmatpush1.bf16.msra.mxu0 %v1218
  %1321 = vmatprep.subr.bf16.mxu0 %v1223
  %1322 = vmatpush1.bf16.msra.mxu0 %v1222
  %1323 = vmatprep.subr.bf16.mxu0 %v1227
  %1324 = vmatpush1.bf16.msra.mxu0 %v1226
  %1325 = vmatprep.subr.bf16.mxu0 %v1231
  %1326 = vmatpush1.bf16.msra.mxu0 %v1230
  %1327 = vmatprep.subr.bf16.mxu0 %v1235
  %1328 = vmatpush1.bf16.msra.mxu0 %v1234
  %1329 = vmatprep.subr.bf16.mxu0 %v1239
  %1330 = vmatpush1.bf16.msra.mxu0 %v1238
  %1331 = vmatprep.subr.bf16.mxu0 %v1243
  %1332 = vmatpush1.bf16.msra.mxu0 %v1242
  %1333 = vmatprep.subr.bf16.mxu0 0
  %1334 = vmatpush1.bf16.msra.mxu0 0
  %1335 = vmatprep.subr.bf16.mxu0 0
  %1336 = vmatpush1.bf16.msra.mxu0 0
  %1337 = vmatprep.subr.bf16.mxu0 0
  %1338 = vmatpush1.bf16.msra.mxu0 0
  %1339 = vmatprep.subr.bf16.mxu0 0
  %1340 = vmatpush1.bf16.msra.mxu0 0
  %1341 = vmatprep.subr.bf16.mxu0 0
  %1342 = vmatpush1.bf16.msra.mxu0 0
  %1343 = vmatprep.subr.bf16.mxu0 0
  %1344 = vmatpush1.bf16.msra.mxu0 0
  %1345 = vmatprep.subr.bf16.mxu0 0
  %1346 = vmatpush1.bf16.msra.mxu0 0
  %1347 = vmatprep.subr.bf16.mxu0 0
  %1348 = vmatpush1.bf16.msra.mxu0 0
  %1349 = vmatprep.mubr.bf16.mxu0 0
  %1350 = vmatmul.mubr.bf16.gmra.mrb[0].mxu0 %v1114
  %v1351 = vpop.f32.mrb[0].mxu0
  %v1352 = vadd.f32 0.0, %v1351
  %v1353 = vpop.f32.mrb[0].mxu0
  %v1354 = vadd.f32 0.0, %v1353
  %v1355 = vpop.f32.mrb[0].mxu0
  %v1356 = vpop.f32.mrb[0].mxu0
  %1357 = vdwg.mxu0
  %v1374 = vunpack.c.l.b16 %v1035
  %v1375 = vunpack.c.h.b16 %v1035
  %v1376 = vunpack.c.l.b16 %v1036
  %v1377 = vunpack.c.h.b16 %v1036
  %v1378 = vunpack.c.l.b16 %v1037
  %v1379 = vunpack.c.h.b16 %v1037
  %v1380 = vunpack.c.l.b16 %v1038
  %v1381 = vunpack.c.h.b16 %v1038
  %v1382 = vunpack.c.l.b16 %v1039
  %v1383 = vunpack.c.h.b16 %v1039
  %v1384 = vunpack.c.l.b16 %v1040
  %v1385 = vunpack.c.h.b16 %v1040
  %v1386 = vunpack.c.l.b16 %v1041
  %v1387 = vunpack.c.h.b16 %v1041
  %v1388 = vunpack.c.l.b16 %v1042
  %v1389 = vunpack.c.h.b16 %v1042
  %v1390 = vunpack.c.l.b16 %v1043
  %v1391 = vunpack.c.h.b16 %v1043
  %v1392 = vunpack.c.l.b16 %v1044
  %v1393 = vunpack.c.h.b16 %v1044
  %v1394 = vunpack.c.l.b16 %v1045
  %v1395 = vunpack.c.h.b16 %v1045
  %v1396 = vunpack.c.l.b16 %v1046
  %v1397 = vunpack.c.h.b16 %v1046
  %v1398 = vunpack.c.l.b16 %v1047
  %v1399 = vunpack.c.h.b16 %v1047
  %v1400 = vunpack.c.l.b16 %v1048
  %v1401 = vunpack.c.h.b16 %v1048
  %v1402 = vunpack.c.l.b16 %v1049
  %v1403 = vunpack.c.h.b16 %v1049
  %v1404 = vunpack.c.l.b16 %v1050
  %v1405 = vunpack.c.h.b16 %v1050
  %v1406 = vpack.c.b16 %v1378, %v1374
  %v1407 = vpack.c.b16 %v1379, %v1375
  %v1408 = vpack.c.b16 %v1380, %v1376
  %v1409 = vpack.c.b16 %v1381, %v1377
  %v1410 = vpack.c.b16 %v1386, %v1382
  %v1411 = vpack.c.b16 %v1387, %v1383
  %v1412 = vpack.c.b16 %v1388, %v1384
  %v1413 = vpack.c.b16 %v1389, %v1385
  %v1414 = vpack.c.b16 %v1394, %v1390
  %v1415 = vpack.c.b16 %v1395, %v1391
  %v1416 = vpack.c.b16 %v1396, %v1392
  %v1417 = vpack.c.b16 %v1397, %v1393
  %v1418 = vpack.c.b16 %v1402, %v1398
  %v1419 = vpack.c.b16 %v1403, %v1399
  %v1420 = vpack.c.b16 %v1404, %v1400
  %v1421 = vpack.c.b16 %v1405, %v1401
  %1438 = vmatprep.subr.bf16.mxu0 %v1407
  %1439 = vmatpush1.bf16.msra.mxu0 %v1406
  %1440 = vmatprep.subr.bf16.mxu0 %v1411
  %1441 = vmatpush1.bf16.msra.mxu0 %v1410
  %1442 = vmatprep.subr.bf16.mxu0 %v1415
  %1443 = vmatpush1.bf16.msra.mxu0 %v1414
  %1444 = vmatprep.subr.bf16.mxu0 %v1419
  %1445 = vmatpush1.bf16.msra.mxu0 %v1418
  %1446 = vmatprep.subr.bf16.mxu0 0
  %1447 = vmatpush1.bf16.msra.mxu0 0
  %1448 = vmatprep.subr.bf16.mxu0 0
  %1449 = vmatpush1.bf16.msra.mxu0 0
  %1450 = vmatprep.subr.bf16.mxu0 0
  %1451 = vmatpush1.bf16.msra.mxu0 0
  %1452 = vmatprep.subr.bf16.mxu0 0
  %1453 = vmatpush1.bf16.msra.mxu0 0
  %1454 = vmatprep.subr.bf16.mxu0 0
  %1455 = vmatpush1.bf16.msra.mxu0 0
  %1456 = vmatprep.subr.bf16.mxu0 0
  %1457 = vmatpush1.bf16.msra.mxu0 0
  %1458 = vmatprep.subr.bf16.mxu0 0
  %1459 = vmatpush1.bf16.msra.mxu0 0
  %1460 = vmatprep.subr.bf16.mxu0 0
  %1461 = vmatpush1.bf16.msra.mxu0 0
  %1462 = vmatprep.subr.bf16.mxu0 0
  %1463 = vmatpush1.bf16.msra.mxu0 0
  %1464 = vmatprep.subr.bf16.mxu0 0
  %1465 = vmatpush1.bf16.msra.mxu0 0
  %1466 = vmatprep.subr.bf16.mxu0 0
  %1467 = vmatpush1.bf16.msra.mxu0 0
  %1468 = vmatprep.subr.bf16.mxu0 0
  %1469 = vmatpush1.bf16.msra.mxu0 0
  %1470 = vmatprep.mubr.bf16.mxu0 0
  %1471 = vmatmul.mubr.bf16.gmra.mrb[0].mxu0 %v744
  %v1472 = vpop.f32.mrb[0].mxu0
  %v1473 = vadd.f32 %v1311, %v1472
  %v1474 = vpop.f32.mrb[0].mxu0
  %v1475 = vadd.f32 %v1313, %v1474
  %v1476 = vpop.f32.mrb[0].mxu0
  %v1477 = vpop.f32.mrb[0].mxu0
  %1478 = vdwg.mxu0
  %1479 = vmatprep.subr.bf16.mxu0 %v1409
  %1480 = vmatpush1.bf16.msra.mxu0 %v1408
  %1481 = vmatprep.subr.bf16.mxu0 %v1413
  %1482 = vmatpush1.bf16.msra.mxu0 %v1412
  %1483 = vmatprep.subr.bf16.mxu0 %v1417
  %1484 = vmatpush1.bf16.msra.mxu0 %v1416
  %1485 = vmatprep.subr.bf16.mxu0 %v1421
  %1486 = vmatpush1.bf16.msra.mxu0 %v1420
  %1487 = vmatprep.subr.bf16.mxu0 0
  %1488 = vmatpush1.bf16.msra.mxu0 0
  %1489 = vmatprep.subr.bf16.mxu0 0
  %1490 = vmatpush1.bf16.msra.mxu0 0
  %1491 = vmatprep.subr.bf16.mxu0 0
  %1492 = vmatpush1.bf16.msra.mxu0 0
  %1493 = vmatprep.subr.bf16.mxu0 0
  %1494 = vmatpush1.bf16.msra.mxu0 0
  %1495 = vmatprep.subr.bf16.mxu0 0
  %1496 = vmatpush1.bf16.msra.mxu0 0
  %1497 = vmatprep.subr.bf16.mxu0 0
  %1498 = vmatpush1.bf16.msra.mxu0 0
  %1499 = vmatprep.subr.bf16.mxu0 0
  %1500 = vmatpush1.bf16.msra.mxu0 0
  %1501 = vmatprep.subr.bf16.mxu0 0
  %1502 = vmatpush1.bf16.msra.mxu0 0
  %1503 = vmatprep.subr.bf16.mxu0 0
  %1504 = vmatpush1.bf16.msra.mxu0 0
  %1505 = vmatprep.subr.bf16.mxu0 0
  %1506 = vmatpush1.bf16.msra.mxu0 0
  %1507 = vmatprep.subr.bf16.mxu0 0
  %1508 = vmatpush1.bf16.msra.mxu0 0
  %1509 = vmatprep.subr.bf16.mxu0 0
  %1510 = vmatpush1.bf16.msra.mxu0 0
  %1511 = vmatprep.mubr.bf16.mxu0 0
  %1512 = vmatmul.mubr.bf16.gmra.mrb[0].mxu0 %v744
  %v1513 = vpop.f32.mrb[0].mxu0
  %v1514 = vadd.f32 %v1352, %v1513
  %v1515 = vpop.f32.mrb[0].mxu0
  %v1516 = vadd.f32 %v1354, %v1515
  %v1517 = vpop.f32.mrb[0].mxu0
  %v1518 = vpop.f32.mrb[0].mxu0
  %1519 = vdwg.mxu0
  %v1520 = vld [vmem:[%s31] sm:$0xf]
  %v1522 = vlaneseq
  %v1523 = vshrl.u32 %v1522, 7
  %v1524 = vsub.s32 0, %v1523
  %v1525 = vrot.slane %v1520, %v1524
  %v1526 = vlaneseq
  %v1527 = vshrl.u32 %v1526, 7
  %v1528 = vsub.s32 1, %v1527
  %v1529 = vrot.slane %v1520, %v1528
  %v1530 = vlaneseq
  %v1531 = vshrl.u32 %v1530, 7
  %v1532 = vsub.s32 2, %v1531
  %v1533 = vrot.slane %v1520, %v1532
  %v1534 = vlaneseq
  %v1535 = vshrl.u32 %v1534, 7
  %v1536 = vsub.s32 3, %v1535
  %v1537 = vrot.slane %v1520, %v1536
  %v1542 = vadd.f32 %v1473, %v1525
  %v1543 = vadd.f32 %v1475, %v1529
  %v1544 = vadd.f32 %v1514, %v1533
  %v1545 = vadd.f32 %v1516, %v1537
  %v1546 = vmax.f32 %v1542, 0.0
  %v1547 = vmax.f32 %v1543, 0.0
  %v1548 = vmax.f32 %v1544, 0.0
  %v1549 = vmax.f32 %v1545, 0.0
  %v1550 = vld [vmem:[%s3] sm:$0xff]
  %v1551 = vld [vmem:[%s5] sm:$0xff]
  %v1552 = vld [vmem:[%s5 + $0x8] sm:$0xff]
  %v1553 = vld [vmem:[%s5 + $0x10] sm:$0xff]
  %v1554 = vld [vmem:[%s33] sm:$0xf]
  %v1555 = vld [vmem:[%s33 + $0x4] sm:$0xf]
  %v1556 = vld [vmem:[%s33 + $0x8] sm:$0xf]
  %v1557 = vld [vmem:[%s33 + $0xc] sm:$0xf]
  %vm1558 = vcmask 64512
  %v1560 = vsel %vm1558, %v1551, 0
  %1562 = vmatprep.subr.mxu0 0.0
  %1563 = vmatpush1.msra.mxu0 %v1550
  %1564 = vmatprep.subr.mxu0 0.0
  %1565 = vmatpush1.msra.mxu0 0.0
  %1566 = vmatprep.subr.mxu0 0.0
  %1567 = vmatpush1.msra.mxu0 0.0
  %1568 = vmatprep.subr.mxu0 0.0
  %1569 = vmatpush1.msra.mxu0 0.0
  %1570 = vmatprep.subr.mxu0 0.0
  %1571 = vmatpush1.msra.mxu0 0.0
  %1572 = vmatprep.subr.mxu0 0.0
  %1573 = vmatpush1.msra.mxu0 0.0
  %1574 = vmatprep.subr.mxu0 0.0
  %1575 = vmatpush1.msra.mxu0 0.0
  %1576 = vmatprep.subr.mxu0 0.0
  %1577 = vmatpush1.msra.mxu0 0.0
  %1578 = vmatprep.subr.mxu0 0.0
  %1579 = vmatpush1.msra.mxu0 0.0
  %1580 = vmatprep.subr.mxu0 0.0
  %1581 = vmatpush1.msra.mxu0 0.0
  %1582 = vmatprep.subr.mxu0 0.0
  %1583 = vmatpush1.msra.mxu0 0.0
  %1584 = vmatprep.subr.mxu0 0.0
  %1585 = vmatpush1.msra.mxu0 0.0
  %1586 = vmatprep.subr.mxu0 0.0
  %1587 = vmatpush1.msra.mxu0 0.0
  %1588 = vmatprep.subr.mxu0 0.0
  %1589 = vmatpush1.msra.mxu0 0.0
  %1590 = vmatprep.subr.mxu0 0.0
  %1591 = vmatpush1.msra.mxu0 0.0
  %1592 = vmatprep.subr.mxu0 0.0
  %1593 = vmatpush1.msra.mxu0 0.0
  %1594 = vmatprep.subr.mxu0 0.0
  %1595 = vmatpush1.msra.mxu0 0.0
  %1596 = vmatprep.subr.mxu0 0.0
  %1597 = vmatpush1.msra.mxu0 0.0
  %1598 = vmatprep.subr.mxu0 0.0
  %1599 = vmatpush1.msra.mxu0 0.0
  %1600 = vmatprep.subr.mxu0 0.0
  %1601 = vmatpush1.msra.mxu0 0.0
  %1602 = vmatprep.subr.mxu0 0.0
  %1603 = vmatpush1.msra.mxu0 0.0
  %1604 = vmatprep.subr.mxu0 0.0
  %1605 = vmatpush1.msra.mxu0 0.0
  %1606 = vmatprep.subr.mxu0 0.0
  %1607 = vmatpush1.msra.mxu0 0.0
  %1608 = vmatprep.subr.mxu0 0.0
  %1609 = vmatpush1.msra.mxu0 0.0
  %1610 = vmatprep.subr.mxu0 0.0
  %1611 = vmatpush1.msra.mxu0 0.0
  %1612 = vmatprep.subr.mxu0 0.0
  %1613 = vmatpush1.msra.mxu0 0.0
  %1614 = vmatprep.subr.mxu0 0.0
  %1615 = vmatpush1.msra.mxu0 0.0
  %1616 = vmatprep.subr.mxu0 0.0
  %1617 = vmatpush1.msra.mxu0 0.0
  %1618 = vmatprep.subr.mxu0 0.0
  %1619 = vmatpush1.msra.mxu0 0.0
  %1620 = vmatprep.subr.mxu0 0.0
  %1621 = vmatpush1.msra.mxu0 0.0
  %1622 = vmatprep.subr.mxu0 0.0
  %1623 = vmatpush1.msra.mxu0 0.0
  %1624 = vmatprep.subr.mxu0 0.0
  %1625 = vmatpush1.msra.mxu0 0.0
  %1626 = vmatprep.mubr.f32.mxu0 0.0
  %1627 = vmatmul.mubr.f32.gmra.mrb[0].mxu0 %v1560
  %v1628 = vpop.f32.mrb[0].mxu0
  %v1629 = vadd.f32 0.0, %v1628
  %v1630 = vpop.f32.mrb[0].mxu0
  %1631 = vdwg.mxu0
  %vm1632 = vcmask 31744
  %v1634 = vsel %vm1632, %v1629, 0
  %vm1636 = vcmask 1043456
  %v1638 = vsel %vm1636, %v1555, 0
  %1640 = vmatprep.subr.mxu0 0.0
  %1641 = vmatpush1.msra.mxu0 %v1638
  %1642 = vmatprep.subr.mxu0 0.0
  %1643 = vmatpush1.msra.mxu0 0.0
  %1644 = vmatprep.subr.mxu0 0.0
  %1645 = vmatpush1.msra.mxu0 0.0
  %1646 = vmatprep.subr.mxu0 0.0
  %1647 = vmatpush1.msra.mxu0 0.0
  %1648 = vmatprep.subr.mxu0 0.0
  %1649 = vmatpush1.msra.mxu0 0.0
  %1650 = vmatprep.subr.mxu0 0.0
  %1651 = vmatpush1.msra.mxu0 0.0
  %1652 = vmatprep.subr.mxu0 0.0
  %1653 = vmatpush1.msra.mxu0 0.0
  %1654 = vmatprep.subr.mxu0 0.0
  %1655 = vmatpush1.msra.mxu0 0.0
  %1656 = vmatprep.subr.mxu0 0.0
  %1657 = vmatpush1.msra.mxu0 0.0
  %1658 = vmatprep.subr.mxu0 0.0
  %1659 = vmatpush1.msra.mxu0 0.0
  %1660 = vmatprep.subr.mxu0 0.0
  %1661 = vmatpush1.msra.mxu0 0.0
  %1662 = vmatprep.subr.mxu0 0.0
  %1663 = vmatpush1.msra.mxu0 0.0
  %1664 = vmatprep.subr.mxu0 0.0
  %1665 = vmatpush1.msra.mxu0 0.0
  %1666 = vmatprep.subr.mxu0 0.0
  %1667 = vmatpush1.msra.mxu0 0.0
  %1668 = vmatprep.subr.mxu0 0.0
  %1669 = vmatpush1.msra.mxu0 0.0
  %1670 = vmatprep.subr.mxu0 0.0
  %1671 = vmatpush1.msra.mxu0 0.0
  %1672 = vmatprep.subr.mxu0 0.0
  %1673 = vmatpush1.msra.mxu0 0.0
  %1674 = vmatprep.subr.mxu0 0.0
  %1675 = vmatpush1.msra.mxu0 0.0
  %1676 = vmatprep.subr.mxu0 0.0
  %1677 = vmatpush1.msra.mxu0 0.0
  %1678 = vmatprep.subr.mxu0 0.0
  %1679 = vmatpush1.msra.mxu0 0.0
  %1680 = vmatprep.subr.mxu0 0.0
  %1681 = vmatpush1.msra.mxu0 0.0
  %1682 = vmatprep.subr.mxu0 0.0
  %1683 = vmatpush1.msra.mxu0 0.0
  %1684 = vmatprep.subr.mxu0 0.0
  %1685 = vmatpush1.msra.mxu0 0.0
  %1686 = vmatprep.subr.mxu0 0.0
  %1687 = vmatpush1.msra.mxu0 0.0
  %1688 = vmatprep.subr.mxu0 0.0
  %1689 = vmatpush1.msra.mxu0 0.0
  %1690 = vmatprep.subr.mxu0 0.0
  %1691 = vmatpush1.msra.mxu0 0.0
  %1692 = vmatprep.subr.mxu0 0.0
  %1693 = vmatpush1.msra.mxu0 0.0
  %1694 = vmatprep.subr.mxu0 0.0
  %1695 = vmatpush1.msra.mxu0 0.0
  %1696 = vmatprep.subr.mxu0 0.0
  %1697 = vmatpush1.msra.mxu0 0.0
  %1698 = vmatprep.subr.mxu0 0.0
  %1699 = vmatpush1.msra.mxu0 0.0
  %1700 = vmatprep.subr.mxu0 0.0
  %1701 = vmatpush1.msra.mxu0 0.0
  %1702 = vmatprep.subr.mxu0 0.0
  %1703 = vmatpush1.msra.mxu0 0.0
  %1704 = vmatprep.mubr.f32.mxu0 0.0
  %1705 = vmatmul.mubr.f32.gmra.mrb[0].mxu0 %v1634
  %v1706 = vpop.f32.mrb[0].mxu0
  %v1707 = vadd.f32 0.0, %v1706
  %v1708 = vpop.f32.mrb[0].mxu0
  %1709 = vdwg.mxu0
  %v1711 = vsel %vm1632, %v1550, 0
  %v1714 = vsel %vm1636, %v1554, 0
  %1716 = vmatprep.subr.mxu0 0.0
  %1717 = vmatpush1.msra.mxu0 %v1714
  %1718 = vmatprep.subr.mxu0 0.0
  %1719 = vmatpush1.msra.mxu0 0.0
  %1720 = vmatprep.subr.mxu0 0.0
  %1721 = vmatpush1.msra.mxu0 0.0
  %1722 = vmatprep.subr.mxu0 0.0
  %1723 = vmatpush1.msra.mxu0 0.0
  %1724 = vmatprep.subr.mxu0 0.0
  %1725 = vmatpush1.msra.mxu0 0.0
  %1726 = vmatprep.subr.mxu0 0.0
  %1727 = vmatpush1.msra.mxu0 0.0
  %1728 = vmatprep.subr.mxu0 0.0
  %1729 = vmatpush1.msra.mxu0 0.0
  %1730 = vmatprep.subr.mxu0 0.0
  %1731 = vmatpush1.msra.mxu0 0.0
  %1732 = vmatprep.subr.mxu0 0.0
  %1733 = vmatpush1.msra.mxu0 0.0
  %1734 = vmatprep.subr.mxu0 0.0
  %1735 = vmatpush1.msra.mxu0 0.0
  %1736 = vmatprep.subr.mxu0 0.0
  %1737 = vmatpush1.msra.mxu0 0.0
  %1738 = vmatprep.subr.mxu0 0.0
  %1739 = vmatpush1.msra.mxu0 0.0
  %1740 = vmatprep.subr.mxu0 0.0
  %1741 = vmatpush1.msra.mxu0 0.0
  %1742 = vmatprep.subr.mxu0 0.0
  %1743 = vmatpush1.msra.mxu0 0.0
  %1744 = vmatprep.subr.mxu0 0.0
  %1745 = vmatpush1.msra.mxu0 0.0
  %1746 = vmatprep.subr.mxu0 0.0
  %1747 = vmatpush1.msra.mxu0 0.0
  %1748 = vmatprep.subr.mxu0 0.0
  %1749 = vmatpush1.msra.mxu0 0.0
  %1750 = vmatprep.subr.mxu0 0.0
  %1751 = vmatpush1.msra.mxu0 0.0
  %1752 = vmatprep.subr.mxu0 0.0
  %1753 = vmatpush1.msra.mxu0 0.0
  %1754 = vmatprep.subr.mxu0 0.0
  %1755 = vmatpush1.msra.mxu0 0.0
  %1756 = vmatprep.subr.mxu0 0.0
  %1757 = vmatpush1.msra.mxu0 0.0
  %1758 = vmatprep.subr.mxu0 0.0
  %1759 = vmatpush1.msra.mxu0 0.0
  %1760 = vmatprep.subr.mxu0 0.0
  %1761 = vmatpush1.msra.mxu0 0.0
  %1762 = vmatprep.subr.mxu0 0.0
  %1763 = vmatpush1.msra.mxu0 0.0
  %1764 = vmatprep.subr.mxu0 0.0
  %1765 = vmatpush1.msra.mxu0 0.0
  %1766 = vmatprep.subr.mxu0 0.0
  %1767 = vmatpush1.msra.mxu0 0.0
  %1768 = vmatprep.subr.mxu0 0.0
  %1769 = vmatpush1.msra.mxu0 0.0
  %1770 = vmatprep.subr.mxu0 0.0
  %1771 = vmatpush1.msra.mxu0 0.0
  %1772 = vmatprep.subr.mxu0 0.0
  %1773 = vmatpush1.msra.mxu0 0.0
  %1774 = vmatprep.subr.mxu0 0.0
  %1775 = vmatpush1.msra.mxu0 0.0
  %1776 = vmatprep.subr.mxu0 0.0
  %1777 = vmatpush1.msra.mxu0 0.0
  %1778 = vmatprep.subr.mxu0 0.0
  %1779 = vmatpush1.msra.mxu0 0.0
  %1780 = vmatprep.mubr.f32.mxu0 0.0
  %1781 = vmatmul.mubr.f32.gmra.mrb[0].mxu0 %v1711
  %v1782 = vpop.f32.mrb[0].mxu0
  %v1783 = vadd.f32 %v1707, %v1782
  %v1784 = vpop.f32.mrb[0].mxu0
  %1785 = vdwg.mxu0
  %v1787 = vsel %vm1558, %v1552, 0
  %1789 = vmatprep.subr.mxu0 0.0
  %1790 = vmatpush1.msra.mxu0 %v1550
  %1791 = vmatprep.subr.mxu0 0.0
  %1792 = vmatpush1.msra.mxu0 0.0
  %1793 = vmatprep.subr.mxu0 0.0
  %1794 = vmatpush1.msra.mxu0 0.0
  %1795 = vmatprep.subr.mxu0 0.0
  %1796 = vmatpush1.msra.mxu0 0.0
  %1797 = vmatprep.subr.mxu0 0.0
  %1798 = vmatpush1.msra.mxu0 0.0
  %1799 = vmatprep.subr.mxu0 0.0
  %1800 = vmatpush1.msra.mxu0 0.0
  %1801 = vmatprep.subr.mxu0 0.0
  %1802 = vmatpush1.msra.mxu0 0.0
  %1803 = vmatprep.subr.mxu0 0.0
  %1804 = vmatpush1.msra.mxu0 0.0
  %1805 = vmatprep.subr.mxu0 0.0
  %1806 = vmatpush1.msra.mxu0 0.0
  %1807 = vmatprep.subr.mxu0 0.0
  %1808 = vmatpush1.msra.mxu0 0.0
  %1809 = vmatprep.subr.mxu0 0.0
  %1810 = vmatpush1.msra.mxu0 0.0
  %1811 = vmatprep.subr.mxu0 0.0
  %1812 = vmatpush1.msra.mxu0 0.0
  %1813 = vmatprep.subr.mxu0 0.0
  %1814 = vmatpush1.msra.mxu0 0.0
  %1815 = vmatprep.subr.mxu0 0.0
  %1816 = vmatpush1.msra.mxu0 0.0
  %1817 = vmatprep.subr.mxu0 0.0
  %1818 = vmatpush1.msra.mxu0 0.0
  %1819 = vmatprep.subr.mxu0 0.0
  %1820 = vmatpush1.msra.mxu0 0.0
  %1821 = vmatprep.subr.mxu0 0.0
  %1822 = vmatpush1.msra.mxu0 0.0
  %1823 = vmatprep.subr.mxu0 0.0
  %1824 = vmatpush1.msra.mxu0 0.0
  %1825 = vmatprep.subr.mxu0 0.0
  %1826 = vmatpush1.msra.mxu0 0.0
  %1827 = vmatprep.subr.mxu0 0.0
  %1828 = vmatpush1.msra.mxu0 0.0
  %1829 = vmatprep.subr.mxu0 0.0
  %1830 = vmatpush1.msra.mxu0 0.0
  %1831 = vmatprep.subr.mxu0 0.0
  %1832 = vmatpush1.msra.mxu0 0.0
  %1833 = vmatprep.subr.mxu0 0.0
  %1834 = vmatpush1.msra.mxu0 0.0
  %1835 = vmatprep.subr.mxu0 0.0
  %1836 = vmatpush1.msra.mxu0 0.0
  %1837 = vmatprep.subr.mxu0 0.0
  %1838 = vmatpush1.msra.mxu0 0.0
  %1839 = vmatprep.subr.mxu0 0.0
  %1840 = vmatpush1.msra.mxu0 0.0
  %1841 = vmatprep.subr.mxu0 0.0
  %1842 = vmatpush1.msra.mxu0 0.0
  %1843 = vmatprep.subr.mxu0 0.0
  %1844 = vmatpush1.msra.mxu0 0.0
  %1845 = vmatprep.subr.mxu0 0.0
  %1846 = vmatpush1.msra.mxu0 0.0
  %1847 = vmatprep.subr.mxu0 0.0
  %1848 = vmatpush1.msra.mxu0 0.0
  %1849 = vmatprep.subr.mxu0 0.0
  %1850 = vmatpush1.msra.mxu0 0.0
  %1851 = vmatprep.subr.mxu0 0.0
  %1852 = vmatpush1.msra.mxu0 0.0
  %1853 = vmatprep.mubr.f32.mxu0 0.0
  %1854 = vmatmul.mubr.f32.gmra.mrb[0].mxu0 %v1787
  %v1855 = vpop.f32.mrb[0].mxu0
  %v1856 = vadd.f32 0.0, %v1855
  %v1857 = vpop.f32.mrb[0].mxu0
  %1858 = vdwg.mxu0
  %v1860 = vsel %vm1632, %v1856, 0
  %v1863 = vsel %vm1636, %v1556, 0
  %1865 = vmatprep.subr.mxu0 0.0
  %1866 = vmatpush1.msra.mxu0 %v1863
  %1867 = vmatprep.subr.mxu0 0.0
  %1868 = vmatpush1.msra.mxu0 0.0
  %1869 = vmatprep.subr.mxu0 0.0
  %1870 = vmatpush1.msra.mxu0 0.0
  %1871 = vmatprep.subr.mxu0 0.0
  %1872 = vmatpush1.msra.mxu0 0.0
  %1873 = vmatprep.subr.mxu0 0.0
  %1874 = vmatpush1.msra.mxu0 0.0
  %1875 = vmatprep.subr.mxu0 0.0
  %1876 = vmatpush1.msra.mxu0 0.0
  %1877 = vmatprep.subr.mxu0 0.0
  %1878 = vmatpush1.msra.mxu0 0.0
  %1879 = vmatprep.subr.mxu0 0.0
  %1880 = vmatpush1.msra.mxu0 0.0
  %1881 = vmatprep.subr.mxu0 0.0
  %1882 = vmatpush1.msra.mxu0 0.0
  %1883 = vmatprep.subr.mxu0 0.0
  %1884 = vmatpush1.msra.mxu0 0.0
  %1885 = vmatprep.subr.mxu0 0.0
  %1886 = vmatpush1.msra.mxu0 0.0
  %1887 = vmatprep.subr.mxu0 0.0
  %1888 = vmatpush1.msra.mxu0 0.0
  %1889 = vmatprep.subr.mxu0 0.0
  %1890 = vmatpush1.msra.mxu0 0.0
  %1891 = vmatprep.subr.mxu0 0.0
  %1892 = vmatpush1.msra.mxu0 0.0
  %1893 = vmatprep.subr.mxu0 0.0
  %1894 = vmatpush1.msra.mxu0 0.0
  %1895 = vmatprep.subr.mxu0 0.0
  %1896 = vmatpush1.msra.mxu0 0.0
  %1897 = vmatprep.subr.mxu0 0.0
  %1898 = vmatpush1.msra.mxu0 0.0
  %1899 = vmatprep.subr.mxu0 0.0
  %1900 = vmatpush1.msra.mxu0 0.0
  %1901 = vmatprep.subr.mxu0 0.0
  %1902 = vmatpush1.msra.mxu0 0.0
  %1903 = vmatprep.subr.mxu0 0.0
  %1904 = vmatpush1.msra.mxu0 0.0
  %1905 = vmatprep.subr.mxu0 0.0
  %1906 = vmatpush1.msra.mxu0 0.0
  %1907 = vmatprep.subr.mxu0 0.0
  %1908 = vmatpush1.msra.mxu0 0.0
  %1909 = vmatprep.subr.mxu0 0.0
  %1910 = vmatpush1.msra.mxu0 0.0
  %1911 = vmatprep.subr.mxu0 0.0
  %1912 = vmatpush1.msra.mxu0 0.0
  %1913 = vmatprep.subr.mxu0 0.0
  %1914 = vmatpush1.msra.mxu0 0.0
  %1915 = vmatprep.subr.mxu0 0.0
  %1916 = vmatpush1.msra.mxu0 0.0
  %1917 = vmatprep.subr.mxu0 0.0
  %1918 = vmatpush1.msra.mxu0 0.0
  %1919 = vmatprep.subr.mxu0 0.0
  %1920 = vmatpush1.msra.mxu0 0.0
  %1921 = vmatprep.subr.mxu0 0.0
  %1922 = vmatpush1.msra.mxu0 0.0
  %1923 = vmatprep.subr.mxu0 0.0
  %1924 = vmatpush1.msra.mxu0 0.0
  %1925 = vmatprep.subr.mxu0 0.0
  %1926 = vmatpush1.msra.mxu0 0.0
  %1927 = vmatprep.subr.mxu0 0.0
  %1928 = vmatpush1.msra.mxu0 0.0
  %1929 = vmatprep.mubr.f32.mxu0 0.0
  %1930 = vmatmul.mubr.f32.gmra.mrb[0].mxu0 %v1860
  %v1931 = vpop.f32.mrb[0].mxu0
  %v1932 = vadd.f32 0.0, %v1931
  %v1933 = vpop.f32.mrb[0].mxu0
  %1934 = vdwg.mxu0
  %v1935 = vadd.f32 %v1783, %v1932
  %v1937 = vsel %vm1558, %v1553, 0
  %1939 = vmatprep.subr.mxu0 0.0
  %1940 = vmatpush1.msra.mxu0 %v1550
  %1941 = vmatprep.subr.mxu0 0.0
  %1942 = vmatpush1.msra.mxu0 0.0
  %1943 = vmatprep.subr.mxu0 0.0
  %1944 = vmatpush1.msra.mxu0 0.0
  %1945 = vmatprep.subr.mxu0 0.0
  %1946 = vmatpush1.msra.mxu0 0.0
  %1947 = vmatprep.subr.mxu0 0.0
  %1948 = vmatpush1.msra.mxu0 0.0
  %1949 = vmatprep.subr.mxu0 0.0
  %1950 = vmatpush1.msra.mxu0 0.0
  %1951 = vmatprep.subr.mxu0 0.0
  %1952 = vmatpush1.msra.mxu0 0.0
  %1953 = vmatprep.subr.mxu0 0.0
  %1954 = vmatpush1.msra.mxu0 0.0
  %1955 = vmatprep.subr.mxu0 0.0
  %1956 = vmatpush1.msra.mxu0 0.0
  %1957 = vmatprep.subr.mxu0 0.0
  %1958 = vmatpush1.msra.mxu0 0.0
  %1959 = vmatprep.subr.mxu0 0.0
  %1960 = vmatpush1.msra.mxu0 0.0
  %1961 = vmatprep.subr.mxu0 0.0
  %1962 = vmatpush1.msra.mxu0 0.0
  %1963 = vmatprep.subr.mxu0 0.0
  %1964 = vmatpush1.msra.mxu0 0.0
  %1965 = vmatprep.subr.mxu0 0.0
  %1966 = vmatpush1.msra.mxu0 0.0
  %1967 = vmatprep.subr.mxu0 0.0
  %1968 = vmatpush1.msra.mxu0 0.0
  %1969 = vmatprep.subr.mxu0 0.0
  %1970 = vmatpush1.msra.mxu0 0.0
  %1971 = vmatprep.subr.mxu0 0.0
  %1972 = vmatpush1.msra.mxu0 0.0
  %1973 = vmatprep.subr.mxu0 0.0
  %1974 = vmatpush1.msra.mxu0 0.0
  %1975 = vmatprep.subr.mxu0 0.0
  %1976 = vmatpush1.msra.mxu0 0.0
  %1977 = vmatprep.subr.mxu0 0.0
  %1978 = vmatpush1.msra.mxu0 0.0
  %1979 = vmatprep.subr.mxu0 0.0
  %1980 = vmatpush1.msra.mxu0 0.0
  %1981 = vmatprep.subr.mxu0 0.0
  %1982 = vmatpush1.msra.mxu0 0.0
  %1983 = vmatprep.subr.mxu0 0.0
  %1984 = vmatpush1.msra.mxu0 0.0
  %1985 = vmatprep.subr.mxu0 0.0
  %1986 = vmatpush1.msra.mxu0 0.0
  %1987 = vmatprep.subr.mxu0 0.0
  %1988 = vmatpush1.msra.mxu0 0.0
  %1989 = vmatprep.subr.mxu0 0.0
  %1990 = vmatpush1.msra.mxu0 0.0
  %1991 = vmatprep.subr.mxu0 0.0
  %1992 = vmatpush1.msra.mxu0 0.0
  %1993 = vmatprep.subr.mxu0 0.0
  %1994 = vmatpush1.msra.mxu0 0.0
  %1995 = vmatprep.subr.mxu0 0.0
  %1996 = vmatpush1.msra.mxu0 0.0
  %1997 = vmatprep.subr.mxu0 0.0
  %1998 = vmatpush1.msra.mxu0 0.0
  %1999 = vmatprep.subr.mxu0 0.0
  %2000 = vmatpush1.msra.mxu0 0.0
  %2001 = vmatprep.subr.mxu0 0.0
  %2002 = vmatpush1.msra.mxu0 0.0
  %2003 = vmatprep.mubr.f32.mxu0 0.0
  %2004 = vmatmul.mubr.f32.gmra.mrb[0].mxu0 %v1937
  %v2005 = vpop.f32.mrb[0].mxu0
  %v2006 = vadd.f32 0.0, %v2005
  %v2007 = vpop.f32.mrb[0].mxu0
  %2008 = vdwg.mxu0
  %v2010 = vsel %vm1632, %v2006, 0
  %v2013 = vsel %vm1636, %v1557, 0
  %2015 = vmatprep.subr.mxu0 0.0
  %2016 = vmatpush1.msra.mxu0 %v2013
  %2017 = vmatprep.subr.mxu0 0.0
  %2018 = vmatpush1.msra.mxu0 0.0
  %2019 = vmatprep.subr.mxu0 0.0
  %2020 = vmatpush1.msra.mxu0 0.0
  %2021 = vmatprep.subr.mxu0 0.0
  %2022 = vmatpush1.msra.mxu0 0.0
  %2023 = vmatprep.subr.mxu0 0.0
  %2024 = vmatpush1.msra.mxu0 0.0
  %2025 = vmatprep.subr.mxu0 0.0
  %2026 = vmatpush1.msra.mxu0 0.0
  %2027 = vmatprep.subr.mxu0 0.0
  %2028 = vmatpush1.msra.mxu0 0.0
  %2029 = vmatprep.subr.mxu0 0.0
  %2030 = vmatpush1.msra.mxu0 0.0
  %2031 = vmatprep.subr.mxu0 0.0
  %2032 = vmatpush1.msra.mxu0 0.0
  %2033 = vmatprep.subr.mxu0 0.0
  %2034 = vmatpush1.msra.mxu0 0.0
  %2035 = vmatprep.subr.mxu0 0.0
  %2036 = vmatpush1.msra.mxu0 0.0
  %2037 = vmatprep.subr.mxu0 0.0
  %2038 = vmatpush1.msra.mxu0 0.0
  %2039 = vmatprep.subr.mxu0 0.0
  %2040 = vmatpush1.msra.mxu0 0.0
  %2041 = vmatprep.subr.mxu0 0.0
  %2042 = vmatpush1.msra.mxu0 0.0
  %2043 = vmatprep.subr.mxu0 0.0
  %2044 = vmatpush1.msra.mxu0 0.0
  %2045 = vmatprep.subr.mxu0 0.0
  %2046 = vmatpush1.msra.mxu0 0.0
  %2047 = vmatprep.subr.mxu0 0.0
  %2048 = vmatpush1.msra.mxu0 0.0
  %2049 = vmatprep.subr.mxu0 0.0
  %2050 = vmatpush1.msra.mxu0 0.0
  %2051 = vmatprep.subr.mxu0 0.0
  %2052 = vmatpush1.msra.mxu0 0.0
  %2053 = vmatprep.subr.mxu0 0.0
  %2054 = vmatpush1.msra.mxu0 0.0
  %2055 = vmatprep.subr.mxu0 0.0
  %2056 = vmatpush1.msra.mxu0 0.0
  %2057 = vmatprep.subr.mxu0 0.0
  %2058 = vmatpush1.msra.mxu0 0.0
  %2059 = vmatprep.subr.mxu0 0.0
  %2060 = vmatpush1.msra.mxu0 0.0
  %2061 = vmatprep.subr.mxu0 0.0
  %2062 = vmatpush1.msra.mxu0 0.0
  %2063 = vmatprep.subr.mxu0 0.0
  %2064 = vmatpush1.msra.mxu0 0.0
  %2065 = vmatprep.subr.mxu0 0.0
  %2066 = vmatpush1.msra.mxu0 0.0
  %2067 = vmatprep.subr.mxu0 0.0
  %2068 = vmatpush1.msra.mxu0 0.0
  %2069 = vmatprep.subr.mxu0 0.0
  %2070 = vmatpush1.msra.mxu0 0.0
  %2071 = vmatprep.subr.mxu0 0.0
  %2072 = vmatpush1.msra.mxu0 0.0
  %2073 = vmatprep.subr.mxu0 0.0
  %2074 = vmatpush1.msra.mxu0 0.0
  %2075 = vmatprep.subr.mxu0 0.0
  %2076 = vmatpush1.msra.mxu0 0.0
  %2077 = vmatprep.subr.mxu0 0.0
  %2078 = vmatpush1.msra.mxu0 0.0
  %2079 = vmatprep.mubr.f32.mxu0 0.0
  %2080 = vmatmul.mubr.f32.gmra.mrb[0].mxu0 %v2010
  %v2081 = vpop.f32.mrb[0].mxu0
  %v2082 = vadd.f32 0.0, %v2081
  %v2083 = vpop.f32.mrb[0].mxu0
  %2084 = vdwg.mxu0
  %v2085 = vadd.f32 %v1935, %v2082
  %v2086 = vld [vmem:[%s35] sm:$0x1]
  %v2088 = vlaneseq
  %v2089 = vshrl.u32 %v2088, 7
  %v2090 = vsub.s32 0, %v2089
  %v2091 = vrot.slane %v2086, %v2090
  %v2093 = vadd.f32 %v2085, %v2091
  %v2094 = vmax.f32 %v2093, 0.0
  %v2095 = vld [vmem:[%s37] sm:$0xff]
  %v2096 = vld [vmem:[%s37 + $0x8] sm:$0xff]
  %v2097 = vld [vmem:[%s37 + $0x10] sm:$0xff]
  %v2098 = vld [vmem:[%s37 + $0x18] sm:$0xff]
  %v2099 = vld [vmem:[%s37 + $0x20] sm:$0xff]
  %v2100 = vld [vmem:[%s37 + $0x28] sm:$0xff]
  %v2101 = vld [vmem:[%s37 + $0x30] sm:$0xff]
  %v2102 = vld [vmem:[%s37 + $0x38] sm:$0xff]
  %v2103 = vld [vmem:[%s37 + $0x40] sm:$0xff]
  %v2104 = vld [vmem:[%s37 + $0x48] sm:$0xff]
  %v2105 = vld [vmem:[%s37 + $0x50] sm:$0xff]
  %v2106 = vld [vmem:[%s37 + $0x58] sm:$0xff]
  %v2107 = vld [vmem:[%s37 + $0x60] sm:$0xff]
  %v2108 = vld [vmem:[%s37 + $0x68] sm:$0xff]
  %v2109 = vld [vmem:[%s37 + $0x70] sm:$0xff]
  %v2110 = vld [vmem:[%s37 + $0x78] sm:$0xff]
  %v2111 = vld [vmem:[%s37 + $0x80] sm:$0xff]
  %v2112 = vld [vmem:[%s37 + $0x88] sm:$0xff]
  %v2113 = vld [vmem:[%s37 + $0x90] sm:$0xff]
  %v2114 = vld [vmem:[%s37 + $0x98] sm:$0xff]
  %v2115 = vld [vmem:[%s37 + $0xa0] sm:$0xff]
  %v2116 = vld [vmem:[%s37 + $0xa8] sm:$0xff]
  %v2117 = vld [vmem:[%s37 + $0xb0] sm:$0xff]
  %v2118 = vld [vmem:[%s37 + $0xb8] sm:$0xff]
  %v2119 = vld [vmem:[%s37 + $0xc0] sm:$0xff]
  %v2120 = vld [vmem:[%s37 + $0xc8] sm:$0xff]
  %v2121 = vld [vmem:[%s37 + $0xd0] sm:$0xff]
  %v2122 = vld [vmem:[%s37 + $0xd8] sm:$0xff]
  %v2123 = vld [vmem:[%s37 + $0xe0] sm:$0xff]
  %v2124 = vld [vmem:[%s37 + $0xe8] sm:$0xff]
  %v2125 = vld [vmem:[%s37 + $0xf0] sm:$0xff]
  %v2126 = vld [vmem:[%s37 + $0xf8] sm:$0xff]
  %2127 = vmatprep.subr.mxu0 0.0
  %2128 = vmatpush1.msra.mxu0 %v2094
  %2129 = vmatprep.subr.mxu0 0.0
  %2130 = vmatpush1.msra.mxu0 0.0
  %2131 = vmatprep.subr.mxu0 0.0
  %2132 = vmatpush1.msra.mxu0 0.0
  %2133 = vmatprep.subr.mxu0 0.0
  %2134 = vmatpush1.msra.mxu0 0.0
  %2135 = vmatprep.subr.mxu0 0.0
  %2136 = vmatpush1.msra.mxu0 0.0
  %2137 = vmatprep.subr.mxu0 0.0
  %2138 = vmatpush1.msra.mxu0 0.0
  %2139 = vmatprep.subr.mxu0 0.0
  %2140 = vmatpush1.msra.mxu0 0.0
  %2141 = vmatprep.subr.mxu0 0.0
  %2142 = vmatpush1.msra.mxu0 0.0
  %2143 = vmatprep.subr.mxu0 0.0
  %2144 = vmatpush1.msra.mxu0 0.0
  %2145 = vmatprep.subr.mxu0 0.0
  %2146 = vmatpush1.msra.mxu0 0.0
  %2147 = vmatprep.subr.mxu0 0.0
  %2148 = vmatpush1.msra.mxu0 0.0
  %2149 = vmatprep.subr.mxu0 0.0
  %2150 = vmatpush1.msra.mxu0 0.0
  %2151 = vmatprep.subr.mxu0 0.0
  %2152 = vmatpush1.msra.mxu0 0.0
  %2153 = vmatprep.subr.mxu0 0.0
  %2154 = vmatpush1.msra.mxu0 0.0
  %2155 = vmatprep.subr.mxu0 0.0
  %2156 = vmatpush1.msra.mxu0 0.0
  %2157 = vmatprep.subr.mxu0 0.0
  %2158 = vmatpush1.msra.mxu0 0.0
  %2159 = vmatprep.subr.mxu0 0.0
  %2160 = vmatpush1.msra.mxu0 0.0
  %2161 = vmatprep.subr.mxu0 0.0
  %2162 = vmatpush1.msra.mxu0 0.0
  %2163 = vmatprep.subr.mxu0 0.0
  %2164 = vmatpush1.msra.mxu0 0.0
  %2165 = vmatprep.subr.mxu0 0.0
  %2166 = vmatpush1.msra.mxu0 0.0
  %2167 = vmatprep.subr.mxu0 0.0
  %2168 = vmatpush1.msra.mxu0 0.0
  %2169 = vmatprep.subr.mxu0 0.0
  %2170 = vmatpush1.msra.mxu0 0.0
  %2171 = vmatprep.subr.mxu0 0.0
  %2172 = vmatpush1.msra.mxu0 0.0
  %2173 = vmatprep.subr.mxu0 0.0
  %2174 = vmatpush1.msra.mxu0 0.0
  %2175 = vmatprep.subr.mxu0 0.0
  %2176 = vmatpush1.msra.mxu0 0.0
  %2177 = vmatprep.subr.mxu0 0.0
  %2178 = vmatpush1.msra.mxu0 0.0
  %2179 = vmatprep.subr.mxu0 0.0
  %2180 = vmatpush1.msra.mxu0 0.0
  %2181 = vmatprep.subr.mxu0 0.0
  %2182 = vmatpush1.msra.mxu0 0.0
  %2183 = vmatprep.subr.mxu0 0.0
  %2184 = vmatpush1.msra.mxu0 0.0
  %2185 = vmatprep.subr.mxu0 0.0
  %2186 = vmatpush1.msra.mxu0 0.0
  %2187 = vmatprep.subr.mxu0 0.0
  %2188 = vmatpush1.msra.mxu0 0.0
  %2189 = vmatprep.subr.mxu0 0.0
  %2190 = vmatpush1.msra.mxu0 0.0
  %2191 = vmatprep.mubr.f32.mxu0 0.0
  %2192 = vmatmul.mubr.f32.gmra.mrb[0].mxu0 %v1560
  %v2193 = vpop.f32.mrb[0].mxu0
  %v2194 = vadd.f32 0.0, %v2193
  %v2195 = vpop.f32.mrb[0].mxu0
  %2196 = vdwg.mxu0
  %v2198 = vsel %vm394, %v2194, 0
  %2200 = vmatprep.subr.mxu0 0.0
  %2201 = vmatpush1.msra.mxu0 %v2103
  %2202 = vmatprep.subr.mxu0 0.0
  %2203 = vmatpush1.msra.mxu0 %v2104
  %2204 = vmatprep.subr.mxu0 0.0
  %2205 = vmatpush1.msra.mxu0 %v2105
  %2206 = vmatprep.subr.mxu0 0.0
  %2207 = vmatpush1.msra.mxu0 %v2106
  %2208 = vmatprep.subr.mxu0 0.0
  %2209 = vmatpush1.msra.mxu0 %v2107
  %2210 = vmatprep.subr.mxu0 0.0
  %2211 = vmatpush1.msra.mxu0 %v2108
  %2212 = vmatprep.subr.mxu0 0.0
  %2213 = vmatpush1.msra.mxu0 %v2109
  %2214 = vmatprep.subr.mxu0 0.0
  %2215 = vmatpush1.msra.mxu0 %v2110
  %2216 = vmatprep.subr.mxu0 0.0
  %2217 = vmatpush1.msra.mxu0 0.0
  %2218 = vmatprep.subr.mxu0 0.0
  %2219 = vmatpush1.msra.mxu0 0.0
  %2220 = vmatprep.subr.mxu0 0.0
  %2221 = vmatpush1.msra.mxu0 0.0
  %2222 = vmatprep.subr.mxu0 0.0
  %2223 = vmatpush1.msra.mxu0 0.0
  %2224 = vmatprep.subr.mxu0 0.0
  %2225 = vmatpush1.msra.mxu0 0.0
  %2226 = vmatprep.subr.mxu0 0.0
  %2227 = vmatpush1.msra.mxu0 0.0
  %2228 = vmatprep.subr.mxu0 0.0
  %2229 = vmatpush1.msra.mxu0 0.0
  %2230 = vmatprep.subr.mxu0 0.0
  %2231 = vmatpush1.msra.mxu0 0.0
  %2232 = vmatprep.subr.mxu0 0.0
  %2233 = vmatpush1.msra.mxu0 0.0
  %2234 = vmatprep.subr.mxu0 0.0
  %2235 = vmatpush1.msra.mxu0 0.0
  %2236 = vmatprep.subr.mxu0 0.0
  %2237 = vmatpush1.msra.mxu0 0.0
  %2238 = vmatprep.subr.mxu0 0.0
  %2239 = vmatpush1.msra.mxu0 0.0
  %2240 = vmatprep.subr.mxu0 0.0
  %2241 = vmatpush1.msra.mxu0 0.0
  %2242 = vmatprep.subr.mxu0 0.0
  %2243 = vmatpush1.msra.mxu0 0.0
  %2244 = vmatprep.subr.mxu0 0.0
  %2245 = vmatpush1.msra.mxu0 0.0
  %2246 = vmatprep.subr.mxu0 0.0
  %2247 = vmatpush1.msra.mxu0 0.0
  %2248 = vmatprep.subr.mxu0 0.0
  %2249 = vmatpush1.msra.mxu0 0.0
  %2250 = vmatprep.subr.mxu0 0.0
  %2251 = vmatpush1.msra.mxu0 0.0
  %2252 = vmatprep.subr.mxu0 0.0
  %2253 = vmatpush1.msra.mxu0 0.0
  %2254 = vmatprep.subr.mxu0 0.0
  %2255 = vmatpush1.msra.mxu0 0.0
  %2256 = vmatprep.subr.mxu0 0.0
  %2257 = vmatpush1.msra.mxu0 0.0
  %2258 = vmatprep.subr.mxu0 0.0
  %2259 = vmatpush1.msra.mxu0 0.0
  %2260 = vmatprep.subr.mxu0 0.0
  %2261 = vmatpush1.msra.mxu0 0.0
  %2262 = vmatprep.subr.mxu0 0.0
  %2263 = vmatpush1.msra.mxu0 0.0
  %2264 = vmatprep.mubr.f32.mxu0 0.0
  %2265 = vmatmul.mubr.f32.gmra.mrb[0].mxu0 %v2198
  %v2266 = vpop.f32.mrb[0].mxu0
  %v2267 = vadd.f32 0.0, %v2266
  %v2268 = vpop.f32.mrb[0].mxu0
  %2269 = vdwg.mxu0
  %v2271 = vsel %vm394, %v2094, 0
  %2273 = vmatprep.subr.mxu0 0.0
  %2274 = vmatpush1.msra.mxu0 %v2095
  %2275 = vmatprep.subr.mxu0 0.0
  %2276 = vmatpush1.msra.mxu0 %v2096
  %2277 = vmatprep.subr.mxu0 0.0
  %2278 = vmatpush1.msra.mxu0 %v2097
  %2279 = vmatprep.subr.mxu0 0.0
  %2280 = vmatpush1.msra.mxu0 %v2098
  %2281 = vmatprep.subr.mxu0 0.0
  %2282 = vmatpush1.msra.mxu0 %v2099
  %2283 = vmatprep.subr.mxu0 0.0
  %2284 = vmatpush1.msra.mxu0 %v2100
  %2285 = vmatprep.subr.mxu0 0.0
  %2286 = vmatpush1.msra.mxu0 %v2101
  %2287 = vmatprep.subr.mxu0 0.0
  %2288 = vmatpush1.msra.mxu0 %v2102
  %2289 = vmatprep.subr.mxu0 0.0
  %2290 = vmatpush1.msra.mxu0 0.0
  %2291 = vmatprep.subr.mxu0 0.0
  %2292 = vmatpush1.msra.mxu0 0.0
  %2293 = vmatprep.subr.mxu0 0.0
  %2294 = vmatpush1.msra.mxu0 0.0
  %2295 = vmatprep.subr.mxu0 0.0
  %2296 = vmatpush1.msra.mxu0 0.0
  %2297 = vmatprep.subr.mxu0 0.0
  %2298 = vmatpush1.msra.mxu0 0.0
  %2299 = vmatprep.subr.mxu0 0.0
  %2300 = vmatpush1.msra.mxu0 0.0
  %2301 = vmatprep.subr.mxu0 0.0
  %2302 = vmatpush1.msra.mxu0 0.0
  %2303 = vmatprep.subr.mxu0 0.0
  %2304 = vmatpush1.msra.mxu0 0.0
  %2305 = vmatprep.subr.mxu0 0.0
  %2306 = vmatpush1.msra.mxu0 0.0
  %2307 = vmatprep.subr.mxu0 0.0
  %2308 = vmatpush1.msra.mxu0 0.0
  %2309 = vmatprep.subr.mxu0 0.0
  %2310 = vmatpush1.msra.mxu0 0.0
  %2311 = vmatprep.subr.mxu0 0.0
  %2312 = vmatpush1.msra.mxu0 0.0
  %2313 = vmatprep.subr.mxu0 0.0
  %2314 = vmatpush1.msra.mxu0 0.0
  %2315 = vmatprep.subr.mxu0 0.0
  %2316 = vmatpush1.msra.mxu0 0.0
  %2317 = vmatprep.subr.mxu0 0.0
  %2318 = vmatpush1.msra.mxu0 0.0
  %2319 = vmatprep.subr.mxu0 0.0
  %2320 = vmatpush1.msra.mxu0 0.0
  %2321 = vmatprep.subr.mxu0 0.0
  %2322 = vmatpush1.msra.mxu0 0.0
  %2323 = vmatprep.subr.mxu0 0.0
  %2324 = vmatpush1.msra.mxu0 0.0
  %2325 = vmatprep.subr.mxu0 0.0
  %2326 = vmatpush1.msra.mxu0 0.0
  %2327 = vmatprep.subr.mxu0 0.0
  %2328 = vmatpush1.msra.mxu0 0.0
  %2329 = vmatprep.subr.mxu0 0.0
  %2330 = vmatpush1.msra.mxu0 0.0
  %2331 = vmatprep.subr.mxu0 0.0
  %2332 = vmatpush1.msra.mxu0 0.0
  %2333 = vmatprep.subr.mxu0 0.0
  %2334 = vmatpush1.msra.mxu0 0.0
  %2335 = vmatprep.subr.mxu0 0.0
  %2336 = vmatpush1.msra.mxu0 0.0
  %2337 = vmatprep.mubr.f32.mxu0 0.0
  %2338 = vmatmul.mubr.f32.gmra.mrb[0].mxu0 %v2271
  %v2339 = vpop.f32.mrb[0].mxu0
  %v2340 = vadd.f32 %v2267, %v2339
  %v2341 = vpop.f32.mrb[0].mxu0
  %2342 = vdwg.mxu0
  %2343 = vmatprep.subr.mxu0 0.0
  %2344 = vmatpush1.msra.mxu0 %v2094
  %2345 = vmatprep.subr.mxu0 0.0
  %2346 = vmatpush1.msra.mxu0 0.0
  %2347 = vmatprep.subr.mxu0 0.0
  %2348 = vmatpush1.msra.mxu0 0.0
  %2349 = vmatprep.subr.mxu0 0.0
  %2350 = vmatpush1.msra.mxu0 0.0
  %2351 = vmatprep.subr.mxu0 0.0
  %2352 = vmatpush1.msra.mxu0 0.0
  %2353 = vmatprep.subr.mxu0 0.0
  %2354 = vmatpush1.msra.mxu0 0.0
  %2355 = vmatprep.subr.mxu0 0.0
  %2356 = vmatpush1.msra.mxu0 0.0
  %2357 = vmatprep.subr.mxu0 0.0
  %2358 = vmatpush1.msra.mxu0 0.0
  %2359 = vmatprep.subr.mxu0 0.0
  %2360 = vmatpush1.msra.mxu0 0.0
  %2361 = vmatprep.subr.mxu0 0.0
  %2362 = vmatpush1.msra.mxu0 0.0
  %2363 = vmatprep.subr.mxu0 0.0
  %2364 = vmatpush1.msra.mxu0 0.0
  %2365 = vmatprep.subr.mxu0 0.0
  %2366 = vmatpush1.msra.mxu0 0.0
  %2367 = vmatprep.subr.mxu0 0.0
  %2368 = vmatpush1.msra.mxu0 0.0
  %2369 = vmatprep.subr.mxu0 0.0
  %2370 = vmatpush1.msra.mxu0 0.0
  %2371 = vmatprep.subr.mxu0 0.0
  %2372 = vmatpush1.msra.mxu0 0.0
  %2373 = vmatprep.subr.mxu0 0.0
  %2374 = vmatpush1.msra.mxu0 0.0
  %2375 = vmatprep.subr.mxu0 0.0
  %2376 = vmatpush1.msra.mxu0 0.0
  %2377 = vmatprep.subr.mxu0 0.0
  %2378 = vmatpush1.msra.mxu0 0.0
  %2379 = vmatprep.subr.mxu0 0.0
  %2380 = vmatpush1.msra.mxu0 0.0
  %2381 = vmatprep.subr.mxu0 0.0
  %2382 = vmatpush1.msra.mxu0 0.0
  %2383 = vmatprep.subr.mxu0 0.0
  %2384 = vmatpush1.msra.mxu0 0.0
  %2385 = vmatprep.subr.mxu0 0.0
  %2386 = vmatpush1.msra.mxu0 0.0
  %2387 = vmatprep.subr.mxu0 0.0
  %2388 = vmatpush1.msra.mxu0 0.0
  %2389 = vmatprep.subr.mxu0 0.0
  %2390 = vmatpush1.msra.mxu0 0.0
  %2391 = vmatprep.subr.mxu0 0.0
  %2392 = vmatpush1.msra.mxu0 0.0
  %2393 = vmatprep.subr.mxu0 0.0
  %2394 = vmatpush1.msra.mxu0 0.0
  %2395 = vmatprep.subr.mxu0 0.0
  %2396 = vmatpush1.msra.mxu0 0.0
  %2397 = vmatprep.subr.mxu0 0.0
  %2398 = vmatpush1.msra.mxu0 0.0
  %2399 = vmatprep.subr.mxu0 0.0
  %2400 = vmatpush1.msra.mxu0 0.0
  %2401 = vmatprep.subr.mxu0 0.0
  %2402 = vmatpush1.msra.mxu0 0.0
  %2403 = vmatprep.subr.mxu0 0.0
  %2404 = vmatpush1.msra.mxu0 0.0
  %2405 = vmatprep.subr.mxu0 0.0
  %2406 = vmatpush1.msra.mxu0 0.0
  %2407 = vmatprep.mubr.f32.mxu0 0.0
  %2408 = vmatmul.mubr.f32.gmra.mrb[0].mxu0 %v1787
  %v2409 = vpop.f32.mrb[0].mxu0
  %v2410 = vadd.f32 0.0, %v2409
  %v2411 = vpop.f32.mrb[0].mxu0
  %2412 = vdwg.mxu0
  %v2414 = vsel %vm394, %v2410, 0
  %2416 = vmatprep.subr.mxu0 0.0
  %2417 = vmatpush1.msra.mxu0 %v2111
  %2418 = vmatprep.subr.mxu0 0.0
  %2419 = vmatpush1.msra.mxu0 %v2112
  %2420 = vmatprep.subr.mxu0 0.0
  %2421 = vmatpush1.msra.mxu0 %v2113
  %2422 = vmatprep.subr.mxu0 0.0
  %2423 = vmatpush1.msra.mxu0 %v2114
  %2424 = vmatprep.subr.mxu0 0.0
  %2425 = vmatpush1.msra.mxu0 %v2115
  %2426 = vmatprep.subr.mxu0 0.0
  %2427 = vmatpush1.msra.mxu0 %v2116
  %2428 = vmatprep.subr.mxu0 0.0
  %2429 = vmatpush1.msra.mxu0 %v2117
  %2430 = vmatprep.subr.mxu0 0.0
  %2431 = vmatpush1.msra.mxu0 %v2118
  %2432 = vmatprep.subr.mxu0 0.0
  %2433 = vmatpush1.msra.mxu0 0.0
  %2434 = vmatprep.subr.mxu0 0.0
  %2435 = vmatpush1.msra.mxu0 0.0
  %2436 = vmatprep.subr.mxu0 0.0
  %2437 = vmatpush1.msra.mxu0 0.0
  %2438 = vmatprep.subr.mxu0 0.0
  %2439 = vmatpush1.msra.mxu0 0.0
  %2440 = vmatprep.subr.mxu0 0.0
  %2441 = vmatpush1.msra.mxu0 0.0
  %2442 = vmatprep.subr.mxu0 0.0
  %2443 = vmatpush1.msra.mxu0 0.0
  %2444 = vmatprep.subr.mxu0 0.0
  %2445 = vmatpush1.msra.mxu0 0.0
  %2446 = vmatprep.subr.mxu0 0.0
  %2447 = vmatpush1.msra.mxu0 0.0
  %2448 = vmatprep.subr.mxu0 0.0
  %2449 = vmatpush1.msra.mxu0 0.0
  %2450 = vmatprep.subr.mxu0 0.0
  %2451 = vmatpush1.msra.mxu0 0.0
  %2452 = vmatprep.subr.mxu0 0.0
  %2453 = vmatpush1.msra.mxu0 0.0
  %2454 = vmatprep.subr.mxu0 0.0
  %2455 = vmatpush1.msra.mxu0 0.0
  %2456 = vmatprep.subr.mxu0 0.0
  %2457 = vmatpush1.msra.mxu0 0.0
  %2458 = vmatprep.subr.mxu0 0.0
  %2459 = vmatpush1.msra.mxu0 0.0
  %2460 = vmatprep.subr.mxu0 0.0
  %2461 = vmatpush1.msra.mxu0 0.0
  %2462 = vmatprep.subr.mxu0 0.0
  %2463 = vmatpush1.msra.mxu0 0.0
  %2464 = vmatprep.subr.mxu0 0.0
  %2465 = vmatpush1.msra.mxu0 0.0
  %2466 = vmatprep.subr.mxu0 0.0
  %2467 = vmatpush1.msra.mxu0 0.0
  %2468 = vmatprep.subr.mxu0 0.0
  %2469 = vmatpush1.msra.mxu0 0.0
  %2470 = vmatprep.subr.mxu0 0.0
  %2471 = vmatpush1.msra.mxu0 0.0
  %2472 = vmatprep.subr.mxu0 0.0
  %2473 = vmatpush1.msra.mxu0 0.0
  %2474 = vmatprep.subr.mxu0 0.0
  %2475 = vmatpush1.msra.mxu0 0.0
  %2476 = vmatprep.subr.mxu0 0.0
  %2477 = vmatpush1.msra.mxu0 0.0
  %2478 = vmatprep.subr.mxu0 0.0
  %2479 = vmatpush1.msra.mxu0 0.0
  %2480 = vmatprep.mubr.f32.mxu0 0.0
  %2481 = vmatmul.mubr.f32.gmra.mrb[0].mxu0 %v2414
  %v2482 = vpop.f32.mrb[0].mxu0
  %v2483 = vadd.f32 0.0, %v2482
  %v2484 = vpop.f32.mrb[0].mxu0
  %2485 = vdwg.mxu0
  %v2486 = vadd.f32 %v2340, %v2483
  %2487 = vmatprep.subr.mxu0 0.0
  %2488 = vmatpush1.msra.mxu0 %v2094
  %2489 = vmatprep.subr.mxu0 0.0
  %2490 = vmatpush1.msra.mxu0 0.0
  %2491 = vmatprep.subr.mxu0 0.0
  %2492 = vmatpush1.msra.mxu0 0.0
  %2493 = vmatprep.subr.mxu0 0.0
  %2494 = vmatpush1.msra.mxu0 0.0
  %2495 = vmatprep.subr.mxu0 0.0
  %2496 = vmatpush1.msra.mxu0 0.0
  %2497 = vmatprep.subr.mxu0 0.0
  %2498 = vmatpush1.msra.mxu0 0.0
  %2499 = vmatprep.subr.mxu0 0.0
  %2500 = vmatpush1.msra.mxu0 0.0
  %2501 = vmatprep.subr.mxu0 0.0
  %2502 = vmatpush1.msra.mxu0 0.0
  %2503 = vmatprep.subr.mxu0 0.0
  %2504 = vmatpush1.msra.mxu0 0.0
  %2505 = vmatprep.subr.mxu0 0.0
  %2506 = vmatpush1.msra.mxu0 0.0
  %2507 = vmatprep.subr.mxu0 0.0
  %2508 = vmatpush1.msra.mxu0 0.0
  %2509 = vmatprep.subr.mxu0 0.0
  %2510 = vmatpush1.msra.mxu0 0.0
  %2511 = vmatprep.subr.mxu0 0.0
  %2512 = vmatpush1.msra.mxu0 0.0
  %2513 = vmatprep.subr.mxu0 0.0
  %2514 = vmatpush1.msra.mxu0 0.0
  %2515 = vmatprep.subr.mxu0 0.0
  %2516 = vmatpush1.msra.mxu0 0.0
  %2517 = vmatprep.subr.mxu0 0.0
  %2518 = vmatpush1.msra.mxu0 0.0
  %2519 = vmatprep.subr.mxu0 0.0
  %2520 = vmatpush1.msra.mxu0 0.0
  %2521 = vmatprep.subr.mxu0 0.0
  %2522 = vmatpush1.msra.mxu0 0.0
  %2523 = vmatprep.subr.mxu0 0.0
  %2524 = vmatpush1.msra.mxu0 0.0
  %2525 = vmatprep.subr.mxu0 0.0
  %2526 = vmatpush1.msra.mxu0 0.0
  %2527 = vmatprep.subr.mxu0 0.0
  %2528 = vmatpush1.msra.mxu0 0.0
  %2529 = vmatprep.subr.mxu0 0.0
  %2530 = vmatpush1.msra.mxu0 0.0
  %2531 = vmatprep.subr.mxu0 0.0
  %2532 = vmatpush1.msra.mxu0 0.0
  %2533 = vmatprep.subr.mxu0 0.0
  %2534 = vmatpush1.msra.mxu0 0.0
  %2535 = vmatprep.subr.mxu0 0.0
  %2536 = vmatpush1.msra.mxu0 0.0
  %2537 = vmatprep.subr.mxu0 0.0
  %2538 = vmatpush1.msra.mxu0 0.0
  %2539 = vmatprep.subr.mxu0 0.0
  %2540 = vmatpush1.msra.mxu0 0.0
  %2541 = vmatprep.subr.mxu0 0.0
  %2542 = vmatpush1.msra.mxu0 0.0
  %2543 = vmatprep.subr.mxu0 0.0
  %2544 = vmatpush1.msra.mxu0 0.0
  %2545 = vmatprep.subr.mxu0 0.0
  %2546 = vmatpush1.msra.mxu0 0.0
  %2547 = vmatprep.subr.mxu0 0.0
  %2548 = vmatpush1.msra.mxu0 0.0
  %2549 = vmatprep.subr.mxu0 0.0
  %2550 = vmatpush1.msra.mxu0 0.0
  %2551 = vmatprep.mubr.f32.mxu0 0.0
  %2552 = vmatmul.mubr.f32.gmra.mrb[0].mxu0 %v1937
  %v2553 = vpop.f32.mrb[0].mxu0
  %v2554 = vadd.f32 0.0, %v2553
  %v2555 = vpop.f32.mrb[0].mxu0
  %2556 = vdwg.mxu0
  %v2558 = vsel %vm394, %v2554, 0
  %2560 = vmatprep.subr.mxu0 0.0
  %2561 = vmatpush1.msra.mxu0 %v2119
  %2562 = vmatprep.subr.mxu0 0.0
  %2563 = vmatpush1.msra.mxu0 %v2120
  %2564 = vmatprep.subr.mxu0 0.0
  %2565 = vmatpush1.msra.mxu0 %v2121
  %2566 = vmatprep.subr.mxu0 0.0
  %2567 = vmatpush1.msra.mxu0 %v2122
  %2568 = vmatprep.subr.mxu0 0.0
  %2569 = vmatpush1.msra.mxu0 %v2123
  %2570 = vmatprep.subr.mxu0 0.0
  %2571 = vmatpush1.msra.mxu0 %v2124
  %2572 = vmatprep.subr.mxu0 0.0
  %2573 = vmatpush1.msra.mxu0 %v2125
  %2574 = vmatprep.subr.mxu0 0.0
  %2575 = vmatpush1.msra.mxu0 %v2126
  %2576 = vmatprep.subr.mxu0 0.0
  %2577 = vmatpush1.msra.mxu0 0.0
  %2578 = vmatprep.subr.mxu0 0.0
  %2579 = vmatpush1.msra.mxu0 0.0
  %2580 = vmatprep.subr.mxu0 0.0
  %2581 = vmatpush1.msra.mxu0 0.0
  %2582 = vmatprep.subr.mxu0 0.0
  %2583 = vmatpush1.msra.mxu0 0.0
  %2584 = vmatprep.subr.mxu0 0.0
  %2585 = vmatpush1.msra.mxu0 0.0
  %2586 = vmatprep.subr.mxu0 0.0
  %2587 = vmatpush1.msra.mxu0 0.0
  %2588 = vmatprep.subr.mxu0 0.0
  %2589 = vmatpush1.msra.mxu0 0.0
  %2590 = vmatprep.subr.mxu0 0.0
  %2591 = vmatpush1.msra.mxu0 0.0
  %2592 = vmatprep.subr.mxu0 0.0
  %2593 = vmatpush1.msra.mxu0 0.0
  %2594 = vmatprep.subr.mxu0 0.0
  %2595 = vmatpush1.msra.mxu0 0.0
  %2596 = vmatprep.subr.mxu0 0.0
  %2597 = vmatpush1.msra.mxu0 0.0
  %2598 = vmatprep.subr.mxu0 0.0
  %2599 = vmatpush1.msra.mxu0 0.0
  %2600 = vmatprep.subr.mxu0 0.0
  %2601 = vmatpush1.msra.mxu0 0.0
  %2602 = vmatprep.subr.mxu0 0.0
  %2603 = vmatpush1.msra.mxu0 0.0
  %2604 = vmatprep.subr.mxu0 0.0
  %2605 = vmatpush1.msra.mxu0 0.0
  %2606 = vmatprep.subr.mxu0 0.0
  %2607 = vmatpush1.msra.mxu0 0.0
  %2608 = vmatprep.subr.mxu0 0.0
  %2609 = vmatpush1.msra.mxu0 0.0
  %2610 = vmatprep.subr.mxu0 0.0
  %2611 = vmatpush1.msra.mxu0 0.0
  %2612 = vmatprep.subr.mxu0 0.0
  %2613 = vmatpush1.msra.mxu0 0.0
  %2614 = vmatprep.subr.mxu0 0.0
  %2615 = vmatpush1.msra.mxu0 0.0
  %2616 = vmatprep.subr.mxu0 0.0
  %2617 = vmatpush1.msra.mxu0 0.0
  %2618 = vmatprep.subr.mxu0 0.0
  %2619 = vmatpush1.msra.mxu0 0.0
  %2620 = vmatprep.subr.mxu0 0.0
  %2621 = vmatpush1.msra.mxu0 0.0
  %2622 = vmatprep.subr.mxu0 0.0
  %2623 = vmatpush1.msra.mxu0 0.0
  %2624 = vmatprep.mubr.f32.mxu0 0.0
  %2625 = vmatmul.mubr.f32.gmra.mrb[0].mxu0 %v2558
  %v2626 = vpop.f32.mrb[0].mxu0
  %v2627 = vadd.f32 0.0, %v2626
  %v2628 = vpop.f32.mrb[0].mxu0
  %2629 = vdwg.mxu0
  %v2630 = vadd.f32 %v2486, %v2627
  %v2631 = vld [vmem:[%s39] sm:$0x1]
  %v2633 = vlaneseq
  %v2634 = vshrl.u32 %v2633, 7
  %v2635 = vsub.s32 0, %v2634
  %v2636 = vrot.slane %v2631, %v2635
  %v2638 = vadd.f32 %v2630, %v2636
  %v2639 = vmax.f32 %v2638, 0.0
  %v2640 = vpack.c.bf16 %v2094, %v2094
  %v2641 = vld [vmem:[%s41] sm:$0xff]
  %v2642 = vld [vmem:[%s41 + $0x8] sm:$0xff]
  %v2643 = vld [vmem:[%s41 + $0x10] sm:$0xff]
  %v2644 = vld [vmem:[%s41 + $0x18] sm:$0xff]
  %v2645 = vld [vmem:[%s41 + $0x20] sm:$0xff]
  %v2646 = vld [vmem:[%s41 + $0x28] sm:$0xff]
  %v2647 = vld [vmem:[%s41 + $0x30] sm:$0xff]
  %v2648 = vld [vmem:[%s41 + $0x38] sm:$0xff]
  %v2649 = vld [vmem:[%s41 + $0x40] sm:$0xff]
  %v2650 = vld [vmem:[%s41 + $0x48] sm:$0xff]
  %v2651 = vld [vmem:[%s41 + $0x50] sm:$0xff]
  %v2652 = vld [vmem:[%s41 + $0x58] sm:$0xff]
  %v2653 = vld [vmem:[%s41 + $0x60] sm:$0xff]
  %v2654 = vld [vmem:[%s41 + $0x68] sm:$0xff]
  %v2655 = vld [vmem:[%s41 + $0x70] sm:$0xff]
  %v2656 = vld [vmem:[%s41 + $0x78] sm:$0xff]
  %v2657 = vpack.c.bf16 %v2639, %v2639
  %v2658 = vld [vmem:[%s43] sm:$0xff]
  %v2659 = vld [vmem:[%s43 + $0x8] sm:$0xff]
  %v2660 = vld [vmem:[%s43 + $0x10] sm:$0xff]
  %v2661 = vld [vmem:[%s43 + $0x18] sm:$0xff]
  %v2662 = vld [vmem:[%s43 + $0x20] sm:$0xff]
  %v2663 = vld [vmem:[%s43 + $0x28] sm:$0xff]
  %v2664 = vld [vmem:[%s43 + $0x30] sm:$0xff]
  %v2665 = vld [vmem:[%s43 + $0x38] sm:$0xff]
  %v2666 = vld [vmem:[%s43 + $0x40] sm:$0xff]
  %v2667 = vld [vmem:[%s43 + $0x48] sm:$0xff]
  %v2668 = vld [vmem:[%s43 + $0x50] sm:$0xff]
  %v2669 = vld [vmem:[%s43 + $0x58] sm:$0xff]
  %v2670 = vld [vmem:[%s43 + $0x60] sm:$0xff]
  %v2671 = vld [vmem:[%s43 + $0x68] sm:$0xff]
  %v2672 = vld [vmem:[%s43 + $0x70] sm:$0xff]
  %v2673 = vld [vmem:[%s43 + $0x78] sm:$0xff]
  %v2674 = vld [vmem:[%s43 + $0x80] sm:$0xff]
  %v2675 = vld [vmem:[%s43 + $0x88] sm:$0xff]
  %v2676 = vld [vmem:[%s43 + $0x90] sm:$0xff]
  %v2677 = vld [vmem:[%s43 + $0x98] sm:$0xff]
  %v2678 = vld [vmem:[%s43 + $0xa0] sm:$0xff]
  %v2679 = vld [vmem:[%s43 + $0xa8] sm:$0xff]
  %v2680 = vld [vmem:[%s43 + $0xb0] sm:$0xff]
  %v2681 = vld [vmem:[%s43 + $0xb8] sm:$0xff]
  %v2682 = vld [vmem:[%s43 + $0xc0] sm:$0xff]
  %v2683 = vld [vmem:[%s43 + $0xc8] sm:$0xff]
  %v2684 = vld [vmem:[%s43 + $0xd0] sm:$0xff]
  %v2685 = vld [vmem:[%s43 + $0xd8] sm:$0xff]
  %v2686 = vld [vmem:[%s43 + $0xe0] sm:$0xff]
  %v2687 = vld [vmem:[%s43 + $0xe8] sm:$0xff]
  %v2688 = vld [vmem:[%s43 + $0xf0] sm:$0xff]
  %v2689 = vld [vmem:[%s43 + $0xf8] sm:$0xff]
  %v2722 = vunpack.c.l.b16 %v2658
  %v2723 = vunpack.c.h.b16 %v2658
  %v2724 = vunpack.c.l.b16 %v2659
  %v2725 = vunpack.c.h.b16 %v2659
  %v2726 = vunpack.c.l.b16 %v2660
  %v2727 = vunpack.c.h.b16 %v2660
  %v2728 = vunpack.c.l.b16 %v2661
  %v2729 = vunpack.c.h.b16 %v2661
  %v2730 = vunpack.c.l.b16 %v2662
  %v2731 = vunpack.c.h.b16 %v2662
  %v2732 = vunpack.c.l.b16 %v2663
  %v2733 = vunpack.c.h.b16 %v2663
  %v2734 = vunpack.c.l.b16 %v2664
  %v2735 = vunpack.c.h.b16 %v2664
  %v2736 = vunpack.c.l.b16 %v2665
  %v2737 = vunpack.c.h.b16 %v2665
  %v2738 = vunpack.c.l.b16 %v2666
  %v2739 = vunpack.c.h.b16 %v2666
  %v2740 = vunpack.c.l.b16 %v2667
  %v2741 = vunpack.c.h.b16 %v2667
  %v2742 = vunpack.c.l.b16 %v2668
  %v2743 = vunpack.c.h.b16 %v2668
  %v2744 = vunpack.c.l.b16 %v2669
  %v2745 = vunpack.c.h.b16 %v2669
  %v2746 = vunpack.c.l.b16 %v2670
  %v2747 = vunpack.c.h.b16 %v2670
  %v2748 = vunpack.c.l.b16 %v2671
  %v2749 = vunpack.c.h.b16 %v2671
  %v2750 = vunpack.c.l.b16 %v2672
  %v2751 = vunpack.c.h.b16 %v2672
  %v2752 = vunpack.c.l.b16 %v2673
  %v2753 = vunpack.c.h.b16 %v2673
  %v2754 = vunpack.c.l.b16 %v2674
  %v2755 = vunpack.c.h.b16 %v2674
  %v2756 = vunpack.c.l.b16 %v2675
  %v2757 = vunpack.c.h.b16 %v2675
  %v2758 = vunpack.c.l.b16 %v2676
  %v2759 = vunpack.c.h.b16 %v2676
  %v2760 = vunpack.c.l.b16 %v2677
  %v2761 = vunpack.c.h.b16 %v2677
  %v2762 = vunpack.c.l.b16 %v2678
  %v2763 = vunpack.c.h.b16 %v2678
  %v2764 = vunpack.c.l.b16 %v2679
  %v2765 = vunpack.c.h.b16 %v2679
  %v2766 = vunpack.c.l.b16 %v2680
  %v2767 = vunpack.c.h.b16 %v2680
  %v2768 = vunpack.c.l.b16 %v2681
  %v2769 = vunpack.c.h.b16 %v2681
  %v2770 = vunpack.c.l.b16 %v2682
  %v2771 = vunpack.c.h.b16 %v2682
  %v2772 = vunpack.c.l.b16 %v2683
  %v2773 = vunpack.c.h.b16 %v2683
  %v2774 = vunpack.c.l.b16 %v2684
  %v2775 = vunpack.c.h.b16 %v2684
  %v2776 = vunpack.c.l.b16 %v2685
  %v2777 = vunpack.c.h.b16 %v2685
  %v2778 = vunpack.c.l.b16 %v2686
  %v2779 = vunpack.c.h.b16 %v2686
  %v2780 = vunpack.c.l.b16 %v2687
  %v2781 = vunpack.c.h.b16 %v2687
  %v2782 = vunpack.c.l.b16 %v2688
  %v2783 = vunpack.c.h.b16 %v2688
  %v2784 = vunpack.c.l.b16 %v2689
  %v2785 = vunpack.c.h.b16 %v2689
  %v2786 = vpack.c.b16 %v2726, %v2722
  %v2787 = vpack.c.b16 %v2727, %v2723
  %v2788 = vpack.c.b16 %v2728, %v2724
  %v2789 = vpack.c.b16 %v2729, %v2725
  %v2790 = vpack.c.b16 %v2734, %v2730
  %v2791 = vpack.c.b16 %v2735, %v2731
  %v2792 = vpack.c.b16 %v2736, %v2732
  %v2793 = vpack.c.b16 %v2737, %v2733
  %v2794 = vpack.c.b16 %v2742, %v2738
  %v2795 = vpack.c.b16 %v2743, %v2739
  %v2796 = vpack.c.b16 %v2744, %v2740
  %v2797 = vpack.c.b16 %v2745, %v2741
  %v2798 = vpack.c.b16 %v2750, %v2746
  %v2799 = vpack.c.b16 %v2751, %v2747
  %v2800 = vpack.c.b16 %v2752, %v2748
  %v2801 = vpack.c.b16 %v2753, %v2749
  %v2802 = vpack.c.b16 %v2758, %v2754
  %v2803 = vpack.c.b16 %v2759, %v2755
  %v2804 = vpack.c.b16 %v2760, %v2756
  %v2805 = vpack.c.b16 %v2761, %v2757
  %v2806 = vpack.c.b16 %v2766, %v2762
  %v2807 = vpack.c.b16 %v2767, %v2763
  %v2808 = vpack.c.b16 %v2768, %v2764
  %v2809 = vpack.c.b16 %v2769, %v2765
  %v2810 = vpack.c.b16 %v2774, %v2770
  %v2811 = vpack.c.b16 %v2775, %v2771
  %v2812 = vpack.c.b16 %v2776, %v2772
  %v2813 = vpack.c.b16 %v2777, %v2773
  %v2814 = vpack.c.b16 %v2782, %v2778
  %v2815 = vpack.c.b16 %v2783, %v2779
  %v2816 = vpack.c.b16 %v2784, %v2780
  %v2817 = vpack.c.b16 %v2785, %v2781
  %2850 = vmatprep.subr.bf16.mxu0 %v2787
  %2851 = vmatpush1.bf16.msra.mxu0 %v2786
  %2852 = vmatprep.subr.bf16.mxu0 %v2791
  %2853 = vmatpush1.bf16.msra.mxu0 %v2790
  %2854 = vmatprep.subr.bf16.mxu0 %v2795
  %2855 = vmatpush1.bf16.msra.mxu0 %v2794
  %2856 = vmatprep.subr.bf16.mxu0 %v2799
  %2857 = vmatpush1.bf16.msra.mxu0 %v2798
  %2858 = vmatprep.subr.bf16.mxu0 %v2803
  %2859 = vmatpush1.bf16.msra.mxu0 %v2802
  %2860 = vmatprep.subr.bf16.mxu0 %v2807
  %2861 = vmatpush1.bf16.msra.mxu0 %v2806
  %2862 = vmatprep.subr.bf16.mxu0 %v2811
  %2863 = vmatpush1.bf16.msra.mxu0 %v2810
  %2864 = vmatprep.subr.bf16.mxu0 %v2815
  %2865 = vmatpush1.bf16.msra.mxu0 %v2814
  %2866 = vmatprep.subr.bf16.mxu0 0
  %2867 = vmatpush1.bf16.msra.mxu0 0
  %2868 = vmatprep.subr.bf16.mxu0 0
  %2869 = vmatpush1.bf16.msra.mxu0 0
  %2870 = vmatprep.subr.bf16.mxu0 0
  %2871 = vmatpush1.bf16.msra.mxu0 0
  %2872 = vmatprep.subr.bf16.mxu0 0
  %2873 = vmatpush1.bf16.msra.mxu0 0
  %2874 = vmatprep.subr.bf16.mxu0 0
  %2875 = vmatpush1.bf16.msra.mxu0 0
  %2876 = vmatprep.subr.bf16.mxu0 0
  %2877 = vmatpush1.bf16.msra.mxu0 0
  %2878 = vmatprep.subr.bf16.mxu0 0
  %2879 = vmatpush1.bf16.msra.mxu0 0
  %2880 = vmatprep.subr.bf16.mxu0 0
  %2881 = vmatpush1.bf16.msra.mxu0 0
  %2882 = vmatprep.mubr.bf16.mxu0 0
  %2883 = vmatmul.mubr.bf16.gmra.mrb[0].mxu0 %v2657
  %v2884 = vpop.f32.mrb[0].mxu0
  %v2885 = vadd.f32 0.0, %v2884
  %v2886 = vpop.f32.mrb[0].mxu0
  %v2887 = vadd.f32 0.0, %v2886
  %v2888 = vpop.f32.mrb[0].mxu0
  %v2889 = vpop.f32.mrb[0].mxu0
  %2890 = vdwg.mxu0
  %2891 = vmatprep.subr.bf16.mxu0 %v2789
  %2892 = vmatpush1.bf16.msra.mxu0 %v2788
  %2893 = vmatprep.subr.bf16.mxu0 %v2793
  %2894 = vmatpush1.bf16.msra.mxu0 %v2792
  %2895 = vmatprep.subr.bf16.mxu0 %v2797
  %2896 = vmatpush1.bf16.msra.mxu0 %v2796
  %2897 = vmatprep.subr.bf16.mxu0 %v2801
  %2898 = vmatpush1.bf16.msra.mxu0 %v2800
  %2899 = vmatprep.subr.bf16.mxu0 %v2805
  %2900 = vmatpush1.bf16.msra.mxu0 %v2804
  %2901 = vmatprep.subr.bf16.mxu0 %v2809
  %2902 = vmatpush1.bf16.msra.mxu0 %v2808
  %2903 = vmatprep.subr.bf16.mxu0 %v2813
  %2904 = vmatpush1.bf16.msra.mxu0 %v2812
  %2905 = vmatprep.subr.bf16.mxu0 %v2817
  %2906 = vmatpush1.bf16.msra.mxu0 %v2816
  %2907 = vmatprep.subr.bf16.mxu0 0
  %2908 = vmatpush1.bf16.msra.mxu0 0
  %2909 = vmatprep.subr.bf16.mxu0 0
  %2910 = vmatpush1.bf16.msra.mxu0 0
  %2911 = vmatprep.subr.bf16.mxu0 0
  %2912 = vmatpush1.bf16.msra.mxu0 0
  %2913 = vmatprep.subr.bf16.mxu0 0
  %2914 = vmatpush1.bf16.msra.mxu0 0
  %2915 = vmatprep.subr.bf16.mxu0 0
  %2916 = vmatpush1.bf16.msra.mxu0 0
  %2917 = vmatprep.subr.bf16.mxu0 0
  %2918 = vmatpush1.bf16.msra.mxu0 0
  %2919 = vmatprep.subr.bf16.mxu0 0
  %2920 = vmatpush1.bf16.msra.mxu0 0
  %2921 = vmatprep.subr.bf16.mxu0 0
  %2922 = vmatpush1.bf16.msra.mxu0 0
  %2923 = vmatprep.mubr.bf16.mxu0 0
  %2924 = vmatmul.mubr.bf16.gmra.mrb[0].mxu0 %v2657
  %v2925 = vpop.f32.mrb[0].mxu0
  %v2926 = vadd.f32 0.0, %v2925
  %v2927 = vpop.f32.mrb[0].mxu0
  %v2928 = vadd.f32 0.0, %v2927
  %v2929 = vpop.f32.mrb[0].mxu0
  %v2930 = vpop.f32.mrb[0].mxu0
  %2931 = vdwg.mxu0
  %v2948 = vunpack.c.l.b16 %v2641
  %v2949 = vunpack.c.h.b16 %v2641
  %v2950 = vunpack.c.l.b16 %v2642
  %v2951 = vunpack.c.h.b16 %v2642
  %v2952 = vunpack.c.l.b16 %v2643
  %v2953 = vunpack.c.h.b16 %v2643
  %v2954 = vunpack.c.l.b16 %v2644
  %v2955 = vunpack.c.h.b16 %v2644
  %v2956 = vunpack.c.l.b16 %v2645
  %v2957 = vunpack.c.h.b16 %v2645
  %v2958 = vunpack.c.l.b16 %v2646
  %v2959 = vunpack.c.h.b16 %v2646
  %v2960 = vunpack.c.l.b16 %v2647
  %v2961 = vunpack.c.h.b16 %v2647
  %v2962 = vunpack.c.l.b16 %v2648
  %v2963 = vunpack.c.h.b16 %v2648
  %v2964 = vunpack.c.l.b16 %v2649
  %v2965 = vunpack.c.h.b16 %v2649
  %v2966 = vunpack.c.l.b16 %v2650
  %v2967 = vunpack.c.h.b16 %v2650
  %v2968 = vunpack.c.l.b16 %v2651
  %v2969 = vunpack.c.h.b16 %v2651
  %v2970 = vunpack.c.l.b16 %v2652
  %v2971 = vunpack.c.h.b16 %v2652
  %v2972 = vunpack.c.l.b16 %v2653
  %v2973 = vunpack.c.h.b16 %v2653
  %v2974 = vunpack.c.l.b16 %v2654
  %v2975 = vunpack.c.h.b16 %v2654
  %v2976 = vunpack.c.l.b16 %v2655
  %v2977 = vunpack.c.h.b16 %v2655
  %v2978 = vunpack.c.l.b16 %v2656
  %v2979 = vunpack.c.h.b16 %v2656
  %v2980 = vpack.c.b16 %v2952, %v2948
  %v2981 = vpack.c.b16 %v2953, %v2949
  %v2982 = vpack.c.b16 %v2954, %v2950
  %v2983 = vpack.c.b16 %v2955, %v2951
  %v2984 = vpack.c.b16 %v2960, %v2956
  %v2985 = vpack.c.b16 %v2961, %v2957
  %v2986 = vpack.c.b16 %v2962, %v2958
  %v2987 = vpack.c.b16 %v2963, %v2959
  %v2988 = vpack.c.b16 %v2968, %v2964
  %v2989 = vpack.c.b16 %v2969, %v2965
  %v2990 = vpack.c.b16 %v2970, %v2966
  %v2991 = vpack.c.b16 %v2971, %v2967
  %v2992 = vpack.c.b16 %v2976, %v2972
  %v2993 = vpack.c.b16 %v2977, %v2973
  %v2994 = vpack.c.b16 %v2978, %v2974
  %v2995 = vpack.c.b16 %v2979, %v2975
  %v3013 = vsel %vm394, %v2640, 0
  %3015 = vmatprep.subr.bf16.mxu0 %v2981
  %3016 = vmatpush1.bf16.msra.mxu0 %v2980
  %3017 = vmatprep.subr.bf16.mxu0 %v2985
  %3018 = vmatpush1.bf16.msra.mxu0 %v2984
  %3019 = vmatprep.subr.bf16.mxu0 %v2989
  %3020 = vmatpush1.bf16.msra.mxu0 %v2988
  %3021 = vmatprep.subr.bf16.mxu0 %v2993
  %3022 = vmatpush1.bf16.msra.mxu0 %v2992
  %3023 = vmatprep.subr.bf16.mxu0 0
  %3024 = vmatpush1.bf16.msra.mxu0 0
  %3025 = vmatprep.subr.bf16.mxu0 0
  %3026 = vmatpush1.bf16.msra.mxu0 0
  %3027 = vmatprep.subr.bf16.mxu0 0
  %3028 = vmatpush1.bf16.msra.mxu0 0
  %3029 = vmatprep.subr.bf16.mxu0 0
  %3030 = vmatpush1.bf16.msra.mxu0 0
  %3031 = vmatprep.subr.bf16.mxu0 0
  %3032 = vmatpush1.bf16.msra.mxu0 0
  %3033 = vmatprep.subr.bf16.mxu0 0
  %3034 = vmatpush1.bf16.msra.mxu0 0
  %3035 = vmatprep.subr.bf16.mxu0 0
  %3036 = vmatpush1.bf16.msra.mxu0 0
  %3037 = vmatprep.subr.bf16.mxu0 0
  %3038 = vmatpush1.bf16.msra.mxu0 0
  %3039 = vmatprep.subr.bf16.mxu0 0
  %3040 = vmatpush1.bf16.msra.mxu0 0
  %3041 = vmatprep.subr.bf16.mxu0 0
  %3042 = vmatpush1.bf16.msra.mxu0 0
  %3043 = vmatprep.subr.bf16.mxu0 0
  %3044 = vmatpush1.bf16.msra.mxu0 0
  %3045 = vmatprep.subr.bf16.mxu0 0
  %3046 = vmatpush1.bf16.msra.mxu0 0
  %3047 = vmatprep.mubr.bf16.mxu0 0
  %3048 = vmatmul.mubr.bf16.gmra.mrb[0].mxu0 %v3013
  %v3049 = vpop.f32.mrb[0].mxu0
  %v3050 = vadd.f32 %v2885, %v3049
  %v3051 = vpop.f32.mrb[0].mxu0
  %v3052 = vadd.f32 %v2887, %v3051
  %v3053 = vpop.f32.mrb[0].mxu0
  %v3054 = vpop.f32.mrb[0].mxu0
  %3055 = vdwg.mxu0
  %3056 = vmatprep.subr.bf16.mxu0 %v2983
  %3057 = vmatpush1.bf16.msra.mxu0 %v2982
  %3058 = vmatprep.subr.bf16.mxu0 %v2987
  %3059 = vmatpush1.bf16.msra.mxu0 %v2986
  %3060 = vmatprep.subr.bf16.mxu0 %v2991
  %3061 = vmatpush1.bf16.msra.mxu0 %v2990
  %3062 = vmatprep.subr.bf16.mxu0 %v2995
  %3063 = vmatpush1.bf16.msra.mxu0 %v2994
  %3064 = vmatprep.subr.bf16.mxu0 0
  %3065 = vmatpush1.bf16.msra.mxu0 0
  %3066 = vmatprep.subr.bf16.mxu0 0
  %3067 = vmatpush1.bf16.msra.mxu0 0
  %3068 = vmatprep.subr.bf16.mxu0 0
  %3069 = vmatpush1.bf16.msra.mxu0 0
  %3070 = vmatprep.subr.bf16.mxu0 0
  %3071 = vmatpush1.bf16.msra.mxu0 0
  %3072 = vmatprep.subr.bf16.mxu0 0
  %3073 = vmatpush1.bf16.msra.mxu0 0
  %3074 = vmatprep.subr.bf16.mxu0 0
  %3075 = vmatpush1.bf16.msra.mxu0 0
  %3076 = vmatprep.subr.bf16.mxu0 0
  %3077 = vmatpush1.bf16.msra.mxu0 0
  %3078 = vmatprep.subr.bf16.mxu0 0
  %3079 = vmatpush1.bf16.msra.mxu0 0
  %3080 = vmatprep.subr.bf16.mxu0 0
  %3081 = vmatpush1.bf16.msra.mxu0 0
  %3082 = vmatprep.subr.bf16.mxu0 0
  %3083 = vmatpush1.bf16.msra.mxu0 0
  %3084 = vmatprep.subr.bf16.mxu0 0
  %3085 = vmatpush1.bf16.msra.mxu0 0
  %3086 = vmatprep.subr.bf16.mxu0 0
  %3087 = vmatpush1.bf16.msra.mxu0 0
  %3088 = vmatprep.mubr.bf16.mxu0 0
  %3089 = vmatmul.mubr.bf16.gmra.mrb[0].mxu0 %v3013
  %v3090 = vpop.f32.mrb[0].mxu0
  %v3091 = vadd.f32 %v2926, %v3090
  %v3092 = vpop.f32.mrb[0].mxu0
  %v3093 = vadd.f32 %v2928, %v3092
  %v3094 = vpop.f32.mrb[0].mxu0
  %v3095 = vpop.f32.mrb[0].mxu0
  %3096 = vdwg.mxu0
  %v3097 = vld [vmem:[%s45] sm:$0xf]
  %v3099 = vlaneseq
  %v3100 = vshrl.u32 %v3099, 7
  %v3101 = vsub.s32 0, %v3100
  %v3102 = vrot.slane %v3097, %v3101
  %v3103 = vlaneseq
  %v3104 = vshrl.u32 %v3103, 7
  %v3105 = vsub.s32 1, %v3104
  %v3106 = vrot.slane %v3097, %v3105
  %v3107 = vlaneseq
  %v3108 = vshrl.u32 %v3107, 7
  %v3109 = vsub.s32 2, %v3108
  %v3110 = vrot.slane %v3097, %v3109
  %v3111 = vlaneseq
  %v3112 = vshrl.u32 %v3111, 7
  %v3113 = vsub.s32 3, %v3112
  %v3114 = vrot.slane %v3097, %v3113
  %v3119 = vadd.f32 %v3050, %v3102
  %v3120 = vadd.f32 %v3052, %v3106
  %v3121 = vadd.f32 %v3091, %v3110
  %v3122 = vadd.f32 %v3093, %v3114
  %v3123 = vmax.f32 %v3119, 0.0
  %v3124 = vmax.f32 %v3120, 0.0
  %v3125 = vmax.f32 %v3121, 0.0
  %v3126 = vmax.f32 %v3122, 0.0
  %v3127 = vpack.c.bf16 %v1546, %v1546
  %v3128 = vpack.c.bf16 %v1547, %v1547
  %v3129 = vpack.c.bf16 %v1548, %v1548
  %v3130 = vpack.c.bf16 %v1549, %v1549
  %v3131 = vld [vmem:[%s47] sm:$0xff]
  %v3132 = vld [vmem:[%s47 + $0x8] sm:$0xff]
  %v3133 = vld [vmem:[%s47 + $0x10] sm:$0xff]
  %v3134 = vld [vmem:[%s47 + $0x18] sm:$0xff]
  %v3135 = vld [vmem:[%s47 + $0x20] sm:$0xff]
  %v3136 = vld [vmem:[%s47 + $0x28] sm:$0xff]
  %v3137 = vld [vmem:[%s47 + $0x30] sm:$0xff]
  %v3138 = vld [vmem:[%s47 + $0x38] sm:$0xff]
  %v3139 = vld [vmem:[%s47 + $0x40] sm:$0xff]
  %v3140 = vld [vmem:[%s47 + $0x48] sm:$0xff]
  %v3141 = vld [vmem:[%s47 + $0x50] sm:$0xff]
  %v3142 = vld [vmem:[%s47 + $0x58] sm:$0xff]
  %v3143 = vld [vmem:[%s47 + $0x60] sm:$0xff]
  %v3144 = vld [vmem:[%s47 + $0x68] sm:$0xff]
  %v3145 = vld [vmem:[%s47 + $0x70] sm:$0xff]
  %v3146 = vld [vmem:[%s47 + $0x78] sm:$0xff]
  %v3147 = vld [vmem:[%s47 + $0x80] sm:$0xff]
  %v3148 = vld [vmem:[%s47 + $0x88] sm:$0xff]
  %v3149 = vld [vmem:[%s47 + $0x90] sm:$0xff]
  %v3150 = vld [vmem:[%s47 + $0x98] sm:$0xff]
  %v3151 = vld [vmem:[%s47 + $0xa0] sm:$0xff]
  %v3152 = vld [vmem:[%s47 + $0xa8] sm:$0xff]
  %v3153 = vld [vmem:[%s47 + $0xb0] sm:$0xff]
  %v3154 = vld [vmem:[%s47 + $0xb8] sm:$0xff]
  %v3155 = vld [vmem:[%s47 + $0xc0] sm:$0xff]
  %v3156 = vld [vmem:[%s47 + $0xc8] sm:$0xff]
  %v3157 = vld [vmem:[%s47 + $0xd0] sm:$0xff]
  %v3158 = vld [vmem:[%s47 + $0xd8] sm:$0xff]
  %v3159 = vld [vmem:[%s47 + $0xe0] sm:$0xff]
  %v3160 = vld [vmem:[%s47 + $0xe8] sm:$0xff]
  %v3161 = vld [vmem:[%s47 + $0xf0] sm:$0xff]
  %v3162 = vld [vmem:[%s47 + $0xf8] sm:$0xff]
  %v3163 = vld [vmem:[%s47 + $0x100] sm:$0xff]
  %v3164 = vld [vmem:[%s47 + $0x108] sm:$0xff]
  %v3165 = vld [vmem:[%s47 + $0x110] sm:$0xff]
  %v3166 = vld [vmem:[%s47 + $0x118] sm:$0xff]
  %v3167 = vld [vmem:[%s47 + $0x120] sm:$0xff]
  %v3168 = vld [vmem:[%s47 + $0x128] sm:$0xff]
  %v3169 = vld [vmem:[%s47 + $0x130] sm:$0xff]
  %v3170 = vld [vmem:[%s47 + $0x138] sm:$0xff]
  %v3171 = vld [vmem:[%s47 + $0x140] sm:$0xff]
  %v3172 = vld [vmem:[%s47 + $0x148] sm:$0xff]
  %v3173 = vld [vmem:[%s47 + $0x150] sm:$0xff]
  %v3174 = vld [vmem:[%s47 + $0x158] sm:$0xff]
  %v3175 = vld [vmem:[%s47 + $0x160] sm:$0xff]
  %v3176 = vld [vmem:[%s47 + $0x168] sm:$0xff]
  %v3177 = vld [vmem:[%s47 + $0x170] sm:$0xff]
  %v3178 = vld [vmem:[%s47 + $0x178] sm:$0xff]
  %v3179 = vld [vmem:[%s47 + $0x180] sm:$0xff]
  %v3180 = vld [vmem:[%s47 + $0x188] sm:$0xff]
  %v3181 = vld [vmem:[%s47 + $0x190] sm:$0xff]
  %v3182 = vld [vmem:[%s47 + $0x198] sm:$0xff]
  %v3183 = vld [vmem:[%s47 + $0x1a0] sm:$0xff]
  %v3184 = vld [vmem:[%s47 + $0x1a8] sm:$0xff]
  %v3185 = vld [vmem:[%s47 + $0x1b0] sm:$0xff]
  %v3186 = vld [vmem:[%s47 + $0x1b8] sm:$0xff]
  %v3187 = vld [vmem:[%s47 + $0x1c0] sm:$0xff]
  %v3188 = vld [vmem:[%s47 + $0x1c8] sm:$0xff]
  %v3189 = vld [vmem:[%s47 + $0x1d0] sm:$0xff]
  %v3190 = vld [vmem:[%s47 + $0x1d8] sm:$0xff]
  %v3191 = vld [vmem:[%s47 + $0x1e0] sm:$0xff]
  %v3192 = vld [vmem:[%s47 + $0x1e8] sm:$0xff]
  %v3193 = vld [vmem:[%s47 + $0x1f0] sm:$0xff]
  %v3194 = vld [vmem:[%s47 + $0x1f8] sm:$0xff]
  %v3195 = vld [vmem:[%s47 + $0x200] sm:$0xff]
  %v3196 = vld [vmem:[%s47 + $0x208] sm:$0xff]
  %v3197 = vld [vmem:[%s47 + $0x210] sm:$0xff]
  %v3198 = vld [vmem:[%s47 + $0x218] sm:$0xff]
  %v3199 = vld [vmem:[%s47 + $0x220] sm:$0xff]
  %v3200 = vld [vmem:[%s47 + $0x228] sm:$0xff]
  %v3201 = vld [vmem:[%s47 + $0x230] sm:$0xff]
  %v3202 = vld [vmem:[%s47 + $0x238] sm:$0xff]
  %v3203 = vld [vmem:[%s47 + $0x240] sm:$0xff]
  %v3204 = vld [vmem:[%s47 + $0x248] sm:$0xff]
  %v3205 = vld [vmem:[%s47 + $0x250] sm:$0xff]
  %v3206 = vld [vmem:[%s47 + $0x258] sm:$0xff]
  %v3207 = vld [vmem:[%s47 + $0x260] sm:$0xff]
  %v3208 = vld [vmem:[%s47 + $0x268] sm:$0xff]
  %v3209 = vld [vmem:[%s47 + $0x270] sm:$0xff]
  %v3210 = vld [vmem:[%s47 + $0x278] sm:$0xff]
  %v3211 = vld [vmem:[%s47 + $0x280] sm:$0xff]
  %v3212 = vld [vmem:[%s47 + $0x288] sm:$0xff]
  %v3213 = vld [vmem:[%s47 + $0x290] sm:$0xff]
  %v3214 = vld [vmem:[%s47 + $0x298] sm:$0xff]
  %v3215 = vld [vmem:[%s47 + $0x2a0] sm:$0xff]
  %v3216 = vld [vmem:[%s47 + $0x2a8] sm:$0xff]
  %v3217 = vld [vmem:[%s47 + $0x2b0] sm:$0xff]
  %v3218 = vld [vmem:[%s47 + $0x2b8] sm:$0xff]
  %v3219 = vld [vmem:[%s47 + $0x2c0] sm:$0xff]
  %v3220 = vld [vmem:[%s47 + $0x2c8] sm:$0xff]
  %v3221 = vld [vmem:[%s47 + $0x2d0] sm:$0xff]
  %v3222 = vld [vmem:[%s47 + $0x2d8] sm:$0xff]
  %v3223 = vld [vmem:[%s47 + $0x2e0] sm:$0xff]
  %v3224 = vld [vmem:[%s47 + $0x2e8] sm:$0xff]
  %v3225 = vld [vmem:[%s47 + $0x2f0] sm:$0xff]
  %v3226 = vld [vmem:[%s47 + $0x2f8] sm:$0xff]
  %v3227 = vld [vmem:[%s47 + $0x300] sm:$0xff]
  %v3228 = vld [vmem:[%s47 + $0x308] sm:$0xff]
  %v3229 = vld [vmem:[%s47 + $0x310] sm:$0xff]
  %v3230 = vld [vmem:[%s47 + $0x318] sm:$0xff]
  %v3231 = vld [vmem:[%s47 + $0x320] sm:$0xff]
  %v3232 = vld [vmem:[%s47 + $0x328] sm:$0xff]
  %v3233 = vld [vmem:[%s47 + $0x330] sm:$0xff]
  %v3234 = vld [vmem:[%s47 + $0x338] sm:$0xff]
  %v3235 = vld [vmem:[%s47 + $0x340] sm:$0xff]
  %v3236 = vld [vmem:[%s47 + $0x348] sm:$0xff]
  %v3237 = vld [vmem:[%s47 + $0x350] sm:$0xff]
  %v3238 = vld [vmem:[%s47 + $0x358] sm:$0xff]
  %v3239 = vld [vmem:[%s47 + $0x360] sm:$0xff]
  %v3240 = vld [vmem:[%s47 + $0x368] sm:$0xff]
  %v3241 = vld [vmem:[%s47 + $0x370] sm:$0xff]
  %v3242 = vld [vmem:[%s47 + $0x378] sm:$0xff]
  %v3243 = vld [vmem:[%s47 + $0x380] sm:$0xff]
  %v3244 = vld [vmem:[%s47 + $0x388] sm:$0xff]
  %v3245 = vld [vmem:[%s47 + $0x390] sm:$0xff]
  %v3246 = vld [vmem:[%s47 + $0x398] sm:$0xff]
  %v3247 = vld [vmem:[%s47 + $0x3a0] sm:$0xff]
  %v3248 = vld [vmem:[%s47 + $0x3a8] sm:$0xff]
  %v3249 = vld [vmem:[%s47 + $0x3b0] sm:$0xff]
  %v3250 = vld [vmem:[%s47 + $0x3b8] sm:$0xff]
  %v3251 = vld [vmem:[%s47 + $0x3c0] sm:$0xff]
  %v3252 = vld [vmem:[%s47 + $0x3c8] sm:$0xff]
  %v3253 = vld [vmem:[%s47 + $0x3d0] sm:$0xff]
  %v3254 = vld [vmem:[%s47 + $0x3d8] sm:$0xff]
  %v3255 = vld [vmem:[%s47 + $0x3e0] sm:$0xff]
  %v3256 = vld [vmem:[%s47 + $0x3e8] sm:$0xff]
  %v3257 = vld [vmem:[%s47 + $0x3f0] sm:$0xff]
  %v3258 = vld [vmem:[%s47 + $0x3f8] sm:$0xff]
  %v3259 = vpack.c.bf16 %v3123, %v3123
  %v3260 = vpack.c.bf16 %v3124, %v3124
  %v3261 = vpack.c.bf16 %v3125, %v3125
  %v3262 = vpack.c.bf16 %v3126, %v3126
  %v3263 = vld [vmem:[%s49] sm:$0xff]
  %v3264 = vld [vmem:[%s49 + $0x8] sm:$0xff]
  %v3265 = vld [vmem:[%s49 + $0x10] sm:$0xff]
  %v3266 = vld [vmem:[%s49 + $0x18] sm:$0xff]
  %v3267 = vld [vmem:[%s49 + $0x20] sm:$0xff]
  %v3268 = vld [vmem:[%s49 + $0x28] sm:$0xff]
  %v3269 = vld [vmem:[%s49 + $0x30] sm:$0xff]
  %v3270 = vld [vmem:[%s49 + $0x38] sm:$0xff]
  %v3271 = vld [vmem:[%s49 + $0x40] sm:$0xff]
  %v3272 = vld [vmem:[%s49 + $0x48] sm:$0xff]
  %v3273 = vld [vmem:[%s49 + $0x50] sm:$0xff]
  %v3274 = vld [vmem:[%s49 + $0x58] sm:$0xff]
  %v3275 = vld [vmem:[%s49 + $0x60] sm:$0xff]
  %v3276 = vld [vmem:[%s49 + $0x68] sm:$0xff]
  %v3277 = vld [vmem:[%s49 + $0x70] sm:$0xff]
  %v3278 = vld [vmem:[%s49 + $0x78] sm:$0xff]
  %v3279 = vld [vmem:[%s49 + $0x80] sm:$0xff]
  %v3280 = vld [vmem:[%s49 + $0x88] sm:$0xff]
  %v3281 = vld [vmem:[%s49 + $0x90] sm:$0xff]
  %v3282 = vld [vmem:[%s49 + $0x98] sm:$0xff]
  %v3283 = vld [vmem:[%s49 + $0xa0] sm:$0xff]
  %v3284 = vld [vmem:[%s49 + $0xa8] sm:$0xff]
  %v3285 = vld [vmem:[%s49 + $0xb0] sm:$0xff]
  %v3286 = vld [vmem:[%s49 + $0xb8] sm:$0xff]
  %v3287 = vld [vmem:[%s49 + $0xc0] sm:$0xff]
  %v3288 = vld [vmem:[%s49 + $0xc8] sm:$0xff]
  %v3289 = vld [vmem:[%s49 + $0xd0] sm:$0xff]
  %v3290 = vld [vmem:[%s49 + $0xd8] sm:$0xff]
  %v3291 = vld [vmem:[%s49 + $0xe0] sm:$0xff]
  %v3292 = vld [vmem:[%s49 + $0xe8] sm:$0xff]
  %v3293 = vld [vmem:[%s49 + $0xf0] sm:$0xff]
  %v3294 = vld [vmem:[%s49 + $0xf8] sm:$0xff]
  %v3295 = vld [vmem:[%s49 + $0x100] sm:$0xff]
  %v3296 = vld [vmem:[%s49 + $0x108] sm:$0xff]
  %v3297 = vld [vmem:[%s49 + $0x110] sm:$0xff]
  %v3298 = vld [vmem:[%s49 + $0x118] sm:$0xff]
  %v3299 = vld [vmem:[%s49 + $0x120] sm:$0xff]
  %v3300 = vld [vmem:[%s49 + $0x128] sm:$0xff]
  %v3301 = vld [vmem:[%s49 + $0x130] sm:$0xff]
  %v3302 = vld [vmem:[%s49 + $0x138] sm:$0xff]
  %v3303 = vld [vmem:[%s49 + $0x140] sm:$0xff]
  %v3304 = vld [vmem:[%s49 + $0x148] sm:$0xff]
  %v3305 = vld [vmem:[%s49 + $0x150] sm:$0xff]
  %v3306 = vld [vmem:[%s49 + $0x158] sm:$0xff]
  %v3307 = vld [vmem:[%s49 + $0x160] sm:$0xff]
  %v3308 = vld [vmem:[%s49 + $0x168] sm:$0xff]
  %v3309 = vld [vmem:[%s49 + $0x170] sm:$0xff]
  %v3310 = vld [vmem:[%s49 + $0x178] sm:$0xff]
  %v3311 = vld [vmem:[%s49 + $0x180] sm:$0xff]
  %v3312 = vld [vmem:[%s49 + $0x188] sm:$0xff]
  %v3313 = vld [vmem:[%s49 + $0x190] sm:$0xff]
  %v3314 = vld [vmem:[%s49 + $0x198] sm:$0xff]
  %v3315 = vld [vmem:[%s49 + $0x1a0] sm:$0xff]
  %v3316 = vld [vmem:[%s49 + $0x1a8] sm:$0xff]
  %v3317 = vld [vmem:[%s49 + $0x1b0] sm:$0xff]
  %v3318 = vld [vmem:[%s49 + $0x1b8] sm:$0xff]
  %v3319 = vld [vmem:[%s49 + $0x1c0] sm:$0xff]
  %v3320 = vld [vmem:[%s49 + $0x1c8] sm:$0xff]
  %v3321 = vld [vmem:[%s49 + $0x1d0] sm:$0xff]
  %v3322 = vld [vmem:[%s49 + $0x1d8] sm:$0xff]
  %v3323 = vld [vmem:[%s49 + $0x1e0] sm:$0xff]
  %v3324 = vld [vmem:[%s49 + $0x1e8] sm:$0xff]
  %v3325 = vld [vmem:[%s49 + $0x1f0] sm:$0xff]
  %v3326 = vld [vmem:[%s49 + $0x1f8] sm:$0xff]
  %v3327 = vld [vmem:[%s49 + $0x200] sm:$0xff]
  %v3328 = vld [vmem:[%s49 + $0x208] sm:$0xff]
  %v3329 = vld [vmem:[%s49 + $0x210] sm:$0xff]
  %v3330 = vld [vmem:[%s49 + $0x218] sm:$0xff]
  %v3331 = vld [vmem:[%s49 + $0x220] sm:$0xff]
  %v3332 = vld [vmem:[%s49 + $0x228] sm:$0xff]
  %v3333 = vld [vmem:[%s49 + $0x230] sm:$0xff]
  %v3334 = vld [vmem:[%s49 + $0x238] sm:$0xff]
  %v3335 = vld [vmem:[%s49 + $0x240] sm:$0xff]
  %v3336 = vld [vmem:[%s49 + $0x248] sm:$0xff]
  %v3337 = vld [vmem:[%s49 + $0x250] sm:$0xff]
  %v3338 = vld [vmem:[%s49 + $0x258] sm:$0xff]
  %v3339 = vld [vmem:[%s49 + $0x260] sm:$0xff]
  %v3340 = vld [vmem:[%s49 + $0x268] sm:$0xff]
  %v3341 = vld [vmem:[%s49 + $0x270] sm:$0xff]
  %v3342 = vld [vmem:[%s49 + $0x278] sm:$0xff]
  %v3343 = vld [vmem:[%s49 + $0x280] sm:$0xff]
  %v3344 = vld [vmem:[%s49 + $0x288] sm:$0xff]
  %v3345 = vld [vmem:[%s49 + $0x290] sm:$0xff]
  %v3346 = vld [vmem:[%s49 + $0x298] sm:$0xff]
  %v3347 = vld [vmem:[%s49 + $0x2a0] sm:$0xff]
  %v3348 = vld [vmem:[%s49 + $0x2a8] sm:$0xff]
  %v3349 = vld [vmem:[%s49 + $0x2b0] sm:$0xff]
  %v3350 = vld [vmem:[%s49 + $0x2b8] sm:$0xff]
  %v3351 = vld [vmem:[%s49 + $0x2c0] sm:$0xff]
  %v3352 = vld [vmem:[%s49 + $0x2c8] sm:$0xff]
  %v3353 = vld [vmem:[%s49 + $0x2d0] sm:$0xff]
  %v3354 = vld [vmem:[%s49 + $0x2d8] sm:$0xff]
  %v3355 = vld [vmem:[%s49 + $0x2e0] sm:$0xff]
  %v3356 = vld [vmem:[%s49 + $0x2e8] sm:$0xff]
  %v3357 = vld [vmem:[%s49 + $0x2f0] sm:$0xff]
  %v3358 = vld [vmem:[%s49 + $0x2f8] sm:$0xff]
  %v3359 = vld [vmem:[%s49 + $0x300] sm:$0xff]
  %v3360 = vld [vmem:[%s49 + $0x308] sm:$0xff]
  %v3361 = vld [vmem:[%s49 + $0x310] sm:$0xff]
  %v3362 = vld [vmem:[%s49 + $0x318] sm:$0xff]
  %v3363 = vld [vmem:[%s49 + $0x320] sm:$0xff]
  %v3364 = vld [vmem:[%s49 + $0x328] sm:$0xff]
  %v3365 = vld [vmem:[%s49 + $0x330] sm:$0xff]
  %v3366 = vld [vmem:[%s49 + $0x338] sm:$0xff]
  %v3367 = vld [vmem:[%s49 + $0x340] sm:$0xff]
  %v3368 = vld [vmem:[%s49 + $0x348] sm:$0xff]
  %v3369 = vld [vmem:[%s49 + $0x350] sm:$0xff]
  %v3370 = vld [vmem:[%s49 + $0x358] sm:$0xff]
  %v3371 = vld [vmem:[%s49 + $0x360] sm:$0xff]
  %v3372 = vld [vmem:[%s49 + $0x368] sm:$0xff]
  %v3373 = vld [vmem:[%s49 + $0x370] sm:$0xff]
  %v3374 = vld [vmem:[%s49 + $0x378] sm:$0xff]
  %v3375 = vld [vmem:[%s49 + $0x380] sm:$0xff]
  %v3376 = vld [vmem:[%s49 + $0x388] sm:$0xff]
  %v3377 = vld [vmem:[%s49 + $0x390] sm:$0xff]
  %v3378 = vld [vmem:[%s49 + $0x398] sm:$0xff]
  %v3379 = vld [vmem:[%s49 + $0x3a0] sm:$0xff]
  %v3380 = vld [vmem:[%s49 + $0x3a8] sm:$0xff]
  %v3381 = vld [vmem:[%s49 + $0x3b0] sm:$0xff]
  %v3382 = vld [vmem:[%s49 + $0x3b8] sm:$0xff]
  %v3383 = vld [vmem:[%s49 + $0x3c0] sm:$0xff]
  %v3384 = vld [vmem:[%s49 + $0x3c8] sm:$0xff]
  %v3385 = vld [vmem:[%s49 + $0x3d0] sm:$0xff]
  %v3386 = vld [vmem:[%s49 + $0x3d8] sm:$0xff]
  %v3387 = vld [vmem:[%s49 + $0x3e0] sm:$0xff]
  %v3388 = vld [vmem:[%s49 + $0x3e8] sm:$0xff]
  %v3389 = vld [vmem:[%s49 + $0x3f0] sm:$0xff]
  %v3390 = vld [vmem:[%s49 + $0x3f8] sm:$0xff]
  %v3519 = vunpack.c.l.b16 %v3263
  %v3520 = vunpack.c.h.b16 %v3263
  %v3521 = vunpack.c.l.b16 %v3264
  %v3522 = vunpack.c.h.b16 %v3264
  %v3523 = vunpack.c.l.b16 %v3265
  %v3524 = vunpack.c.h.b16 %v3265
  %v3525 = vunpack.c.l.b16 %v3266
  %v3526 = vunpack.c.h.b16 %v3266
  %v3527 = vunpack.c.l.b16 %v3267
  %v3528 = vunpack.c.h.b16 %v3267
  %v3529 = vunpack.c.l.b16 %v3268
  %v3530 = vunpack.c.h.b16 %v3268
  %v3531 = vunpack.c.l.b16 %v3269
  %v3532 = vunpack.c.h.b16 %v3269
  %v3533 = vunpack.c.l.b16 %v3270
  %v3534 = vunpack.c.h.b16 %v3270
  %v3535 = vunpack.c.l.b16 %v3271
  %v3536 = vunpack.c.h.b16 %v3271
  %v3537 = vunpack.c.l.b16 %v3272
  %v3538 = vunpack.c.h.b16 %v3272
  %v3539 = vunpack.c.l.b16 %v3273
  %v3540 = vunpack.c.h.b16 %v3273
  %v3541 = vunpack.c.l.b16 %v3274
  %v3542 = vunpack.c.h.b16 %v3274
  %v3543 = vunpack.c.l.b16 %v3275
  %v3544 = vunpack.c.h.b16 %v3275
  %v3545 = vunpack.c.l.b16 %v3276
  %v3546 = vunpack.c.h.b16 %v3276
  %v3547 = vunpack.c.l.b16 %v3277
  %v3548 = vunpack.c.h.b16 %v3277
  %v3549 = vunpack.c.l.b16 %v3278
  %v3550 = vunpack.c.h.b16 %v3278
  %v3551 = vunpack.c.l.b16 %v3279
  %v3552 = vunpack.c.h.b16 %v3279
  %v3553 = vunpack.c.l.b16 %v3280
  %v3554 = vunpack.c.h.b16 %v3280
  %v3555 = vunpack.c.l.b16 %v3281
  %v3556 = vunpack.c.h.b16 %v3281
  %v3557 = vunpack.c.l.b16 %v3282
  %v3558 = vunpack.c.h.b16 %v3282
  %v3559 = vunpack.c.l.b16 %v3283
  %v3560 = vunpack.c.h.b16 %v3283
  %v3561 = vunpack.c.l.b16 %v3284
  %v3562 = vunpack.c.h.b16 %v3284
  %v3563 = vunpack.c.l.b16 %v3285
  %v3564 = vunpack.c.h.b16 %v3285
  %v3565 = vunpack.c.l.b16 %v3286
  %v3566 = vunpack.c.h.b16 %v3286
  %v3567 = vunpack.c.l.b16 %v3287
  %v3568 = vunpack.c.h.b16 %v3287
  %v3569 = vunpack.c.l.b16 %v3288
  %v3570 = vunpack.c.h.b16 %v3288
  %v3571 = vunpack.c.l.b16 %v3289
  %v3572 = vunpack.c.h.b16 %v3289
  %v3573 = vunpack.c.l.b16 %v3290
  %v3574 = vunpack.c.h.b16 %v3290
  %v3575 = vunpack.c.l.b16 %v3291
  %v3576 = vunpack.c.h.b16 %v3291
  %v3577 = vunpack.c.l.b16 %v3292
  %v3578 = vunpack.c.h.b16 %v3292
  %v3579 = vunpack.c.l.b16 %v3293
  %v3580 = vunpack.c.h.b16 %v3293
  %v3581 = vunpack.c.l.b16 %v3294
  %v3582 = vunpack.c.h.b16 %v3294
  %v3583 = vunpack.c.l.b16 %v3295
  %v3584 = vunpack.c.h.b16 %v3295
  %v3585 = vunpack.c.l.b16 %v3296
  %v3586 = vunpack.c.h.b16 %v3296
  %v3587 = vunpack.c.l.b16 %v3297
  %v3588 = vunpack.c.h.b16 %v3297
  %v3589 = vunpack.c.l.b16 %v3298
  %v3590 = vunpack.c.h.b16 %v3298
  %v3591 = vunpack.c.l.b16 %v3299
  %v3592 = vunpack.c.h.b16 %v3299
  %v3593 = vunpack.c.l.b16 %v3300
  %v3594 = vunpack.c.h.b16 %v3300
  %v3595 = vunpack.c.l.b16 %v3301
  %v3596 = vunpack.c.h.b16 %v3301
  %v3597 = vunpack.c.l.b16 %v3302
  %v3598 = vunpack.c.h.b16 %v3302
  %v3599 = vunpack.c.l.b16 %v3303
  %v3600 = vunpack.c.h.b16 %v3303
  %v3601 = vunpack.c.l.b16 %v3304
  %v3602 = vunpack.c.h.b16 %v3304
  %v3603 = vunpack.c.l.b16 %v3305
  %v3604 = vunpack.c.h.b16 %v3305
  %v3605 = vunpack.c.l.b16 %v3306
  %v3606 = vunpack.c.h.b16 %v3306
  %v3607 = vunpack.c.l.b16 %v3307
  %v3608 = vunpack.c.h.b16 %v3307
  %v3609 = vunpack.c.l.b16 %v3308
  %v3610 = vunpack.c.h.b16 %v3308
  %v3611 = vunpack.c.l.b16 %v3309
  %v3612 = vunpack.c.h.b16 %v3309
  %v3613 = vunpack.c.l.b16 %v3310
  %v3614 = vunpack.c.h.b16 %v3310
  %v3615 = vunpack.c.l.b16 %v3311
  %v3616 = vunpack.c.h.b16 %v3311
  %v3617 = vunpack.c.l.b16 %v3312
  %v3618 = vunpack.c.h.b16 %v3312
  %v3619 = vunpack.c.l.b16 %v3313
  %v3620 = vunpack.c.h.b16 %v3313
  %v3621 = vunpack.c.l.b16 %v3314
  %v3622 = vunpack.c.h.b16 %v3314
  %v3623 = vunpack.c.l.b16 %v3315
  %v3624 = vunpack.c.h.b16 %v3315
  %v3625 = vunpack.c.l.b16 %v3316
  %v3626 = vunpack.c.h.b16 %v3316
  %v3627 = vunpack.c.l.b16 %v3317
  %v3628 = vunpack.c.h.b16 %v3317
  %v3629 = vunpack.c.l.b16 %v3318
  %v3630 = vunpack.c.h.b16 %v3318
  %v3631 = vunpack.c.l.b16 %v3319
  %v3632 = vunpack.c.h.b16 %v3319
  %v3633 = vunpack.c.l.b16 %v3320
  %v3634 = vunpack.c.h.b16 %v3320
  %v3635 = vunpack.c.l.b16 %v3321
  %v3636 = vunpack.c.h.b16 %v3321
  %v3637 = vunpack.c.l.b16 %v3322
  %v3638 = vunpack.c.h.b16 %v3322
  %v3639 = vunpack.c.l.b16 %v3323
  %v3640 = vunpack.c.h.b16 %v3323
  %v3641 = vunpack.c.l.b16 %v3324
  %v3642 = vunpack.c.h.b16 %v3324
  %v3643 = vunpack.c.l.b16 %v3325
  %v3644 = vunpack.c.h.b16 %v3325
  %v3645 = vunpack.c.l.b16 %v3326
  %v3646 = vunpack.c.h.b16 %v3326
  %v3647 = vunpack.c.l.b16 %v3327
  %v3648 = vunpack.c.h.b16 %v3327
  %v3649 = vunpack.c.l.b16 %v3328
  %v3650 = vunpack.c.h.b16 %v3328
  %v3651 = vunpack.c.l.b16 %v3329
  %v3652 = vunpack.c.h.b16 %v3329
  %v3653 = vunpack.c.l.b16 %v3330
  %v3654 = vunpack.c.h.b16 %v3330
  %v3655 = vunpack.c.l.b16 %v3331
  %v3656 = vunpack.c.h.b16 %v3331
  %v3657 = vunpack.c.l.b16 %v3332
  %v3658 = vunpack.c.h.b16 %v3332
  %v3659 = vunpack.c.l.b16 %v3333
  %v3660 = vunpack.c.h.b16 %v3333
  %v3661 = vunpack.c.l.b16 %v3334
  %v3662 = vunpack.c.h.b16 %v3334
  %v3663 = vunpack.c.l.b16 %v3335
  %v3664 = vunpack.c.h.b16 %v3335
  %v3665 = vunpack.c.l.b16 %v3336
  %v3666 = vunpack.c.h.b16 %v3336
  %v3667 = vunpack.c.l.b16 %v3337
  %v3668 = vunpack.c.h.b16 %v3337
  %v3669 = vunpack.c.l.b16 %v3338
  %v3670 = vunpack.c.h.b16 %v3338
  %v3671 = vunpack.c.l.b16 %v3339
  %v3672 = vunpack.c.h.b16 %v3339
  %v3673 = vunpack.c.l.b16 %v3340
  %v3674 = vunpack.c.h.b16 %v3340
  %v3675 = vunpack.c.l.b16 %v3341
  %v3676 = vunpack.c.h.b16 %v3341
  %v3677 = vunpack.c.l.b16 %v3342
  %v3678 = vunpack.c.h.b16 %v3342
  %v3679 = vunpack.c.l.b16 %v3343
  %v3680 = vunpack.c.h.b16 %v3343
  %v3681 = vunpack.c.l.b16 %v3344
  %v3682 = vunpack.c.h.b16 %v3344
  %v3683 = vunpack.c.l.b16 %v3345
  %v3684 = vunpack.c.h.b16 %v3345
  %v3685 = vunpack.c.l.b16 %v3346
  %v3686 = vunpack.c.h.b16 %v3346
  %v3687 = vunpack.c.l.b16 %v3347
  %v3688 = vunpack.c.h.b16 %v3347
  %v3689 = vunpack.c.l.b16 %v3348
  %v3690 = vunpack.c.h.b16 %v3348
  %v3691 = vunpack.c.l.b16 %v3349
  %v3692 = vunpack.c.h.b16 %v3349
  %v3693 = vunpack.c.l.b16 %v3350
  %v3694 = vunpack.c.h.b16 %v3350
  %v3695 = vunpack.c.l.b16 %v3351
  %v3696 = vunpack.c.h.b16 %v3351
  %v3697 = vunpack.c.l.b16 %v3352
  %v3698 = vunpack.c.h.b16 %v3352
  %v3699 = vunpack.c.l.b16 %v3353
  %v3700 = vunpack.c.h.b16 %v3353
  %v3701 = vunpack.c.l.b16 %v3354
  %v3702 = vunpack.c.h.b16 %v3354
  %v3703 = vunpack.c.l.b16 %v3355
  %v3704 = vunpack.c.h.b16 %v3355
  %v3705 = vunpack.c.l.b16 %v3356
  %v3706 = vunpack.c.h.b16 %v3356
  %v3707 = vunpack.c.l.b16 %v3357
  %v3708 = vunpack.c.h.b16 %v3357
  %v3709 = vunpack.c.l.b16 %v3358
  %v3710 = vunpack.c.h.b16 %v3358
  %v3711 = vunpack.c.l.b16 %v3359
  %v3712 = vunpack.c.h.b16 %v3359
  %v3713 = vunpack.c.l.b16 %v3360
  %v3714 = vunpack.c.h.b16 %v3360
  %v3715 = vunpack.c.l.b16 %v3361
  %v3716 = vunpack.c.h.b16 %v3361
  %v3717 = vunpack.c.l.b16 %v3362
  %v3718 = vunpack.c.h.b16 %v3362
  %v3719 = vunpack.c.l.b16 %v3363
  %v3720 = vunpack.c.h.b16 %v3363
  %v3721 = vunpack.c.l.b16 %v3364
  %v3722 = vunpack.c.h.b16 %v3364
  %v3723 = vunpack.c.l.b16 %v3365
  %v3724 = vunpack.c.h.b16 %v3365
  %v3725 = vunpack.c.l.b16 %v3366
  %v3726 = vunpack.c.h.b16 %v3366
  %v3727 = vunpack.c.l.b16 %v3367
  %v3728 = vunpack.c.h.b16 %v3367
  %v3729 = vunpack.c.l.b16 %v3368
  %v3730 = vunpack.c.h.b16 %v3368
  %v3731 = vunpack.c.l.b16 %v3369
  %v3732 = vunpack.c.h.b16 %v3369
  %v3733 = vunpack.c.l.b16 %v3370
  %v3734 = vunpack.c.h.b16 %v3370
  %v3735 = vunpack.c.l.b16 %v3371
  %v3736 = vunpack.c.h.b16 %v3371
  %v3737 = vunpack.c.l.b16 %v3372
  %v3738 = vunpack.c.h.b16 %v3372
  %v3739 = vunpack.c.l.b16 %v3373
  %v3740 = vunpack.c.h.b16 %v3373
  %v3741 = vunpack.c.l.b16 %v3374
  %v3742 = vunpack.c.h.b16 %v3374
  %v3743 = vunpack.c.l.b16 %v3375
  %v3744 = vunpack.c.h.b16 %v3375
  %v3745 = vunpack.c.l.b16 %v3376
  %v3746 = vunpack.c.h.b16 %v3376
  %v3747 = vunpack.c.l.b16 %v3377
  %v3748 = vunpack.c.h.b16 %v3377
  %v3749 = vunpack.c.l.b16 %v3378
  %v3750 = vunpack.c.h.b16 %v3378
  %v3751 = vunpack.c.l.b16 %v3379
  %v3752 = vunpack.c.h.b16 %v3379
  %v3753 = vunpack.c.l.b16 %v3380
  %v3754 = vunpack.c.h.b16 %v3380
  %v3755 = vunpack.c.l.b16 %v3381
  %v3756 = vunpack.c.h.b16 %v3381
  %v3757 = vunpack.c.l.b16 %v3382
  %v3758 = vunpack.c.h.b16 %v3382
  %v3759 = vunpack.c.l.b16 %v3383
  %v3760 = vunpack.c.h.b16 %v3383
  %v3761 = vunpack.c.l.b16 %v3384
  %v3762 = vunpack.c.h.b16 %v3384
  %v3763 = vunpack.c.l.b16 %v3385
  %v3764 = vunpack.c.h.b16 %v3385
  %v3765 = vunpack.c.l.b16 %v3386
  %v3766 = vunpack.c.h.b16 %v3386
  %v3767 = vunpack.c.l.b16 %v3387
  %v3768 = vunpack.c.h.b16 %v3387
  %v3769 = vunpack.c.l.b16 %v3388
  %v3770 = vunpack.c.h.b16 %v3388
  %v3771 = vunpack.c.l.b16 %v3389
  %v3772 = vunpack.c.h.b16 %v3389
  %v3773 = vunpack.c.l.b16 %v3390
  %v3774 = vunpack.c.h.b16 %v3390
  %v3775 = vpack.c.b16 %v3523, %v3519
  %v3776 = vpack.c.b16 %v3524, %v3520
  %v3777 = vpack.c.b16 %v3525, %v3521
  %v3778 = vpack.c.b16 %v3526, %v3522
  %v3779 = vpack.c.b16 %v3531, %v3527
  %v3780 = vpack.c.b16 %v3532, %v3528
  %v3781 = vpack.c.b16 %v3533, %v3529
  %v3782 = vpack.c.b16 %v3534, %v3530
  %v3783 = vpack.c.b16 %v3539, %v3535
  %v3784 = vpack.c.b16 %v3540, %v3536
  %v3785 = vpack.c.b16 %v3541, %v3537
  %v3786 = vpack.c.b16 %v3542, %v3538
  %v3787 = vpack.c.b16 %v3547, %v3543
  %v3788 = vpack.c.b16 %v3548, %v3544
  %v3789 = vpack.c.b16 %v3549, %v3545
  %v3790 = vpack.c.b16 %v3550, %v3546
  %v3791 = vpack.c.b16 %v3555, %v3551
  %v3792 = vpack.c.b16 %v3556, %v3552
  %v3793 = vpack.c.b16 %v3557, %v3553
  %v3794 = vpack.c.b16 %v3558, %v3554
  %v3795 = vpack.c.b16 %v3563, %v3559
  %v3796 = vpack.c.b16 %v3564, %v3560
  %v3797 = vpack.c.b16 %v3565, %v3561
  %v3798 = vpack.c.b16 %v3566, %v3562
  %v3799 = vpack.c.b16 %v3571, %v3567
  %v3800 = vpack.c.b16 %v3572, %v3568
  %v3801 = vpack.c.b16 %v3573, %v3569
  %v3802 = vpack.c.b16 %v3574, %v3570
  %v3803 = vpack.c.b16 %v3579, %v3575
  %v3804 = vpack.c.b16 %v3580, %v3576
  %v3805 = vpack.c.b16 %v3581, %v3577
  %v3806 = vpack.c.b16 %v3582, %v3578
  %v3807 = vpack.c.b16 %v3587, %v3583
  %v3808 = vpack.c.b16 %v3588, %v3584
  %v3809 = vpack.c.b16 %v3589, %v3585
  %v3810 = vpack.c.b16 %v3590, %v3586
  %v3811 = vpack.c.b16 %v3595, %v3591
  %v3812 = vpack.c.b16 %v3596, %v3592
  %v3813 = vpack.c.b16 %v3597, %v3593
  %v3814 = vpack.c.b16 %v3598, %v3594
  %v3815 = vpack.c.b16 %v3603, %v3599
  %v3816 = vpack.c.b16 %v3604, %v3600
  %v3817 = vpack.c.b16 %v3605, %v3601
  %v3818 = vpack.c.b16 %v3606, %v3602
  %v3819 = vpack.c.b16 %v3611, %v3607
  %v3820 = vpack.c.b16 %v3612, %v3608
  %v3821 = vpack.c.b16 %v3613, %v3609
  %v3822 = vpack.c.b16 %v3614, %v3610
  %v3823 = vpack.c.b16 %v3619, %v3615
  %v3824 = vpack.c.b16 %v3620, %v3616
  %v3825 = vpack.c.b16 %v3621, %v3617
  %v3826 = vpack.c.b16 %v3622, %v3618
  %v3827 = vpack.c.b16 %v3627, %v3623
  %v3828 = vpack.c.b16 %v3628, %v3624
  %v3829 = vpack.c.b16 %v3629, %v3625
  %v3830 = vpack.c.b16 %v3630, %v3626
  %v3831 = vpack.c.b16 %v3635, %v3631
  %v3832 = vpack.c.b16 %v3636, %v3632
  %v3833 = vpack.c.b16 %v3637, %v3633
  %v3834 = vpack.c.b16 %v3638, %v3634
  %v3835 = vpack.c.b16 %v3643, %v3639
  %v3836 = vpack.c.b16 %v3644, %v3640
  %v3837 = vpack.c.b16 %v3645, %v3641
  %v3838 = vpack.c.b16 %v3646, %v3642
  %v3839 = vpack.c.b16 %v3651, %v3647
  %v3840 = vpack.c.b16 %v3652, %v3648
  %v3841 = vpack.c.b16 %v3653, %v3649
  %v3842 = vpack.c.b16 %v3654, %v3650
  %v3843 = vpack.c.b16 %v3659, %v3655
  %v3844 = vpack.c.b16 %v3660, %v3656
  %v3845 = vpack.c.b16 %v3661, %v3657
  %v3846 = vpack.c.b16 %v3662, %v3658
  %v3847 = vpack.c.b16 %v3667, %v3663
  %v3848 = vpack.c.b16 %v3668, %v3664
  %v3849 = vpack.c.b16 %v3669, %v3665
  %v3850 = vpack.c.b16 %v3670, %v3666
  %v3851 = vpack.c.b16 %v3675, %v3671
  %v3852 = vpack.c.b16 %v3676, %v3672
  %v3853 = vpack.c.b16 %v3677, %v3673
  %v3854 = vpack.c.b16 %v3678, %v3674
  %v3855 = vpack.c.b16 %v3683, %v3679
  %v3856 = vpack.c.b16 %v3684, %v3680
  %v3857 = vpack.c.b16 %v3685, %v3681
  %v3858 = vpack.c.b16 %v3686, %v3682
  %v3859 = vpack.c.b16 %v3691, %v3687
  %v3860 = vpack.c.b16 %v3692, %v3688
  %v3861 = vpack.c.b16 %v3693, %v3689
  %v3862 = vpack.c.b16 %v3694, %v3690
  %v3863 = vpack.c.b16 %v3699, %v3695
  %v3864 = vpack.c.b16 %v3700, %v3696
  %v3865 = vpack.c.b16 %v3701, %v3697
  %v3866 = vpack.c.b16 %v3702, %v3698
  %v3867 = vpack.c.b16 %v3707, %v3703
  %v3868 = vpack.c.b16 %v3708, %v3704
  %v3869 = vpack.c.b16 %v3709, %v3705
  %v3870 = vpack.c.b16 %v3710, %v3706
  %v3871 = vpack.c.b16 %v3715, %v3711
  %v3872 = vpack.c.b16 %v3716, %v3712
  %v3873 = vpack.c.b16 %v3717, %v3713
  %v3874 = vpack.c.b16 %v3718, %v3714
  %v3875 = vpack.c.b16 %v3723, %v3719
  %v3876 = vpack.c.b16 %v3724, %v3720
  %v3877 = vpack.c.b16 %v3725, %v3721
  %v3878 = vpack.c.b16 %v3726, %v3722
  %v3879 = vpack.c.b16 %v3731, %v3727
  %v3880 = vpack.c.b16 %v3732, %v3728
  %v3881 = vpack.c.b16 %v3733, %v3729
  %v3882 = vpack.c.b16 %v3734, %v3730
  %v3883 = vpack.c.b16 %v3739, %v3735
  %v3884 = vpack.c.b16 %v3740, %v3736
  %v3885 = vpack.c.b16 %v3741, %v3737
  %v3886 = vpack.c.b16 %v3742, %v3738
  %v3887 = vpack.c.b16 %v3747, %v3743
  %v3888 = vpack.c.b16 %v3748, %v3744
  %v3889 = vpack.c.b16 %v3749, %v3745
  %v3890 = vpack.c.b16 %v3750, %v3746
  %v3891 = vpack.c.b16 %v3755, %v3751
  %v3892 = vpack.c.b16 %v3756, %v3752
  %v3893 = vpack.c.b16 %v3757, %v3753
  %v3894 = vpack.c.b16 %v3758, %v3754
  %v3895 = vpack.c.b16 %v3763, %v3759
  %v3896 = vpack.c.b16 %v3764, %v3760
  %v3897 = vpack.c.b16 %v3765, %v3761
  %v3898 = vpack.c.b16 %v3766, %v3762
  %v3899 = vpack.c.b16 %v3771, %v3767
  %v3900 = vpack.c.b16 %v3772, %v3768
  %v3901 = vpack.c.b16 %v3773, %v3769
  %v3902 = vpack.c.b16 %v3774, %v3770
  %4031 = vmatprep.subr.bf16.mxu0 %v3776
  %4032 = vmatpush1.bf16.msra.mxu0 %v3775
  %4033 = vmatprep.subr.bf16.mxu0 %v3780
  %4034 = vmatpush1.bf16.msra.mxu0 %v3779
  %4035 = vmatprep.subr.bf16.mxu0 %v3784
  %4036 = vmatpush1.bf16.msra.mxu0 %v3783
  %4037 = vmatprep.subr.bf16.mxu0 %v3788
  %4038 = vmatpush1.bf16.msra.mxu0 %v3787
  %4039 = vmatprep.subr.bf16.mxu0 %v3792
  %4040 = vmatpush1.bf16.msra.mxu0 %v3791
  %4041 = vmatprep.subr.bf16.mxu0 %v3796
  %4042 = vmatpush1.bf16.msra.mxu0 %v3795
  %4043 = vmatprep.subr.bf16.mxu0 %v3800
  %4044 = vmatpush1.bf16.msra.mxu0 %v3799
  %4045 = vmatprep.subr.bf16.mxu0 %v3804
  %4046 = vmatpush1.bf16.msra.mxu0 %v3803
  %4047 = vmatprep.subr.bf16.mxu0 %v3808
  %4048 = vmatpush1.bf16.msra.mxu0 %v3807
  %4049 = vmatprep.subr.bf16.mxu0 %v3812
  %4050 = vmatpush1.bf16.msra.mxu0 %v3811
  %4051 = vmatprep.subr.bf16.mxu0 %v3816
  %4052 = vmatpush1.bf16.msra.mxu0 %v3815
  %4053 = vmatprep.subr.bf16.mxu0 %v3820
  %4054 = vmatpush1.bf16.msra.mxu0 %v3819
  %4055 = vmatprep.subr.bf16.mxu0 %v3824
  %4056 = vmatpush1.bf16.msra.mxu0 %v3823
  %4057 = vmatprep.subr.bf16.mxu0 %v3828
  %4058 = vmatpush1.bf16.msra.mxu0 %v3827
  %4059 = vmatprep.subr.bf16.mxu0 %v3832
  %4060 = vmatpush1.bf16.msra.mxu0 %v3831
  %4061 = vmatprep.subr.bf16.mxu0 %v3836
  %4062 = vmatpush1.bf16.msra.mxu0 %v3835
  %4063 = vmatprep.mubr.bf16.mxu0 %v3260
  %4064 = vmatmul.mubr.bf16.gmra.mrb[0].mxu0 %v3259
  %v4065 = vpop.f32.mrb[0].mxu0
  %v4066 = vadd.f32 0.0, %v4065
  %v4067 = vpop.f32.mrb[0].mxu0
  %v4068 = vadd.f32 0.0, %v4067
  %v4069 = vpop.f32.mrb[0].mxu0
  %v4070 = vpop.f32.mrb[0].mxu0
  %4071 = vdwg.mxu0
  %4072 = vmatprep.subr.bf16.mxu0 %v3840
  %4073 = vmatpush1.bf16.msra.mxu0 %v3839
  %4074 = vmatprep.subr.bf16.mxu0 %v3844
  %4075 = vmatpush1.bf16.msra.mxu0 %v3843
  %4076 = vmatprep.subr.bf16.mxu0 %v3848
  %4077 = vmatpush1.bf16.msra.mxu0 %v3847
  %4078 = vmatprep.subr.bf16.mxu0 %v3852
  %4079 = vmatpush1.bf16.msra.mxu0 %v3851
  %4080 = vmatprep.subr.bf16.mxu0 %v3856
  %4081 = vmatpush1.bf16.msra.mxu0 %v3855
  %4082 = vmatprep.subr.bf16.mxu0 %v3860
  %4083 = vmatpush1.bf16.msra.mxu0 %v3859
  %4084 = vmatprep.subr.bf16.mxu0 %v3864
  %4085 = vmatpush1.bf16.msra.mxu0 %v3863
  %4086 = vmatprep.subr.bf16.mxu0 %v3868
  %4087 = vmatpush1.bf16.msra.mxu0 %v3867
  %4088 = vmatprep.subr.bf16.mxu0 %v3872
  %4089 = vmatpush1.bf16.msra.mxu0 %v3871
  %4090 = vmatprep.subr.bf16.mxu0 %v3876
  %4091 = vmatpush1.bf16.msra.mxu0 %v3875
  %4092 = vmatprep.subr.bf16.mxu0 %v3880
  %4093 = vmatpush1.bf16.msra.mxu0 %v3879
  %4094 = vmatprep.subr.bf16.mxu0 %v3884
  %4095 = vmatpush1.bf16.msra.mxu0 %v3883
  %4096 = vmatprep.subr.bf16.mxu0 %v3888
  %4097 = vmatpush1.bf16.msra.mxu0 %v3887
  %4098 = vmatprep.subr.bf16.mxu0 %v3892
  %4099 = vmatpush1.bf16.msra.mxu0 %v3891
  %4100 = vmatprep.subr.bf16.mxu0 %v3896
  %4101 = vmatpush1.bf16.msra.mxu0 %v3895
  %4102 = vmatprep.subr.bf16.mxu0 %v3900
  %4103 = vmatpush1.bf16.msra.mxu0 %v3899
  %4104 = vmatprep.mubr.bf16.mxu0 %v3262
  %4105 = vmatmul.mubr.bf16.gmra.mrb[0].mxu0 %v3261
  %v4106 = vpop.f32.mrb[0].mxu0
  %v4107 = vadd.f32 %v4066, %v4106
  %v4108 = vpop.f32.mrb[0].mxu0
  %v4109 = vadd.f32 %v4068, %v4108
  %v4110 = vpop.f32.mrb[0].mxu0
  %v4111 = vpop.f32.mrb[0].mxu0
  %4112 = vdwg.mxu0
  %4113 = vmatprep.subr.bf16.mxu0 %v3778
  %4114 = vmatpush1.bf16.msra.mxu0 %v3777
  %4115 = vmatprep.subr.bf16.mxu0 %v3782
  %4116 = vmatpush1.bf16.msra.mxu0 %v3781
  %4117 = vmatprep.subr.bf16.mxu0 %v3786
  %4118 = vmatpush1.bf16.msra.mxu0 %v3785
  %4119 = vmatprep.subr.bf16.mxu0 %v3790
  %4120 = vmatpush1.bf16.msra.mxu0 %v3789
  %4121 = vmatprep.subr.bf16.mxu0 %v3794
  %4122 = vmatpush1.bf16.msra.mxu0 %v3793
  %4123 = vmatprep.subr.bf16.mxu0 %v3798
  %4124 = vmatpush1.bf16.msra.mxu0 %v3797
  %4125 = vmatprep.subr.bf16.mxu0 %v3802
  %4126 = vmatpush1.bf16.msra.mxu0 %v3801
  %4127 = vmatprep.subr.bf16.mxu0 %v3806
  %4128 = vmatpush1.bf16.msra.mxu0 %v3805
  %4129 = vmatprep.subr.bf16.mxu0 %v3810
  %4130 = vmatpush1.bf16.msra.mxu0 %v3809
  %4131 = vmatprep.subr.bf16.mxu0 %v3814
  %4132 = vmatpush1.bf16.msra.mxu0 %v3813
  %4133 = vmatprep.subr.bf16.mxu0 %v3818
  %4134 = vmatpush1.bf16.msra.mxu0 %v3817
  %4135 = vmatprep.subr.bf16.mxu0 %v3822
  %4136 = vmatpush1.bf16.msra.mxu0 %v3821
  %4137 = vmatprep.subr.bf16.mxu0 %v3826
  %4138 = vmatpush1.bf16.msra.mxu0 %v3825
  %4139 = vmatprep.subr.bf16.mxu0 %v3830
  %4140 = vmatpush1.bf16.msra.mxu0 %v3829
  %4141 = vmatprep.subr.bf16.mxu0 %v3834
  %4142 = vmatpush1.bf16.msra.mxu0 %v3833
  %4143 = vmatprep.subr.bf16.mxu0 %v3838
  %4144 = vmatpush1.bf16.msra.mxu0 %v3837
  %4145 = vmatprep.mubr.bf16.mxu0 %v3260
  %4146 = vmatmul.mubr.bf16.gmra.mrb[0].mxu0 %v3259
  %v4147 = vpop.f32.mrb[0].mxu0
  %v4148 = vadd.f32 0.0, %v4147
  %v4149 = vpop.f32.mrb[0].mxu0
  %v4150 = vadd.f32 0.0, %v4149
  %v4151 = vpop.f32.mrb[0].mxu0
  %v4152 = vpop.f32.mrb[0].mxu0
  %4153 = vdwg.mxu0
  %4154 = vmatprep.subr.bf16.mxu0 %v3842
  %4155 = vmatpush1.bf16.msra.mxu0 %v3841
  %4156 = vmatprep.subr.bf16.mxu0 %v3846
  %4157 = vmatpush1.bf16.msra.mxu0 %v3845
  %4158 = vmatprep.subr.bf16.mxu0 %v3850
  %4159 = vmatpush1.bf16.msra.mxu0 %v3849
  %4160 = vmatprep.subr.bf16.mxu0 %v3854
  %4161 = vmatpush1.bf16.msra.mxu0 %v3853
  %4162 = vmatprep.subr.bf16.mxu0 %v3858
  %4163 = vmatpush1.bf16.msra.mxu0 %v3857
  %4164 = vmatprep.subr.bf16.mxu0 %v3862
  %4165 = vmatpush1.bf16.msra.mxu0 %v3861
  %4166 = vmatprep.subr.bf16.mxu0 %v3866
  %4167 = vmatpush1.bf16.msra.mxu0 %v3865
  %4168 = vmatprep.subr.bf16.mxu0 %v3870
  %4169 = vmatpush1.bf16.msra.mxu0 %v3869
  %4170 = vmatprep.subr.bf16.mxu0 %v3874
  %4171 = vmatpush1.bf16.msra.mxu0 %v3873
  %4172 = vmatprep.subr.bf16.mxu0 %v3878
  %4173 = vmatpush1.bf16.msra.mxu0 %v3877
  %4174 = vmatprep.subr.bf16.mxu0 %v3882
  %4175 = vmatpush1.bf16.msra.mxu0 %v3881
  %4176 = vmatprep.subr.bf16.mxu0 %v3886
  %4177 = vmatpush1.bf16.msra.mxu0 %v3885
  %4178 = vmatprep.subr.bf16.mxu0 %v3890
  %4179 = vmatpush1.bf16.msra.mxu0 %v3889
  %4180 = vmatprep.subr.bf16.mxu0 %v3894
  %4181 = vmatpush1.bf16.msra.mxu0 %v3893
  %4182 = vmatprep.subr.bf16.mxu0 %v3898
  %4183 = vmatpush1.bf16.msra.mxu0 %v3897
  %4184 = vmatprep.subr.bf16.mxu0 %v3902
  %4185 = vmatpush1.bf16.msra.mxu0 %v3901
  %4186 = vmatprep.mubr.bf16.mxu0 %v3262
  %4187 = vmatmul.mubr.bf16.gmra.mrb[0].mxu0 %v3261
  %v4188 = vpop.f32.mrb[0].mxu0
  %v4189 = vadd.f32 %v4148, %v4188
  %v4190 = vpop.f32.mrb[0].mxu0
  %v4191 = vadd.f32 %v4150, %v4190
  %v4192 = vpop.f32.mrb[0].mxu0
  %v4193 = vpop.f32.mrb[0].mxu0
  %4194 = vdwg.mxu0
  %v4323 = vunpack.c.l.b16 %v3131
  %v4324 = vunpack.c.h.b16 %v3131
  %v4325 = vunpack.c.l.b16 %v3132
  %v4326 = vunpack.c.h.b16 %v3132
  %v4327 = vunpack.c.l.b16 %v3133
  %v4328 = vunpack.c.h.b16 %v3133
  %v4329 = vunpack.c.l.b16 %v3134
  %v4330 = vunpack.c.h.b16 %v3134
  %v4331 = vunpack.c.l.b16 %v3135
  %v4332 = vunpack.c.h.b16 %v3135
  %v4333 = vunpack.c.l.b16 %v3136
  %v4334 = vunpack.c.h.b16 %v3136
  %v4335 = vunpack.c.l.b16 %v3137
  %v4336 = vunpack.c.h.b16 %v3137
  %v4337 = vunpack.c.l.b16 %v3138
  %v4338 = vunpack.c.h.b16 %v3138
  %v4339 = vunpack.c.l.b16 %v3139
  %v4340 = vunpack.c.h.b16 %v3139
  %v4341 = vunpack.c.l.b16 %v3140
  %v4342 = vunpack.c.h.b16 %v3140
  %v4343 = vunpack.c.l.b16 %v3141
  %v4344 = vunpack.c.h.b16 %v3141
  %v4345 = vunpack.c.l.b16 %v3142
  %v4346 = vunpack.c.h.b16 %v3142
  %v4347 = vunpack.c.l.b16 %v3143
  %v4348 = vunpack.c.h.b16 %v3143
  %v4349 = vunpack.c.l.b16 %v3144
  %v4350 = vunpack.c.h.b16 %v3144
  %v4351 = vunpack.c.l.b16 %v3145
  %v4352 = vunpack.c.h.b16 %v3145
  %v4353 = vunpack.c.l.b16 %v3146
  %v4354 = vunpack.c.h.b16 %v3146
  %v4355 = vunpack.c.l.b16 %v3147
  %v4356 = vunpack.c.h.b16 %v3147
  %v4357 = vunpack.c.l.b16 %v3148
  %v4358 = vunpack.c.h.b16 %v3148
  %v4359 = vunpack.c.l.b16 %v3149
  %v4360 = vunpack.c.h.b16 %v3149
  %v4361 = vunpack.c.l.b16 %v3150
  %v4362 = vunpack.c.h.b16 %v3150
  %v4363 = vunpack.c.l.b16 %v3151
  %v4364 = vunpack.c.h.b16 %v3151
  %v4365 = vunpack.c.l.b16 %v3152
  %v4366 = vunpack.c.h.b16 %v3152
  %v4367 = vunpack.c.l.b16 %v3153
  %v4368 = vunpack.c.h.b16 %v3153
  %v4369 = vunpack.c.l.b16 %v3154
  %v4370 = vunpack.c.h.b16 %v3154
  %v4371 = vunpack.c.l.b16 %v3155
  %v4372 = vunpack.c.h.b16 %v3155
  %v4373 = vunpack.c.l.b16 %v3156
  %v4374 = vunpack.c.h.b16 %v3156
  %v4375 = vunpack.c.l.b16 %v3157
  %v4376 = vunpack.c.h.b16 %v3157
  %v4377 = vunpack.c.l.b16 %v3158
  %v4378 = vunpack.c.h.b16 %v3158
  %v4379 = vunpack.c.l.b16 %v3159
  %v4380 = vunpack.c.h.b16 %v3159
  %v4381 = vunpack.c.l.b16 %v3160
  %v4382 = vunpack.c.h.b16 %v3160
  %v4383 = vunpack.c.l.b16 %v3161
  %v4384 = vunpack.c.h.b16 %v3161
  %v4385 = vunpack.c.l.b16 %v3162
  %v4386 = vunpack.c.h.b16 %v3162
  %v4387 = vunpack.c.l.b16 %v3163
  %v4388 = vunpack.c.h.b16 %v3163
  %v4389 = vunpack.c.l.b16 %v3164
  %v4390 = vunpack.c.h.b16 %v3164
  %v4391 = vunpack.c.l.b16 %v3165
  %v4392 = vunpack.c.h.b16 %v3165
  %v4393 = vunpack.c.l.b16 %v3166
  %v4394 = vunpack.c.h.b16 %v3166
  %v4395 = vunpack.c.l.b16 %v3167
  %v4396 = vunpack.c.h.b16 %v3167
  %v4397 = vunpack.c.l.b16 %v3168
  %v4398 = vunpack.c.h.b16 %v3168
  %v4399 = vunpack.c.l.b16 %v3169
  %v4400 = vunpack.c.h.b16 %v3169
  %v4401 = vunpack.c.l.b16 %v3170
  %v4402 = vunpack.c.h.b16 %v3170
  %v4403 = vunpack.c.l.b16 %v3171
  %v4404 = vunpack.c.h.b16 %v3171
  %v4405 = vunpack.c.l.b16 %v3172
  %v4406 = vunpack.c.h.b16 %v3172
  %v4407 = vunpack.c.l.b16 %v3173
  %v4408 = vunpack.c.h.b16 %v3173
  %v4409 = vunpack.c.l.b16 %v3174
  %v4410 = vunpack.c.h.b16 %v3174
  %v4411 = vunpack.c.l.b16 %v3175
  %v4412 = vunpack.c.h.b16 %v3175
  %v4413 = vunpack.c.l.b16 %v3176
  %v4414 = vunpack.c.h.b16 %v3176
  %v4415 = vunpack.c.l.b16 %v3177
  %v4416 = vunpack.c.h.b16 %v3177
  %v4417 = vunpack.c.l.b16 %v3178
  %v4418 = vunpack.c.h.b16 %v3178
  %v4419 = vunpack.c.l.b16 %v3179
  %v4420 = vunpack.c.h.b16 %v3179
  %v4421 = vunpack.c.l.b16 %v3180
  %v4422 = vunpack.c.h.b16 %v3180
  %v4423 = vunpack.c.l.b16 %v3181
  %v4424 = vunpack.c.h.b16 %v3181
  %v4425 = vunpack.c.l.b16 %v3182
  %v4426 = vunpack.c.h.b16 %v3182
  %v4427 = vunpack.c.l.b16 %v3183
  %v4428 = vunpack.c.h.b16 %v3183
  %v4429 = vunpack.c.l.b16 %v3184
  %v4430 = vunpack.c.h.b16 %v3184
  %v4431 = vunpack.c.l.b16 %v3185
  %v4432 = vunpack.c.h.b16 %v3185
  %v4433 = vunpack.c.l.b16 %v3186
  %v4434 = vunpack.c.h.b16 %v3186
  %v4435 = vunpack.c.l.b16 %v3187
  %v4436 = vunpack.c.h.b16 %v3187
  %v4437 = vunpack.c.l.b16 %v3188
  %v4438 = vunpack.c.h.b16 %v3188
  %v4439 = vunpack.c.l.b16 %v3189
  %v4440 = vunpack.c.h.b16 %v3189
  %v4441 = vunpack.c.l.b16 %v3190
  %v4442 = vunpack.c.h.b16 %v3190
  %v4443 = vunpack.c.l.b16 %v3191
  %v4444 = vunpack.c.h.b16 %v3191
  %v4445 = vunpack.c.l.b16 %v3192
  %v4446 = vunpack.c.h.b16 %v3192
  %v4447 = vunpack.c.l.b16 %v3193
  %v4448 = vunpack.c.h.b16 %v3193
  %v4449 = vunpack.c.l.b16 %v3194
  %v4450 = vunpack.c.h.b16 %v3194
  %v4451 = vunpack.c.l.b16 %v3195
  %v4452 = vunpack.c.h.b16 %v3195
  %v4453 = vunpack.c.l.b16 %v3196
  %v4454 = vunpack.c.h.b16 %v3196
  %v4455 = vunpack.c.l.b16 %v3197
  %v4456 = vunpack.c.h.b16 %v3197
  %v4457 = vunpack.c.l.b16 %v3198
  %v4458 = vunpack.c.h.b16 %v3198
  %v4459 = vunpack.c.l.b16 %v3199
  %v4460 = vunpack.c.h.b16 %v3199
  %v4461 = vunpack.c.l.b16 %v3200
  %v4462 = vunpack.c.h.b16 %v3200
  %v4463 = vunpack.c.l.b16 %v3201
  %v4464 = vunpack.c.h.b16 %v3201
  %v4465 = vunpack.c.l.b16 %v3202
  %v4466 = vunpack.c.h.b16 %v3202
  %v4467 = vunpack.c.l.b16 %v3203
  %v4468 = vunpack.c.h.b16 %v3203
  %v4469 = vunpack.c.l.b16 %v3204
  %v4470 = vunpack.c.h.b16 %v3204
  %v4471 = vunpack.c.l.b16 %v3205
  %v4472 = vunpack.c.h.b16 %v3205
  %v4473 = vunpack.c.l.b16 %v3206
  %v4474 = vunpack.c.h.b16 %v3206
  %v4475 = vunpack.c.l.b16 %v3207
  %v4476 = vunpack.c.h.b16 %v3207
  %v4477 = vunpack.c.l.b16 %v3208
  %v4478 = vunpack.c.h.b16 %v3208
  %v4479 = vunpack.c.l.b16 %v3209
  %v4480 = vunpack.c.h.b16 %v3209
  %v4481 = vunpack.c.l.b16 %v3210
  %v4482 = vunpack.c.h.b16 %v3210
  %v4483 = vunpack.c.l.b16 %v3211
  %v4484 = vunpack.c.h.b16 %v3211
  %v4485 = vunpack.c.l.b16 %v3212
  %v4486 = vunpack.c.h.b16 %v3212
  %v4487 = vunpack.c.l.b16 %v3213
  %v4488 = vunpack.c.h.b16 %v3213
  %v4489 = vunpack.c.l.b16 %v3214
  %v4490 = vunpack.c.h.b16 %v3214
  %v4491 = vunpack.c.l.b16 %v3215
  %v4492 = vunpack.c.h.b16 %v3215
  %v4493 = vunpack.c.l.b16 %v3216
  %v4494 = vunpack.c.h.b16 %v3216
  %v4495 = vunpack.c.l.b16 %v3217
  %v4496 = vunpack.c.h.b16 %v3217
  %v4497 = vunpack.c.l.b16 %v3218
  %v4498 = vunpack.c.h.b16 %v3218
  %v4499 = vunpack.c.l.b16 %v3219
  %v4500 = vunpack.c.h.b16 %v3219
  %v4501 = vunpack.c.l.b16 %v3220
  %v4502 = vunpack.c.h.b16 %v3220
  %v4503 = vunpack.c.l.b16 %v3221
  %v4504 = vunpack.c.h.b16 %v3221
  %v4505 = vunpack.c.l.b16 %v3222
  %v4506 = vunpack.c.h.b16 %v3222
  %v4507 = vunpack.c.l.b16 %v3223
  %v4508 = vunpack.c.h.b16 %v3223
  %v4509 = vunpack.c.l.b16 %v3224
  %v4510 = vunpack.c.h.b16 %v3224
  %v4511 = vunpack.c.l.b16 %v3225
  %v4512 = vunpack.c.h.b16 %v3225
  %v4513 = vunpack.c.l.b16 %v3226
  %v4514 = vunpack.c.h.b16 %v3226
  %v4515 = vunpack.c.l.b16 %v3227
  %v4516 = vunpack.c.h.b16 %v3227
  %v4517 = vunpack.c.l.b16 %v3228
  %v4518 = vunpack.c.h.b16 %v3228
  %v4519 = vunpack.c.l.b16 %v3229
  %v4520 = vunpack.c.h.b16 %v3229
  %v4521 = vunpack.c.l.b16 %v3230
  %v4522 = vunpack.c.h.b16 %v3230
  %v4523 = vunpack.c.l.b16 %v3231
  %v4524 = vunpack.c.h.b16 %v3231
  %v4525 = vunpack.c.l.b16 %v3232
  %v4526 = vunpack.c.h.b16 %v3232
  %v4527 = vunpack.c.l.b16 %v3233
  %v4528 = vunpack.c.h.b16 %v3233
  %v4529 = vunpack.c.l.b16 %v3234
  %v4530 = vunpack.c.h.b16 %v3234
  %v4531 = vunpack.c.l.b16 %v3235
  %v4532 = vunpack.c.h.b16 %v3235
  %v4533 = vunpack.c.l.b16 %v3236
  %v4534 = vunpack.c.h.b16 %v3236
  %v4535 = vunpack.c.l.b16 %v3237
  %v4536 = vunpack.c.h.b16 %v3237
  %v4537 = vunpack.c.l.b16 %v3238
  %v4538 = vunpack.c.h.b16 %v3238
  %v4539 = vunpack.c.l.b16 %v3239
  %v4540 = vunpack.c.h.b16 %v3239
  %v4541 = vunpack.c.l.b16 %v3240
  %v4542 = vunpack.c.h.b16 %v3240
  %v4543 = vunpack.c.l.b16 %v3241
  %v4544 = vunpack.c.h.b16 %v3241
  %v4545 = vunpack.c.l.b16 %v3242
  %v4546 = vunpack.c.h.b16 %v3242
  %v4547 = vunpack.c.l.b16 %v3243
  %v4548 = vunpack.c.h.b16 %v3243
  %v4549 = vunpack.c.l.b16 %v3244
  %v4550 = vunpack.c.h.b16 %v3244
  %v4551 = vunpack.c.l.b16 %v3245
  %v4552 = vunpack.c.h.b16 %v3245
  %v4553 = vunpack.c.l.b16 %v3246
  %v4554 = vunpack.c.h.b16 %v3246
  %v4555 = vunpack.c.l.b16 %v3247
  %v4556 = vunpack.c.h.b16 %v3247
  %v4557 = vunpack.c.l.b16 %v3248
  %v4558 = vunpack.c.h.b16 %v3248
  %v4559 = vunpack.c.l.b16 %v3249
  %v4560 = vunpack.c.h.b16 %v3249
  %v4561 = vunpack.c.l.b16 %v3250
  %v4562 = vunpack.c.h.b16 %v3250
  %v4563 = vunpack.c.l.b16 %v3251
  %v4564 = vunpack.c.h.b16 %v3251
  %v4565 = vunpack.c.l.b16 %v3252
  %v4566 = vunpack.c.h.b16 %v3252
  %v4567 = vunpack.c.l.b16 %v3253
  %v4568 = vunpack.c.h.b16 %v3253
  %v4569 = vunpack.c.l.b16 %v3254
  %v4570 = vunpack.c.h.b16 %v3254
  %v4571 = vunpack.c.l.b16 %v3255
  %v4572 = vunpack.c.h.b16 %v3255
  %v4573 = vunpack.c.l.b16 %v3256
  %v4574 = vunpack.c.h.b16 %v3256
  %v4575 = vunpack.c.l.b16 %v3257
  %v4576 = vunpack.c.h.b16 %v3257
  %v4577 = vunpack.c.l.b16 %v3258
  %v4578 = vunpack.c.h.b16 %v3258
  %v4579 = vpack.c.b16 %v4327, %v4323
  %v4580 = vpack.c.b16 %v4328, %v4324
  %v4581 = vpack.c.b16 %v4329, %v4325
  %v4582 = vpack.c.b16 %v4330, %v4326
  %v4583 = vpack.c.b16 %v4335, %v4331
  %v4584 = vpack.c.b16 %v4336, %v4332
  %v4585 = vpack.c.b16 %v4337, %v4333
  %v4586 = vpack.c.b16 %v4338, %v4334
  %v4587 = vpack.c.b16 %v4343, %v4339
  %v4588 = vpack.c.b16 %v4344, %v4340
  %v4589 = vpack.c.b16 %v4345, %v4341
  %v4590 = vpack.c.b16 %v4346, %v4342
  %v4591 = vpack.c.b16 %v4351, %v4347
  %v4592 = vpack.c.b16 %v4352, %v4348
  %v4593 = vpack.c.b16 %v4353, %v4349
  %v4594 = vpack.c.b16 %v4354, %v4350
  %v4595 = vpack.c.b16 %v4359, %v4355
  %v4596 = vpack.c.b16 %v4360, %v4356
  %v4597 = vpack.c.b16 %v4361, %v4357
  %v4598 = vpack.c.b16 %v4362, %v4358
  %v4599 = vpack.c.b16 %v4367, %v4363
  %v4600 = vpack.c.b16 %v4368, %v4364
  %v4601 = vpack.c.b16 %v4369, %v4365
  %v4602 = vpack.c.b16 %v4370, %v4366
  %v4603 = vpack.c.b16 %v4375, %v4371
  %v4604 = vpack.c.b16 %v4376, %v4372
  %v4605 = vpack.c.b16 %v4377, %v4373
  %v4606 = vpack.c.b16 %v4378, %v4374
  %v4607 = vpack.c.b16 %v4383, %v4379
  %v4608 = vpack.c.b16 %v4384, %v4380
  %v4609 = vpack.c.b16 %v4385, %v4381
  %v4610 = vpack.c.b16 %v4386, %v4382
  %v4611 = vpack.c.b16 %v4391, %v4387
  %v4612 = vpack.c.b16 %v4392, %v4388
  %v4613 = vpack.c.b16 %v4393, %v4389
  %v4614 = vpack.c.b16 %v4394, %v4390
  %v4615 = vpack.c.b16 %v4399, %v4395
  %v4616 = vpack.c.b16 %v4400, %v4396
  %v4617 = vpack.c.b16 %v4401, %v4397
  %v4618 = vpack.c.b16 %v4402, %v4398
  %v4619 = vpack.c.b16 %v4407, %v4403
  %v4620 = vpack.c.b16 %v4408, %v4404
  %v4621 = vpack.c.b16 %v4409, %v4405
  %v4622 = vpack.c.b16 %v4410, %v4406
  %v4623 = vpack.c.b16 %v4415, %v4411
  %v4624 = vpack.c.b16 %v4416, %v4412
  %v4625 = vpack.c.b16 %v4417, %v4413
  %v4626 = vpack.c.b16 %v4418, %v4414
  %v4627 = vpack.c.b16 %v4423, %v4419
  %v4628 = vpack.c.b16 %v4424, %v4420
  %v4629 = vpack.c.b16 %v4425, %v4421
  %v4630 = vpack.c.b16 %v4426, %v4422
  %v4631 = vpack.c.b16 %v4431, %v4427
  %v4632 = vpack.c.b16 %v4432, %v4428
  %v4633 = vpack.c.b16 %v4433, %v4429
  %v4634 = vpack.c.b16 %v4434, %v4430
  %v4635 = vpack.c.b16 %v4439, %v4435
  %v4636 = vpack.c.b16 %v4440, %v4436
  %v4637 = vpack.c.b16 %v4441, %v4437
  %v4638 = vpack.c.b16 %v4442, %v4438
  %v4639 = vpack.c.b16 %v4447, %v4443
  %v4640 = vpack.c.b16 %v4448, %v4444
  %v4641 = vpack.c.b16 %v4449, %v4445
  %v4642 = vpack.c.b16 %v4450, %v4446
  %v4643 = vpack.c.b16 %v4455, %v4451
  %v4644 = vpack.c.b16 %v4456, %v4452
  %v4645 = vpack.c.b16 %v4457, %v4453
  %v4646 = vpack.c.b16 %v4458, %v4454
  %v4647 = vpack.c.b16 %v4463, %v4459
  %v4648 = vpack.c.b16 %v4464, %v4460
  %v4649 = vpack.c.b16 %v4465, %v4461
  %v4650 = vpack.c.b16 %v4466, %v4462
  %v4651 = vpack.c.b16 %v4471, %v4467
  %v4652 = vpack.c.b16 %v4472, %v4468
  %v4653 = vpack.c.b16 %v4473, %v4469
  %v4654 = vpack.c.b16 %v4474, %v4470
  %v4655 = vpack.c.b16 %v4479, %v4475
  %v4656 = vpack.c.b16 %v4480, %v4476
  %v4657 = vpack.c.b16 %v4481, %v4477
  %v4658 = vpack.c.b16 %v4482, %v4478
  %v4659 = vpack.c.b16 %v4487, %v4483
  %v4660 = vpack.c.b16 %v4488, %v4484
  %v4661 = vpack.c.b16 %v4489, %v4485
  %v4662 = vpack.c.b16 %v4490, %v4486
  %v4663 = vpack.c.b16 %v4495, %v4491
  %v4664 = vpack.c.b16 %v4496, %v4492
  %v4665 = vpack.c.b16 %v4497, %v4493
  %v4666 = vpack.c.b16 %v4498, %v4494
  %v4667 = vpack.c.b16 %v4503, %v4499
  %v4668 = vpack.c.b16 %v4504, %v4500
  %v4669 = vpack.c.b16 %v4505, %v4501
  %v4670 = vpack.c.b16 %v4506, %v4502
  %v4671 = vpack.c.b16 %v4511, %v4507
  %v4672 = vpack.c.b16 %v4512, %v4508
  %v4673 = vpack.c.b16 %v4513, %v4509
  %v4674 = vpack.c.b16 %v4514, %v4510
  %v4675 = vpack.c.b16 %v4519, %v4515
  %v4676 = vpack.c.b16 %v4520, %v4516
  %v4677 = vpack.c.b16 %v4521, %v4517
  %v4678 = vpack.c.b16 %v4522, %v4518
  %v4679 = vpack.c.b16 %v4527, %v4523
  %v4680 = vpack.c.b16 %v4528, %v4524
  %v4681 = vpack.c.b16 %v4529, %v4525
  %v4682 = vpack.c.b16 %v4530, %v4526
  %v4683 = vpack.c.b16 %v4535, %v4531
  %v4684 = vpack.c.b16 %v4536, %v4532
  %v4685 = vpack.c.b16 %v4537, %v4533
  %v4686 = vpack.c.b16 %v4538, %v4534
  %v4687 = vpack.c.b16 %v4543, %v4539
  %v4688 = vpack.c.b16 %v4544, %v4540
  %v4689 = vpack.c.b16 %v4545, %v4541
  %v4690 = vpack.c.b16 %v4546, %v4542
  %v4691 = vpack.c.b16 %v4551, %v4547
  %v4692 = vpack.c.b16 %v4552, %v4548
  %v4693 = vpack.c.b16 %v4553, %v4549
  %v4694 = vpack.c.b16 %v4554, %v4550
  %v4695 = vpack.c.b16 %v4559, %v4555
  %v4696 = vpack.c.b16 %v4560, %v4556
  %v4697 = vpack.c.b16 %v4561, %v4557
  %v4698 = vpack.c.b16 %v4562, %v4558
  %v4699 = vpack.c.b16 %v4567, %v4563
  %v4700 = vpack.c.b16 %v4568, %v4564
  %v4701 = vpack.c.b16 %v4569, %v4565
  %v4702 = vpack.c.b16 %v4570, %v4566
  %v4703 = vpack.c.b16 %v4575, %v4571
  %v4704 = vpack.c.b16 %v4576, %v4572
  %v4705 = vpack.c.b16 %v4577, %v4573
  %v4706 = vpack.c.b16 %v4578, %v4574
  %4835 = vmatprep.subr.bf16.mxu0 %v4580
  %4836 = vmatpush1.bf16.msra.mxu0 %v4579
  %4837 = vmatprep.subr.bf16.mxu0 %v4584
  %4838 = vmatpush1.bf16.msra.mxu0 %v4583
  %4839 = vmatprep.subr.bf16.mxu0 %v4588
  %4840 = vmatpush1.bf16.msra.mxu0 %v4587
  %4841 = vmatprep.subr.bf16.mxu0 %v4592
  %4842 = vmatpush1.bf16.msra.mxu0 %v4591
  %4843 = vmatprep.subr.bf16.mxu0 %v4596
  %4844 = vmatpush1.bf16.msra.mxu0 %v4595
  %4845 = vmatprep.subr.bf16.mxu0 %v4600
  %4846 = vmatpush1.bf16.msra.mxu0 %v4599
  %4847 = vmatprep.subr.bf16.mxu0 %v4604
  %4848 = vmatpush1.bf16.msra.mxu0 %v4603
  %4849 = vmatprep.subr.bf16.mxu0 %v4608
  %4850 = vmatpush1.bf16.msra.mxu0 %v4607
  %4851 = vmatprep.subr.bf16.mxu0 %v4612
  %4852 = vmatpush1.bf16.msra.mxu0 %v4611
  %4853 = vmatprep.subr.bf16.mxu0 %v4616
  %4854 = vmatpush1.bf16.msra.mxu0 %v4615
  %4855 = vmatprep.subr.bf16.mxu0 %v4620
  %4856 = vmatpush1.bf16.msra.mxu0 %v4619
  %4857 = vmatprep.subr.bf16.mxu0 %v4624
  %4858 = vmatpush1.bf16.msra.mxu0 %v4623
  %4859 = vmatprep.subr.bf16.mxu0 %v4628
  %4860 = vmatpush1.bf16.msra.mxu0 %v4627
  %4861 = vmatprep.subr.bf16.mxu0 %v4632
  %4862 = vmatpush1.bf16.msra.mxu0 %v4631
  %4863 = vmatprep.subr.bf16.mxu0 %v4636
  %4864 = vmatpush1.bf16.msra.mxu0 %v4635
  %4865 = vmatprep.subr.bf16.mxu0 %v4640
  %4866 = vmatpush1.bf16.msra.mxu0 %v4639
  %4867 = vmatprep.mubr.bf16.mxu0 %v3128
  %4868 = vmatmul.mubr.bf16.gmra.mrb[0].mxu0 %v3127
  %v4869 = vpop.f32.mrb[0].mxu0
  %v4870 = vadd.f32 %v4107, %v4869
  %v4871 = vpop.f32.mrb[0].mxu0
  %v4872 = vadd.f32 %v4109, %v4871
  %v4873 = vpop.f32.mrb[0].mxu0
  %v4874 = vpop.f32.mrb[0].mxu0
  %4875 = vdwg.mxu0
  %4876 = vmatprep.subr.bf16.mxu0 %v4644
  %4877 = vmatpush1.bf16.msra.mxu0 %v4643
  %4878 = vmatprep.subr.bf16.mxu0 %v4648
  %4879 = vmatpush1.bf16.msra.mxu0 %v4647
  %4880 = vmatprep.subr.bf16.mxu0 %v4652
  %4881 = vmatpush1.bf16.msra.mxu0 %v4651
  %4882 = vmatprep.subr.bf16.mxu0 %v4656
  %4883 = vmatpush1.bf16.msra.mxu0 %v4655
  %4884 = vmatprep.subr.bf16.mxu0 %v4660
  %4885 = vmatpush1.bf16.msra.mxu0 %v4659
  %4886 = vmatprep.subr.bf16.mxu0 %v4664
  %4887 = vmatpush1.bf16.msra.mxu0 %v4663
  %4888 = vmatprep.subr.bf16.mxu0 %v4668
  %4889 = vmatpush1.bf16.msra.mxu0 %v4667
  %4890 = vmatprep.subr.bf16.mxu0 %v4672
  %4891 = vmatpush1.bf16.msra.mxu0 %v4671
  %4892 = vmatprep.subr.bf16.mxu0 %v4676
  %4893 = vmatpush1.bf16.msra.mxu0 %v4675
  %4894 = vmatprep.subr.bf16.mxu0 %v4680
  %4895 = vmatpush1.bf16.msra.mxu0 %v4679
  %4896 = vmatprep.subr.bf16.mxu0 %v4684
  %4897 = vmatpush1.bf16.msra.mxu0 %v4683
  %4898 = vmatprep.subr.bf16.mxu0 %v4688
  %4899 = vmatpush1.bf16.msra.mxu0 %v4687
  %4900 = vmatprep.subr.bf16.mxu0 %v4692
  %4901 = vmatpush1.bf16.msra.mxu0 %v4691
  %4902 = vmatprep.subr.bf16.mxu0 %v4696
  %4903 = vmatpush1.bf16.msra.mxu0 %v4695
  %4904 = vmatprep.subr.bf16.mxu0 %v4700
  %4905 = vmatpush1.bf16.msra.mxu0 %v4699
  %4906 = vmatprep.subr.bf16.mxu0 %v4704
  %4907 = vmatpush1.bf16.msra.mxu0 %v4703
  %4908 = vmatprep.mubr.bf16.mxu0 %v3130
  %4909 = vmatmul.mubr.bf16.gmra.mrb[0].mxu0 %v3129
  %v4910 = vpop.f32.mrb[0].mxu0
  %v4911 = vadd.f32 %v4870, %v4910
  %v4912 = vpop.f32.mrb[0].mxu0
  %v4913 = vadd.f32 %v4872, %v4912
  %v4914 = vpop.f32.mrb[0].mxu0
  %v4915 = vpop.f32.mrb[0].mxu0
  %4916 = vdwg.mxu0
  %4917 = vmatprep.subr.bf16.mxu0 %v4582
  %4918 = vmatpush1.bf16.msra.mxu0 %v4581
  %4919 = vmatprep.subr.bf16.mxu0 %v4586
  %4920 = vmatpush1.bf16.msra.mxu0 %v4585
  %4921 = vmatprep.subr.bf16.mxu0 %v4590
  %4922 = vmatpush1.bf16.msra.mxu0 %v4589
  %4923 = vmatprep.subr.bf16.mxu0 %v4594
  %4924 = vmatpush1.bf16.msra.mxu0 %v4593
  %4925 = vmatprep.subr.bf16.mxu0 %v4598
  %4926 = vmatpush1.bf16.msra.mxu0 %v4597
  %4927 = vmatprep.subr.bf16.mxu0 %v4602
  %4928 = vmatpush1.bf16.msra.mxu0 %v4601
  %4929 = vmatprep.subr.bf16.mxu0 %v4606
  %4930 = vmatpush1.bf16.msra.mxu0 %v4605
  %4931 = vmatprep.subr.bf16.mxu0 %v4610
  %4932 = vmatpush1.bf16.msra.mxu0 %v4609
  %4933 = vmatprep.subr.bf16.mxu0 %v4614
  %4934 = vmatpush1.bf16.msra.mxu0 %v4613
  %4935 = vmatprep.subr.bf16.mxu0 %v4618
  %4936 = vmatpush1.bf16.msra.mxu0 %v4617
  %4937 = vmatprep.subr.bf16.mxu0 %v4622
  %4938 = vmatpush1.bf16.msra.mxu0 %v4621
  %4939 = vmatprep.subr.bf16.mxu0 %v4626
  %4940 = vmatpush1.bf16.msra.mxu0 %v4625
  %4941 = vmatprep.subr.bf16.mxu0 %v4630
  %4942 = vmatpush1.bf16.msra.mxu0 %v4629
  %4943 = vmatprep.subr.bf16.mxu0 %v4634
  %4944 = vmatpush1.bf16.msra.mxu0 %v4633
  %4945 = vmatprep.subr.bf16.mxu0 %v4638
  %4946 = vmatpush1.bf16.msra.mxu0 %v4637
  %4947 = vmatprep.subr.bf16.mxu0 %v4642
  %4948 = vmatpush1.bf16.msra.mxu0 %v4641
  %4949 = vmatprep.mubr.bf16.mxu0 %v3128
  %4950 = vmatmul.mubr.bf16.gmra.mrb[0].mxu0 %v3127
  %v4951 = vpop.f32.mrb[0].mxu0
  %v4952 = vadd.f32 %v4189, %v4951
  %v4953 = vpop.f32.mrb[0].mxu0
  %v4954 = vadd.f32 %v4191, %v4953
  %v4955 = vpop.f32.mrb[0].mxu0
  %v4956 = vpop.f32.mrb[0].mxu0
  %4957 = vdwg.mxu0
  %4958 = vmatprep.subr.bf16.mxu0 %v4646
  %4959 = vmatpush1.bf16.msra.mxu0 %v4645
  %4960 = vmatprep.subr.bf16.mxu0 %v4650
  %4961 = vmatpush1.bf16.msra.mxu0 %v4649
  %4962 = vmatprep.subr.bf16.mxu0 %v4654
  %4963 = vmatpush1.bf16.msra.mxu0 %v4653
  %4964 = vmatprep.subr.bf16.mxu0 %v4658
  %4965 = vmatpush1.bf16.msra.mxu0 %v4657
  %4966 = vmatprep.subr.bf16.mxu0 %v4662
  %4967 = vmatpush1.bf16.msra.mxu0 %v4661
  %4968 = vmatprep.subr.bf16.mxu0 %v4666
  %4969 = vmatpush1.bf16.msra.mxu0 %v4665
  %4970 = vmatprep.subr.bf16.mxu0 %v4670
  %4971 = vmatpush1.bf16.msra.mxu0 %v4669
  %4972 = vmatprep.subr.bf16.mxu0 %v4674
  %4973 = vmatpush1.bf16.msra.mxu0 %v4673
  %4974 = vmatprep.subr.bf16.mxu0 %v4678
  %4975 = vmatpush1.bf16.msra.mxu0 %v4677
  %4976 = vmatprep.subr.bf16.mxu0 %v4682
  %4977 = vmatpush1.bf16.msra.mxu0 %v4681
  %4978 = vmatprep.subr.bf16.mxu0 %v4686
  %4979 = vmatpush1.bf16.msra.mxu0 %v4685
  %4980 = vmatprep.subr.bf16.mxu0 %v4690
  %4981 = vmatpush1.bf16.msra.mxu0 %v4689
  %4982 = vmatprep.subr.bf16.mxu0 %v4694
  %4983 = vmatpush1.bf16.msra.mxu0 %v4693
  %4984 = vmatprep.subr.bf16.mxu0 %v4698
  %4985 = vmatpush1.bf16.msra.mxu0 %v4697
  %4986 = vmatprep.subr.bf16.mxu0 %v4702
  %4987 = vmatpush1.bf16.msra.mxu0 %v4701
  %4988 = vmatprep.subr.bf16.mxu0 %v4706
  %4989 = vmatpush1.bf16.msra.mxu0 %v4705
  %4990 = vmatprep.mubr.bf16.mxu0 %v3130
  %4991 = vmatmul.mubr.bf16.gmra.mrb[0].mxu0 %v3129
  %v4992 = vpop.f32.mrb[0].mxu0
  %v4993 = vadd.f32 %v4952, %v4992
  %v4994 = vpop.f32.mrb[0].mxu0
  %v4995 = vadd.f32 %v4954, %v4994
  %v4996 = vpop.f32.mrb[0].mxu0
  %v4997 = vpop.f32.mrb[0].mxu0
  %4998 = vdwg.mxu0
  %v4999 = vld [vmem:[%s51] sm:$0xf]
  %v5001 = vlaneseq
  %v5002 = vshrl.u32 %v5001, 7
  %v5003 = vsub.s32 0, %v5002
  %v5004 = vrot.slane %v4999, %v5003
  %v5005 = vlaneseq
  %v5006 = vshrl.u32 %v5005, 7
  %v5007 = vsub.s32 1, %v5006
  %v5008 = vrot.slane %v4999, %v5007
  %v5009 = vlaneseq
  %v5010 = vshrl.u32 %v5009, 7
  %v5011 = vsub.s32 2, %v5010
  %v5012 = vrot.slane %v4999, %v5011
  %v5013 = vlaneseq
  %v5014 = vshrl.u32 %v5013, 7
  %v5015 = vsub.s32 3, %v5014
  %v5016 = vrot.slane %v4999, %v5015
  %v5021 = vadd.f32 %v4911, %v5004
  %v5022 = vadd.f32 %v4913, %v5008
  %v5023 = vadd.f32 %v4993, %v5012
  %v5024 = vadd.f32 %v4995, %v5016
  %v5025 = vmax.f32 %v5021, 0.0
  %v5026 = vmax.f32 %v5022, 0.0
  %v5027 = vmax.f32 %v5023, 0.0
  %v5028 = vmax.f32 %v5024, 0.0
  %v5029 = vpack.c.bf16 %v5025, %v5025
  %v5030 = vpack.c.bf16 %v5026, %v5026
  %v5031 = vpack.c.bf16 %v5027, %v5027
  %v5032 = vpack.c.bf16 %v5028, %v5028
  %v5033 = vld [vmem:[%s53] sm:$0xff]
  %v5034 = vld [vmem:[%s53 + $0x8] sm:$0xff]
  %v5035 = vld [vmem:[%s53 + $0x10] sm:$0xff]
  %v5036 = vld [vmem:[%s53 + $0x18] sm:$0xff]
  %v5037 = vld [vmem:[%s53 + $0x20] sm:$0xff]
  %v5038 = vld [vmem:[%s53 + $0x28] sm:$0xff]
  %v5039 = vld [vmem:[%s53 + $0x30] sm:$0xff]
  %v5040 = vld [vmem:[%s53 + $0x38] sm:$0xff]
  %v5041 = vld [vmem:[%s53 + $0x40] sm:$0xff]
  %v5042 = vld [vmem:[%s53 + $0x48] sm:$0xff]
  %v5043 = vld [vmem:[%s53 + $0x50] sm:$0xff]
  %v5044 = vld [vmem:[%s53 + $0x58] sm:$0xff]
  %v5045 = vld [vmem:[%s53 + $0x60] sm:$0xff]
  %v5046 = vld [vmem:[%s53 + $0x68] sm:$0xff]
  %v5047 = vld [vmem:[%s53 + $0x70] sm:$0xff]
  %v5048 = vld [vmem:[%s53 + $0x78] sm:$0xff]
  %v5049 = vld [vmem:[%s53 + $0x80] sm:$0xff]
  %v5050 = vld [vmem:[%s53 + $0x88] sm:$0xff]
  %v5051 = vld [vmem:[%s53 + $0x90] sm:$0xff]
  %v5052 = vld [vmem:[%s53 + $0x98] sm:$0xff]
  %v5053 = vld [vmem:[%s53 + $0xa0] sm:$0xff]
  %v5054 = vld [vmem:[%s53 + $0xa8] sm:$0xff]
  %v5055 = vld [vmem:[%s53 + $0xb0] sm:$0xff]
  %v5056 = vld [vmem:[%s53 + $0xb8] sm:$0xff]
  %v5057 = vld [vmem:[%s53 + $0xc0] sm:$0xff]
  %v5058 = vld [vmem:[%s53 + $0xc8] sm:$0xff]
  %v5059 = vld [vmem:[%s53 + $0xd0] sm:$0xff]
  %v5060 = vld [vmem:[%s53 + $0xd8] sm:$0xff]
  %v5061 = vld [vmem:[%s53 + $0xe0] sm:$0xff]
  %v5062 = vld [vmem:[%s53 + $0xe8] sm:$0xff]
  %v5063 = vld [vmem:[%s53 + $0xf0] sm:$0xff]
  %v5064 = vld [vmem:[%s53 + $0xf8] sm:$0xff]
  %v5065 = vld [vmem:[%s53 + $0x100] sm:$0xff]
  %v5066 = vld [vmem:[%s53 + $0x108] sm:$0xff]
  %v5067 = vld [vmem:[%s53 + $0x110] sm:$0xff]
  %v5068 = vld [vmem:[%s53 + $0x118] sm:$0xff]
  %v5069 = vld [vmem:[%s53 + $0x120] sm:$0xff]
  %v5070 = vld [vmem:[%s53 + $0x128] sm:$0xff]
  %v5071 = vld [vmem:[%s53 + $0x130] sm:$0xff]
  %v5072 = vld [vmem:[%s53 + $0x138] sm:$0xff]
  %v5073 = vld [vmem:[%s53 + $0x140] sm:$0xff]
  %v5074 = vld [vmem:[%s53 + $0x148] sm:$0xff]
  %v5075 = vld [vmem:[%s53 + $0x150] sm:$0xff]
  %v5076 = vld [vmem:[%s53 + $0x158] sm:$0xff]
  %v5077 = vld [vmem:[%s53 + $0x160] sm:$0xff]
  %v5078 = vld [vmem:[%s53 + $0x168] sm:$0xff]
  %v5079 = vld [vmem:[%s53 + $0x170] sm:$0xff]
  %v5080 = vld [vmem:[%s53 + $0x178] sm:$0xff]
  %v5081 = vld [vmem:[%s53 + $0x180] sm:$0xff]
  %v5082 = vld [vmem:[%s53 + $0x188] sm:$0xff]
  %v5083 = vld [vmem:[%s53 + $0x190] sm:$0xff]
  %v5084 = vld [vmem:[%s53 + $0x198] sm:$0xff]
  %v5085 = vld [vmem:[%s53 + $0x1a0] sm:$0xff]
  %v5086 = vld [vmem:[%s53 + $0x1a8] sm:$0xff]
  %v5087 = vld [vmem:[%s53 + $0x1b0] sm:$0xff]
  %v5088 = vld [vmem:[%s53 + $0x1b8] sm:$0xff]
  %v5089 = vld [vmem:[%s53 + $0x1c0] sm:$0xff]
  %v5090 = vld [vmem:[%s53 + $0x1c8] sm:$0xff]
  %v5091 = vld [vmem:[%s53 + $0x1d0] sm:$0xff]
  %v5092 = vld [vmem:[%s53 + $0x1d8] sm:$0xff]
  %v5093 = vld [vmem:[%s53 + $0x1e0] sm:$0xff]
  %v5094 = vld [vmem:[%s53 + $0x1e8] sm:$0xff]
  %v5095 = vld [vmem:[%s53 + $0x1f0] sm:$0xff]
  %v5096 = vld [vmem:[%s53 + $0x1f8] sm:$0xff]
  %v5097 = vld [vmem:[%s55] sm:$0x3]
  %v5099 = vlaneseq
  %v5100 = vshrl.u32 %v5099, 7
  %v5101 = vsub.s32 0, %v5100
  %v5102 = vrot.slane %v5097, %v5101
  %v5103 = vlaneseq
  %v5104 = vshrl.u32 %v5103, 7
  %v5105 = vsub.s32 1, %v5104
  %v5106 = vrot.slane %v5097, %v5105
  %v5173 = vunpack.c.l.b16 %v5033
  %v5174 = vunpack.c.h.b16 %v5033
  %v5175 = vunpack.c.l.b16 %v5034
  %v5176 = vunpack.c.h.b16 %v5034
  %v5177 = vunpack.c.l.b16 %v5035
  %v5178 = vunpack.c.h.b16 %v5035
  %v5179 = vunpack.c.l.b16 %v5036
  %v5180 = vunpack.c.h.b16 %v5036
  %v5181 = vunpack.c.l.b16 %v5037
  %v5182 = vunpack.c.h.b16 %v5037
  %v5183 = vunpack.c.l.b16 %v5038
  %v5184 = vunpack.c.h.b16 %v5038
  %v5185 = vunpack.c.l.b16 %v5039
  %v5186 = vunpack.c.h.b16 %v5039
  %v5187 = vunpack.c.l.b16 %v5040
  %v5188 = vunpack.c.h.b16 %v5040
  %v5189 = vunpack.c.l.b16 %v5041
  %v5190 = vunpack.c.h.b16 %v5041
  %v5191 = vunpack.c.l.b16 %v5042
  %v5192 = vunpack.c.h.b16 %v5042
  %v5193 = vunpack.c.l.b16 %v5043
  %v5194 = vunpack.c.h.b16 %v5043
  %v5195 = vunpack.c.l.b16 %v5044
  %v5196 = vunpack.c.h.b16 %v5044
  %v5197 = vunpack.c.l.b16 %v5045
  %v5198 = vunpack.c.h.b16 %v5045
  %v5199 = vunpack.c.l.b16 %v5046
  %v5200 = vunpack.c.h.b16 %v5046
  %v5201 = vunpack.c.l.b16 %v5047
  %v5202 = vunpack.c.h.b16 %v5047
  %v5203 = vunpack.c.l.b16 %v5048
  %v5204 = vunpack.c.h.b16 %v5048
  %v5205 = vunpack.c.l.b16 %v5049
  %v5206 = vunpack.c.h.b16 %v5049
  %v5207 = vunpack.c.l.b16 %v5050
  %v5208 = vunpack.c.h.b16 %v5050
  %v5209 = vunpack.c.l.b16 %v5051
  %v5210 = vunpack.c.h.b16 %v5051
  %v5211 = vunpack.c.l.b16 %v5052
  %v5212 = vunpack.c.h.b16 %v5052
  %v5213 = vunpack.c.l.b16 %v5053
  %v5214 = vunpack.c.h.b16 %v5053
  %v5215 = vunpack.c.l.b16 %v5054
  %v5216 = vunpack.c.h.b16 %v5054
  %v5217 = vunpack.c.l.b16 %v5055
  %v5218 = vunpack.c.h.b16 %v5055
  %v5219 = vunpack.c.l.b16 %v5056
  %v5220 = vunpack.c.h.b16 %v5056
  %v5221 = vunpack.c.l.b16 %v5057
  %v5222 = vunpack.c.h.b16 %v5057
  %v5223 = vunpack.c.l.b16 %v5058
  %v5224 = vunpack.c.h.b16 %v5058
  %v5225 = vunpack.c.l.b16 %v5059
  %v5226 = vunpack.c.h.b16 %v5059
  %v5227 = vunpack.c.l.b16 %v5060
  %v5228 = vunpack.c.h.b16 %v5060
  %v5229 = vunpack.c.l.b16 %v5061
  %v5230 = vunpack.c.h.b16 %v5061
  %v5231 = vunpack.c.l.b16 %v5062
  %v5232 = vunpack.c.h.b16 %v5062
  %v5233 = vunpack.c.l.b16 %v5063
  %v5234 = vunpack.c.h.b16 %v5063
  %v5235 = vunpack.c.l.b16 %v5064
  %v5236 = vunpack.c.h.b16 %v5064
  %v5237 = vunpack.c.l.b16 %v5065
  %v5238 = vunpack.c.h.b16 %v5065
  %v5239 = vunpack.c.l.b16 %v5066
  %v5240 = vunpack.c.h.b16 %v5066
  %v5241 = vunpack.c.l.b16 %v5067
  %v5242 = vunpack.c.h.b16 %v5067
  %v5243 = vunpack.c.l.b16 %v5068
  %v5244 = vunpack.c.h.b16 %v5068
  %v5245 = vunpack.c.l.b16 %v5069
  %v5246 = vunpack.c.h.b16 %v5069
  %v5247 = vunpack.c.l.b16 %v5070
  %v5248 = vunpack.c.h.b16 %v5070
  %v5249 = vunpack.c.l.b16 %v5071
  %v5250 = vunpack.c.h.b16 %v5071
  %v5251 = vunpack.c.l.b16 %v5072
  %v5252 = vunpack.c.h.b16 %v5072
  %v5253 = vunpack.c.l.b16 %v5073
  %v5254 = vunpack.c.h.b16 %v5073
  %v5255 = vunpack.c.l.b16 %v5074
  %v5256 = vunpack.c.h.b16 %v5074
  %v5257 = vunpack.c.l.b16 %v5075
  %v5258 = vunpack.c.h.b16 %v5075
  %v5259 = vunpack.c.l.b16 %v5076
  %v5260 = vunpack.c.h.b16 %v5076
  %v5261 = vunpack.c.l.b16 %v5077
  %v5262 = vunpack.c.h.b16 %v5077
  %v5263 = vunpack.c.l.b16 %v5078
  %v5264 = vunpack.c.h.b16 %v5078
  %v5265 = vunpack.c.l.b16 %v5079
  %v5266 = vunpack.c.h.b16 %v5079
  %v5267 = vunpack.c.l.b16 %v5080
  %v5268 = vunpack.c.h.b16 %v5080
  %v5269 = vunpack.c.l.b16 %v5081
  %v5270 = vunpack.c.h.b16 %v5081
  %v5271 = vunpack.c.l.b16 %v5082
  %v5272 = vunpack.c.h.b16 %v5082
  %v5273 = vunpack.c.l.b16 %v5083
  %v5274 = vunpack.c.h.b16 %v5083
  %v5275 = vunpack.c.l.b16 %v5084
  %v5276 = vunpack.c.h.b16 %v5084
  %v5277 = vunpack.c.l.b16 %v5085
  %v5278 = vunpack.c.h.b16 %v5085
  %v5279 = vunpack.c.l.b16 %v5086
  %v5280 = vunpack.c.h.b16 %v5086
  %v5281 = vunpack.c.l.b16 %v5087
  %v5282 = vunpack.c.h.b16 %v5087
  %v5283 = vunpack.c.l.b16 %v5088
  %v5284 = vunpack.c.h.b16 %v5088
  %v5285 = vunpack.c.l.b16 %v5089
  %v5286 = vunpack.c.h.b16 %v5089
  %v5287 = vunpack.c.l.b16 %v5090
  %v5288 = vunpack.c.h.b16 %v5090
  %v5289 = vunpack.c.l.b16 %v5091
  %v5290 = vunpack.c.h.b16 %v5091
  %v5291 = vunpack.c.l.b16 %v5092
  %v5292 = vunpack.c.h.b16 %v5092
  %v5293 = vunpack.c.l.b16 %v5093
  %v5294 = vunpack.c.h.b16 %v5093
  %v5295 = vunpack.c.l.b16 %v5094
  %v5296 = vunpack.c.h.b16 %v5094
  %v5297 = vunpack.c.l.b16 %v5095
  %v5298 = vunpack.c.h.b16 %v5095
  %v5299 = vunpack.c.l.b16 %v5096
  %v5300 = vunpack.c.h.b16 %v5096
  %v5301 = vpack.c.b16 %v5175, %v5173
  %v5302 = vpack.c.b16 %v5176, %v5174
  %v5303 = vpack.c.b16 %v5179, %v5177
  %v5304 = vpack.c.b16 %v5180, %v5178
  %v5305 = vpack.c.b16 %v5183, %v5181
  %v5306 = vpack.c.b16 %v5184, %v5182
  %v5307 = vpack.c.b16 %v5187, %v5185
  %v5308 = vpack.c.b16 %v5188, %v5186
  %v5309 = vpack.c.b16 %v5191, %v5189
  %v5310 = vpack.c.b16 %v5192, %v5190
  %v5311 = vpack.c.b16 %v5195, %v5193
  %v5312 = vpack.c.b16 %v5196, %v5194
  %v5313 = vpack.c.b16 %v5199, %v5197
  %v5314 = vpack.c.b16 %v5200, %v5198
  %v5315 = vpack.c.b16 %v5203, %v5201
  %v5316 = vpack.c.b16 %v5204, %v5202
  %v5317 = vpack.c.b16 %v5207, %v5205
  %v5318 = vpack.c.b16 %v5208, %v5206
  %v5319 = vpack.c.b16 %v5211, %v5209
  %v5320 = vpack.c.b16 %v5212, %v5210
  %v5321 = vpack.c.b16 %v5215, %v5213
  %v5322 = vpack.c.b16 %v5216, %v5214
  %v5323 = vpack.c.b16 %v5219, %v5217
  %v5324 = vpack.c.b16 %v5220, %v5218
  %v5325 = vpack.c.b16 %v5223, %v5221
  %v5326 = vpack.c.b16 %v5224, %v5222
  %v5327 = vpack.c.b16 %v5227, %v5225
  %v5328 = vpack.c.b16 %v5228, %v5226
  %v5329 = vpack.c.b16 %v5231, %v5229
  %v5330 = vpack.c.b16 %v5232, %v5230
  %v5331 = vpack.c.b16 %v5235, %v5233
  %v5332 = vpack.c.b16 %v5236, %v5234
  %v5333 = vpack.c.b16 %v5239, %v5237
  %v5334 = vpack.c.b16 %v5240, %v5238
  %v5335 = vpack.c.b16 %v5243, %v5241
  %v5336 = vpack.c.b16 %v5244, %v5242
  %v5337 = vpack.c.b16 %v5247, %v5245
  %v5338 = vpack.c.b16 %v5248, %v5246
  %v5339 = vpack.c.b16 %v5251, %v5249
  %v5340 = vpack.c.b16 %v5252, %v5250
  %v5341 = vpack.c.b16 %v5255, %v5253
  %v5342 = vpack.c.b16 %v5256, %v5254
  %v5343 = vpack.c.b16 %v5259, %v5257
  %v5344 = vpack.c.b16 %v5260, %v5258
  %v5345 = vpack.c.b16 %v5263, %v5261
  %v5346 = vpack.c.b16 %v5264, %v5262
  %v5347 = vpack.c.b16 %v5267, %v5265
  %v5348 = vpack.c.b16 %v5268, %v5266
  %v5349 = vpack.c.b16 %v5271, %v5269
  %v5350 = vpack.c.b16 %v5272, %v5270
  %v5351 = vpack.c.b16 %v5275, %v5273
  %v5352 = vpack.c.b16 %v5276, %v5274
  %v5353 = vpack.c.b16 %v5279, %v5277
  %v5354 = vpack.c.b16 %v5280, %v5278
  %v5355 = vpack.c.b16 %v5283, %v5281
  %v5356 = vpack.c.b16 %v5284, %v5282
  %v5357 = vpack.c.b16 %v5287, %v5285
  %v5358 = vpack.c.b16 %v5288, %v5286
  %v5359 = vpack.c.b16 %v5291, %v5289
  %v5360 = vpack.c.b16 %v5292, %v5290
  %v5361 = vpack.c.b16 %v5295, %v5293
  %v5362 = vpack.c.b16 %v5296, %v5294
  %v5363 = vpack.c.b16 %v5299, %v5297
  %v5364 = vpack.c.b16 %v5300, %v5298
  %5429 = vmatprep.subr.bf16.mxu0 %v5302
  %5430 = vmatpush1.bf16.msra.mxu0 %v5301
  %5431 = vmatprep.subr.bf16.mxu0 %v5304
  %5432 = vmatpush1.bf16.msra.mxu0 %v5303
  %5433 = vmatprep.subr.bf16.mxu0 %v5306
  %5434 = vmatpush1.bf16.msra.mxu0 %v5305
  %5435 = vmatprep.subr.bf16.mxu0 %v5308
  %5436 = vmatpush1.bf16.msra.mxu0 %v5307
  %5437 = vmatprep.subr.bf16.mxu0 %v5310
  %5438 = vmatpush1.bf16.msra.mxu0 %v5309
  %5439 = vmatprep.subr.bf16.mxu0 %v5312
  %5440 = vmatpush1.bf16.msra.mxu0 %v5311
  %5441 = vmatprep.subr.bf16.mxu0 %v5314
  %5442 = vmatpush1.bf16.msra.mxu0 %v5313
  %5443 = vmatprep.subr.bf16.mxu0 %v5316
  %5444 = vmatpush1.bf16.msra.mxu0 %v5315
  %5445 = vmatprep.subr.bf16.mxu0 %v5318
  %5446 = vmatpush1.bf16.msra.mxu0 %v5317
  %5447 = vmatprep.subr.bf16.mxu0 %v5320
  %5448 = vmatpush1.bf16.msra.mxu0 %v5319
  %5449 = vmatprep.subr.bf16.mxu0 %v5322
  %5450 = vmatpush1.bf16.msra.mxu0 %v5321
  %5451 = vmatprep.subr.bf16.mxu0 %v5324
  %5452 = vmatpush1.bf16.msra.mxu0 %v5323
  %5453 = vmatprep.subr.bf16.mxu0 %v5326
  %5454 = vmatpush1.bf16.msra.mxu0 %v5325
  %5455 = vmatprep.subr.bf16.mxu0 %v5328
  %5456 = vmatpush1.bf16.msra.mxu0 %v5327
  %5457 = vmatprep.subr.bf16.mxu0 %v5330
  %5458 = vmatpush1.bf16.msra.mxu0 %v5329
  %5459 = vmatprep.subr.bf16.mxu0 %v5332
  %5460 = vmatpush1.bf16.msra.mxu0 %v5331
  %5461 = vmatprep.mubr.bf16.mxu0 %v5030
  %5462 = vmatmul.mubr.bf16.gmra.mrb[0].mxu0 %v5029
  %v5463 = vpop.f32.mrb[0].mxu0
  %v5464 = vadd.f32 %v5102, %v5463
  %v5465 = vpop.f32.mrb[0].mxu0
  %v5466 = vadd.f32 %v5106, %v5465
  %v5467 = vpop.f32.mrb[0].mxu0
  %v5468 = vpop.f32.mrb[0].mxu0
  %5469 = vdwg.mxu0
  %5470 = vmatprep.subr.bf16.mxu0 %v5334
  %5471 = vmatpush1.bf16.msra.mxu0 %v5333
  %5472 = vmatprep.subr.bf16.mxu0 %v5336
  %5473 = vmatpush1.bf16.msra.mxu0 %v5335
  %5474 = vmatprep.subr.bf16.mxu0 %v5338
  %5475 = vmatpush1.bf16.msra.mxu0 %v5337
  %5476 = vmatprep.subr.bf16.mxu0 %v5340
  %5477 = vmatpush1.bf16.msra.mxu0 %v5339
  %5478 = vmatprep.subr.bf16.mxu0 %v5342
  %5479 = vmatpush1.bf16.msra.mxu0 %v5341
  %5480 = vmatprep.subr.bf16.mxu0 %v5344
  %5481 = vmatpush1.bf16.msra.mxu0 %v5343
  %5482 = vmatprep.subr.bf16.mxu0 %v5346
  %5483 = vmatpush1.bf16.msra.mxu0 %v5345
  %5484 = vmatprep.subr.bf16.mxu0 %v5348
  %5485 = vmatpush1.bf16.msra.mxu0 %v5347
  %5486 = vmatprep.subr.bf16.mxu0 %v5350
  %5487 = vmatpush1.bf16.msra.mxu0 %v5349
  %5488 = vmatprep.subr.bf16.mxu0 %v5352
  %5489 = vmatpush1.bf16.msra.mxu0 %v5351
  %5490 = vmatprep.subr.bf16.mxu0 %v5354
  %5491 = vmatpush1.bf16.msra.mxu0 %v5353
  %5492 = vmatprep.subr.bf16.mxu0 %v5356
  %5493 = vmatpush1.bf16.msra.mxu0 %v5355
  %5494 = vmatprep.subr.bf16.mxu0 %v5358
  %5495 = vmatpush1.bf16.msra.mxu0 %v5357
  %5496 = vmatprep.subr.bf16.mxu0 %v5360
  %5497 = vmatpush1.bf16.msra.mxu0 %v5359
  %5498 = vmatprep.subr.bf16.mxu0 %v5362
  %5499 = vmatpush1.bf16.msra.mxu0 %v5361
  %5500 = vmatprep.subr.bf16.mxu0 %v5364
  %5501 = vmatpush1.bf16.msra.mxu0 %v5363
  %5502 = vmatprep.mubr.bf16.mxu0 %v5032
  %5503 = vmatmul.mubr.bf16.gmra.mrb[0].mxu0 %v5031
  %v5504 = vpop.f32.mrb[0].mxu0
  %v5505 = vadd.f32 %v5464, %v5504
  %v5506 = vpop.f32.mrb[0].mxu0
  %v5507 = vadd.f32 %v5466, %v5506
  %v5508 = vpop.f32.mrb[0].mxu0
  %v5509 = vpop.f32.mrb[0].mxu0
  %5510 = vdwg.mxu0
  %v5511 = vmax.f32 %v5505, 0.0
  %v5512 = vmax.f32 %v5507, 0.0
  %v5513 = vpack.c.bf16 %v5511, %v5511
  %v5514 = vpack.c.bf16 %v5512, %v5512
  %v5515 = vld [vmem:[%s57] sm:$0xf]
  %v5516 = vld [vmem:[%s57 + $0x4] sm:$0xf]
  %v5517 = vld [vmem:[%s57 + $0x8] sm:$0xf]
  %v5518 = vld [vmem:[%s57 + $0xc] sm:$0xf]
  %v5519 = vld [vmem:[%s57 + $0x10] sm:$0xf]
  %v5520 = vld [vmem:[%s57 + $0x14] sm:$0xf]
  %v5521 = vld [vmem:[%s57 + $0x18] sm:$0xf]
  %v5522 = vld [vmem:[%s57 + $0x1c] sm:$0xf]
  %v5523 = vld [vmem:[%s57 + $0x20] sm:$0xf]
  %v5524 = vld [vmem:[%s57 + $0x24] sm:$0xf]
  %v5525 = vld [vmem:[%s57 + $0x28] sm:$0xf]
  %v5526 = vld [vmem:[%s57 + $0x2c] sm:$0xf]
  %v5527 = vld [vmem:[%s57 + $0x30] sm:$0xf]
  %v5528 = vld [vmem:[%s57 + $0x34] sm:$0xf]
  %v5529 = vld [vmem:[%s57 + $0x38] sm:$0xf]
  %v5530 = vld [vmem:[%s57 + $0x3c] sm:$0xf]
  %v5531 = vld [vmem:[%s57 + $0x40] sm:$0xf]
  %v5532 = vld [vmem:[%s57 + $0x44] sm:$0xf]
  %v5533 = vld [vmem:[%s57 + $0x48] sm:$0xf]
  %v5534 = vld [vmem:[%s57 + $0x4c] sm:$0xf]
  %v5535 = vld [vmem:[%s57 + $0x50] sm:$0xf]
  %v5536 = vld [vmem:[%s57 + $0x54] sm:$0xf]
  %v5537 = vld [vmem:[%s57 + $0x58] sm:$0xf]
  %v5538 = vld [vmem:[%s57 + $0x5c] sm:$0xf]
  %v5539 = vld [vmem:[%s57 + $0x60] sm:$0xf]
  %v5540 = vld [vmem:[%s57 + $0x64] sm:$0xf]
  %v5541 = vld [vmem:[%s57 + $0x68] sm:$0xf]
  %v5542 = vld [vmem:[%s57 + $0x6c] sm:$0xf]
  %v5543 = vld [vmem:[%s57 + $0x70] sm:$0xf]
  %v5544 = vld [vmem:[%s57 + $0x74] sm:$0xf]
  %v5545 = vld [vmem:[%s57 + $0x78] sm:$0xf]
  %v5546 = vld [vmem:[%s57 + $0x7c] sm:$0xf]
  %v5547 = vld [vmem:[%s59] sm:$0x1]
  %v5549 = vlaneseq
  %v5550 = vshrl.u32 %v5549, 7
  %v5551 = vsub.s32 0, %v5550
  %v5552 = vrot.slane %v5547, %v5551
  %v5586 = vunpack.c.l.b16 %v5515
  %v5587 = vunpack.c.l.b16 %v5516
  %v5588 = vunpack.c.l.b16 %v5517
  %v5589 = vunpack.c.l.b16 %v5518
  %v5590 = vunpack.c.l.b16 %v5519
  %v5591 = vunpack.c.l.b16 %v5520
  %v5592 = vunpack.c.l.b16 %v5521
  %v5593 = vunpack.c.l.b16 %v5522
  %v5594 = vunpack.c.l.b16 %v5523
  %v5595 = vunpack.c.l.b16 %v5524
  %v5596 = vunpack.c.l.b16 %v5525
  %v5597 = vunpack.c.l.b16 %v5526
  %v5598 = vunpack.c.l.b16 %v5527
  %v5599 = vunpack.c.l.b16 %v5528
  %v5600 = vunpack.c.l.b16 %v5529
  %v5601 = vunpack.c.l.b16 %v5530
  %v5602 = vunpack.c.l.b16 %v5531
  %v5603 = vunpack.c.l.b16 %v5532
  %v5604 = vunpack.c.l.b16 %v5533
  %v5605 = vunpack.c.l.b16 %v5534
  %v5606 = vunpack.c.l.b16 %v5535
  %v5607 = vunpack.c.l.b16 %v5536
  %v5608 = vunpack.c.l.b16 %v5537
  %v5609 = vunpack.c.l.b16 %v5538
  %v5610 = vunpack.c.l.b16 %v5539
  %v5611 = vunpack.c.l.b16 %v5540
  %v5612 = vunpack.c.l.b16 %v5541
  %v5613 = vunpack.c.l.b16 %v5542
  %v5614 = vunpack.c.l.b16 %v5543
  %v5615 = vunpack.c.l.b16 %v5544
  %v5616 = vunpack.c.l.b16 %v5545
  %v5617 = vunpack.c.l.b16 %v5546
  %v5618 = vpack.c.b16 %v5587, %v5586
  %v5619 = vpack.c.b16 %v5589, %v5588
  %v5620 = vpack.c.b16 %v5591, %v5590
  %v5621 = vpack.c.b16 %v5593, %v5592
  %v5622 = vpack.c.b16 %v5595, %v5594
  %v5623 = vpack.c.b16 %v5597, %v5596
  %v5624 = vpack.c.b16 %v5599, %v5598
  %v5625 = vpack.c.b16 %v5601, %v5600
  %v5626 = vpack.c.b16 %v5603, %v5602
  %v5627 = vpack.c.b16 %v5605, %v5604
  %v5628 = vpack.c.b16 %v5607, %v5606
  %v5629 = vpack.c.b16 %v5609, %v5608
  %v5630 = vpack.c.b16 %v5611, %v5610
  %v5631 = vpack.c.b16 %v5613, %v5612
  %v5632 = vpack.c.b16 %v5615, %v5614
  %v5633 = vpack.c.b16 %v5617, %v5616
  %5650 = vmatprep.subr.bf16.mxu0 0
  %5651 = vmatpush1.bf16.msra.mxu0 %v5618
  %5652 = vmatprep.subr.bf16.mxu0 0
  %5653 = vmatpush1.bf16.msra.mxu0 %v5619
  %5654 = vmatprep.subr.bf16.mxu0 0
  %5655 = vmatpush1.bf16.msra.mxu0 %v5620
  %5656 = vmatprep.subr.bf16.mxu0 0
  %5657 = vmatpush1.bf16.msra.mxu0 %v5621
  %5658 = vmatprep.subr.bf16.mxu0 0
  %5659 = vmatpush1.bf16.msra.mxu0 %v5622
  %5660 = vmatprep.subr.bf16.mxu0 0
  %5661 = vmatpush1.bf16.msra.mxu0 %v5623
  %5662 = vmatprep.subr.bf16.mxu0 0
  %5663 = vmatpush1.bf16.msra.mxu0 %v5624
  %5664 = vmatprep.subr.bf16.mxu0 0
  %5665 = vmatpush1.bf16.msra.mxu0 %v5625
  %5666 = vmatprep.subr.bf16.mxu0 0
  %5667 = vmatpush1.bf16.msra.mxu0 %v5626
  %5668 = vmatprep.subr.bf16.mxu0 0
  %5669 = vmatpush1.bf16.msra.mxu0 %v5627
  %5670 = vmatprep.subr.bf16.mxu0 0
  %5671 = vmatpush1.bf16.msra.mxu0 %v5628
  %5672 = vmatprep.subr.bf16.mxu0 0
  %5673 = vmatpush1.bf16.msra.mxu0 %v5629
  %5674 = vmatprep.subr.bf16.mxu0 0
  %5675 = vmatpush1.bf16.msra.mxu0 %v5630
  %5676 = vmatprep.subr.bf16.mxu0 0
  %5677 = vmatpush1.bf16.msra.mxu0 %v5631
  %5678 = vmatprep.subr.bf16.mxu0 0
  %5679 = vmatpush1.bf16.msra.mxu0 %v5632
  %5680 = vmatprep.subr.bf16.mxu0 0
  %5681 = vmatpush1.bf16.msra.mxu0 %v5633
  %5682 = vmatprep.mubr.bf16.mxu0 %v5514
  %5683 = vmatmul.mubr.bf16.gmra.mrb[0].mxu0 %v5513
  %v5684 = vpop.f32.mrb[0].mxu0
  %v5685 = vadd.f32 %v5552, %v5684
  %v5686 = vpop.f32.mrb[0].mxu0
  %v5687 = vpop.f32.mrb[0].mxu0
  %v5688 = vpop.f32.mrb[0].mxu0
  %5689 = vdwg.mxu0
  %5690 = vst [vmem:[%s61] sm:$0xff] %v5685
  // Predicated region
  $region122: #{mixconv_forward.1} parent=0 // pred_check
    _
  $region123: #{mixconv_forward.1} parent=0 // pred_check_branch
    %5692 = sbr.rel (0) target = $region125
  $region124: #{mixconv_forward.1} parent=0 // pred_region
    _
  $region125: #{mixconv_forward.1} parent=0 // pred_fallthru
    _
  // Predicated region
  $region126: #{mixconv_forward.1} parent=0 // pred_check
    _
  $region127: #{mixconv_forward.1} parent=0 // pred_check_branch
    %5694 = sbr.rel (0) target = $region129
  $region128: #{mixconv_forward.1} parent=0 // pred_region
    _
  $region129: #{mixconv_forward.1} parent=0 // pred_fallthru
    _

</llo_original>
